<compile_context>
chip_gen: v6e
topology: v6e:2x2x1
jax: 0.10.0
libtpu: 0.0.40
codegen_flags: <defaults>
</compile_context>

<pallas_src>
import functools

import jax
import jax.numpy as jnp
from jax.experimental import pallas as pl
from jax.experimental.pallas import tpu as pltpu  # noqa: F401  (TPU backend assumed)


# ------------------------------ fused kernel --------------------------------

def _fused_forward_kernel(
    x_ref, ea_ref, s_ref, d_ref, dt_ref, eye_ref, mask_ref,
    w1_ref, b1_ref, w2_ref, b2_ref,
    c1w_ref, c1b_ref, wh_ref, bh_ref, lw_ref, lb_ref,
    o_ref, *, n_hidden_layers, n_branches,
):
    f32 = jnp.float32
    S = s_ref[...]        # [E, N] one-hot of src node per edge
    D = d_ref[...]        # [E, N] one-hot of dst node per edge
    DT = dt_ref[...]      # [N, E] = D.T (host precomputed)
    eye = eye_ref[...]    # [N, N]

    # ---- edge-gate MLPs of all L PDNConvs in one shot (lane-dense [E, L]) ----
    h = jnp.dot(ea_ref[...], w1_ref[...], preferred_element_type=f32) + b1_ref[...]
    h = jnp.maximum(h, 0.0)
    gates = jax.nn.sigmoid(
        jnp.dot(h, w2_ref[...], preferred_element_type=f32) + b2_ref[...])       # [E, L]

    # ---- gcn_norm (add_self_loops=True, improved=False) for all L convs at once ----
    deg = jnp.dot(DT, gates, preferred_element_type=f32) + 1.0                   # [N, L]
    dinv = jax.lax.rsqrt(deg)                                                     # [N, L]
    norm = (jnp.dot(S, dinv, preferred_element_type=f32) * gates *
            jnp.dot(D, dinv, preferred_element_type=f32))                         # [E, L]
    self_w = 1.0 / deg                                                             # [N, L] self-loop weights

    n_layers = gates.shape[1]
    lane_ids = jax.lax.broadcasted_iota(jnp.int32, (1, n_layers), 1)

    def col(v, l):
        # column l of v ([R, L]) as [R, 1] via masked lane reduce (no unaligned slicing)
        return jnp.sum(jnp.where(lane_ids == l, v, 0.0), axis=1, keepdims=True)

    def adj(l):
        # dense normalized adjacency of conv l: one-hot matmul scatter + self-loop diag
        a = jnp.dot(DT, col(norm, l) * S, preferred_element_type=f32)             # [N, N]
        return a + eye * col(self_w, l)

    def pdn_conv(l, xx, w, b):
        hh = jnp.dot(xx, w, preferred_element_type=f32)
        return jnp.dot(adj(l), hh, preferred_element_type=f32) + b

    def bn_relu(xx):
        # fresh training-mode BatchNorm: gamma=1, beta=0, biased batch stats; then ReLU
        mean = jnp.mean(xx, axis=0, keepdims=True)
        var = jnp.mean((xx - mean) ** 2, axis=0, keepdims=True)
        return jnp.maximum((xx - mean) * jax.lax.rsqrt(var + 1e-5), 0.0)

    # ---- conv1 + 5 additive-skip branches (everything stays on-chip) ----
    xcur = pdn_conv(0, x_ref[...], c1w_ref[...], c1b_ref[...])    # x0
    skip_sum = xcur                                               # x0
    layer = 1
    for _ in range(n_branches):
        xx = xcur
        for _i in range(n_hidden_layers):
            xx = bn_relu(xx)
            xx = pdn_conv(layer, xx, wh_ref[layer - 1], bh_ref[layer - 1])
            layer += 1
        xcur = xx + skip_sum         # x_k = branch_out + x0 + ... + x_{k-1}
        skip_sum = skip_sum + xcur   # running sum of skips

    x5 = jnp.maximum(xcur, 0.0)      # x5.relu()

    # ---- global max pool per graph: masked broadcast reduce over the node axis ----
    neg = jnp.finfo(f32).min
    pooled = jnp.max(jnp.where(mask_ref[...] > 0.5, x5[None, :, :], neg), axis=1)  # [G, C]

    # TODO(synk): F.dropout(p=dropout, training=self.training) skipped — eval mode => identity
    o_ref[...] = jnp.dot(pooled, lw_ref[...], preferred_element_type=f32) + lb_ref[...]


# ------------------------------ host-side packing ----------------------------

def _pack_edge_mlp(convs):
    """Stack all per-conv edge MLPs: W1 side-by-side, W2 block-diagonal."""
    H = convs[0]["mw1"].shape[1]
    L = len(convs)
    w1 = jnp.concatenate([c["mw1"] for c in convs], axis=1)           # [edge_dim, L*H]
    b1 = jnp.concatenate([c["mb1"] for c in convs], axis=1)           # [1, L*H]
    w2 = jnp.zeros((L * H, L), jnp.float32)
    for l, c in enumerate(convs):
        w2 = w2.at[l * H:(l + 1) * H, l].set(c["mw2"][0, :])          # block diagonal
    b2 = jnp.concatenate([c["mb2"] for c in convs], axis=1)           # [1, L]
    return w1, b1, w2, b2


# --------------------------------- forward -----------------------------------

def model_forward(params, x, edge_index, edge_attr, graph_mask, n_hidden_layers):
    num_nodes = x.shape[0]
    n_branches = 5
    out_channels = params["conv1"]["w"].shape[1]
    num_graphs = graph_mask.shape[0]
    num_classes = params["lin_w"].shape[1]

    # --- host/XLA prep (once per forward; edge_index constant across all convs) ---
    convs = [params["conv1"]]
    for k in range(1, n_branches + 1):
        convs.extend(params[f"hidden_{k}"])

    w1, b1, w2, b2 = _pack_edge_mlp(convs)
    wh = jnp.stack([c["w"] for c in convs[1:]], axis=0)               # [L-1, C, C]
    bh = jnp.stack([c["b"] for c in convs[1:]], axis=0)               # [L-1, 1, C]

    node_ids = jnp.arange(num_nodes, dtype=edge_index.dtype)
    src1h = (edge_index[0][:, None] == node_ids[None, :]).astype(jnp.float32)   # S [E, N]
    dst1h = (edge_index[1][:, None] == node_ids[None, :]).astype(jnp.float32)   # D [E, N]
    dst1h_t = dst1h.T                                                            # [N, E]
    eye = jnp.eye(num_nodes, dtype=jnp.float32)
    mask3 = jnp.broadcast_to(graph_mask.astype(jnp.float32)[:, :, None],
                             (num_graphs, num_nodes, out_channels))              # [G, N, C]

    kernel = functools.partial(_fused_forward_kernel,
                               n_hidden_layers=n_hidden_layers,
                               n_branches=n_branches)
    return pl.pallas_call(
        kernel,
        out_shape=jax.ShapeDtypeStruct((num_graphs, num_classes), jnp.float32),
    )(x, edge_attr, src1h, dst1h, dst1h_t, eye, mask3,
      w1, b1, w2, b2,
      params["conv1"]["w"], params["conv1"]["b"], wh, bh,
      params["lin_w"], params["lin_b"])


# -------------------------------- parameters ---------------------------------

def _init_pdnconv(key, c_in, c_out, edge_dim, hidden):
    ks = jax.random.split(key, 6)
    return {
        "w":   jax.random.normal(ks[0], (c_in, c_out), jnp.float32) / jnp.sqrt(float(c_in)),
        "b":   jax.random.normal(ks[1], (1, c_out), jnp.float32) * 0.01,
        "mw1": jax.random.normal(ks[2], (edge_dim, hidden), jnp.float32) / jnp.sqrt(float(edge_dim)),
        "mb1": jax.random.normal(ks[3], (1, hidden), jnp.float32) * 0.01,
        "mw2": jax.random.normal(ks[4], (1, hidden), jnp.float32) / jnp.sqrt(float(hidden)),  # [H,1] stored transposed
        "mb2": jax.random.normal(ks[5], (1, 1), jnp.float32) * 0.01,
    }


def init_model(key, num_node_features, out_channels, edge_dim, num_classes, n_hidden_layers):
    n_keys = 1 + 5 * n_hidden_layers + 1
    keys = iter(jax.random.split(key, n_keys))
    p = {"conv1": _init_pdnconv(next(keys), num_node_features, out_channels, edge_dim, edge_dim)}
    for k in range(1, 6):
        p[f"hidden_{k}"] = [
            _init_pdnconv(next(keys), out_channels, out_channels, edge_dim, edge_dim)
            for _ in range(n_hidden_layers)
        ]
    k1, k2 = jax.random.split(next(keys))
    p["lin_w"] = jax.random.normal(k1, (out_channels, num_classes), jnp.float32) / jnp.sqrt(float(out_channels))
    p["lin_b"] = jax.random.normal(k2, (1, num_classes), jnp.float32) * 0.01
    return p


# ----------------------------------- main -------------------------------------

if __name__ == "__main__":
    key = jax.random.PRNGKey(0)
    N, E = 16, 40
    NUM_NODE_FEATS, EDGE_DIM = 8, 6
    OUT_CHANNELS, N_HIDDEN, NUM_CLASSES, G = 32, 2, 3, 2

    k1, k2, k3, k4, kp = jax.random.split(key, 5)
    x = jax.random.normal(k1, (N, NUM_NODE_FEATS), jnp.float32)
    src = jax.random.randint(k2, (E,), 0, N, dtype=jnp.int32)
    dst = jax.random.randint(k3, (E,), 0, N, dtype=jnp.int32)
    dst = jnp.where(dst == src, (dst + 1) % N, dst)          # no self loops in raw graph
    edge_index = jnp.stack([src, dst], axis=0)
    edge_attr = jax.random.normal(k4, (E, EDGE_DIM), jnp.float32)

    batch = jnp.concatenate([jnp.zeros((N // 2,), jnp.int32),
                             jnp.ones((N - N // 2,), jnp.int32)])
    graph_mask = (batch[None, :] == jnp.arange(G)[:, None]).astype(jnp.float32)  # [G, N]

    params = init_model(kp, NUM_NODE_FEATS, OUT_CHANNELS, EDGE_DIM, NUM_CLASSES, N_HIDDEN)

    fwd = jax.jit(functools.partial(model_forward, n_hidden_layers=N_HIDDEN))
    out = fwd(params, x, edge_index, edge_attr, graph_mask)
    jax.block_until_ready(out)

    assert out.shape == (G, NUM_CLASSES) and out.dtype == jnp.float32
    assert bool(jnp.all(jnp.isfinite(out)))
    print("KERNEL_OK")
</pallas_src>

<mosaic_0001>
module attributes {stable_mosaic.version = 11 : i64} {
  func.func @_fused_forward_kernel(%arg0: memref<16x8xf32, #tpu.memory_space<vmem>>, %arg1: memref<40x6xf32, #tpu.memory_space<vmem>>, %arg2: memref<40x16xf32, #tpu.memory_space<vmem>>, %arg3: memref<40x16xf32, #tpu.memory_space<vmem>>, %arg4: memref<16x40xf32, #tpu.memory_space<vmem>>, %arg5: memref<16x16xf32, #tpu.memory_space<vmem>>, %arg6: memref<2x16x32xf32, #tpu.memory_space<vmem>>, %arg7: memref<6x66xf32, #tpu.memory_space<vmem>>, %arg8: memref<1x66xf32, #tpu.memory_space<vmem>>, %arg9: memref<66x11xf32, #tpu.memory_space<vmem>>, %arg10: memref<1x11xf32, #tpu.memory_space<vmem>>, %arg11: memref<8x32xf32, #tpu.memory_space<vmem>>, %arg12: memref<1x32xf32, #tpu.memory_space<vmem>>, %arg13: memref<10x32x32xf32, #tpu.memory_space<vmem>>, %arg14: memref<10x1x32xf32, #tpu.memory_space<vmem>>, %arg15: memref<32x3xf32, #tpu.memory_space<vmem>>, %arg16: memref<1x3xf32, #tpu.memory_space<vmem>>, %arg17: memref<2x3xf32, #tpu.memory_space<vmem>>) attributes {dimension_semantics = [], scalar_prefetch = 0 : i64, scratch_operands = 0 : i64, tpu.core_type = #tpu.core_type<tc>} {
    %c0 = arith.constant 0 : index
    %c0_0 = arith.constant 0 : index
    %0 = vector.load %arg2[%c0, %c0_0] : memref<40x16xf32, #tpu.memory_space<vmem>>, vector<40x16xf32>
    %c0_1 = arith.constant 0 : index
    %c0_2 = arith.constant 0 : index
    %1 = vector.load %arg3[%c0_1, %c0_2] : memref<40x16xf32, #tpu.memory_space<vmem>>, vector<40x16xf32>
    %c0_3 = arith.constant 0 : index
    %c0_4 = arith.constant 0 : index
    %2 = vector.load %arg4[%c0_3, %c0_4] : memref<16x40xf32, #tpu.memory_space<vmem>>, vector<16x40xf32>
    %c0_5 = arith.constant 0 : index
    %c0_6 = arith.constant 0 : index
    %3 = vector.load %arg5[%c0_5, %c0_6] : memref<16x16xf32, #tpu.memory_space<vmem>>, vector<16x16xf32>
    %c0_7 = arith.constant 0 : index
    %c0_8 = arith.constant 0 : index
    %4 = vector.load %arg1[%c0_7, %c0_8] : memref<40x6xf32, #tpu.memory_space<vmem>>, vector<40x6xf32>
    %c0_9 = arith.constant 0 : index
    %c0_10 = arith.constant 0 : index
    %5 = vector.load %arg7[%c0_9, %c0_10] : memref<6x66xf32, #tpu.memory_space<vmem>>, vector<6x66xf32>
    %cst = arith.constant dense<0.000000e+00> : vector<40x66xf32>
    %6 = tpu.matmul %4, %5, %cst {dimension_numbers = #tpu.dot_dimension_numbers<[1], [0], [0], [1], [0, 0, 1, 1], [], []>} : vector<40x6xf32>, vector<6x66xf32>, vector<40x66xf32> -> vector<40x66xf32>
    %c0_11 = arith.constant 0 : index
    %c0_12 = arith.constant 0 : index
    %7 = vector.load %arg8[%c0_11, %c0_12] : memref<1x66xf32, #tpu.memory_space<vmem>>, vector<1x66xf32>
    %8 = vector.broadcast %7 : vector<1x66xf32> to vector<40x66xf32>
    %9 = arith.addf %6, %8 : vector<40x66xf32>
    %cst_13 = arith.constant 0.000000e+00 : f32
    %10 = vector.broadcast %cst_13 : f32 to vector<40x66xf32>
    %11 = arith.maximumf %9, %10 : vector<40x66xf32>
    %c0_14 = arith.constant 0 : index
    %c0_15 = arith.constant 0 : index
    %12 = vector.load %arg9[%c0_14, %c0_15] : memref<66x11xf32, #tpu.memory_space<vmem>>, vector<66x11xf32>
    %cst_16 = arith.constant dense<0.000000e+00> : vector<40x11xf32>
    %13 = tpu.matmul %11, %12, %cst_16 {dimension_numbers = #tpu.dot_dimension_numbers<[1], [0], [0], [1], [0, 0, 1, 1], [], []>} : vector<40x66xf32>, vector<66x11xf32>, vector<40x11xf32> -> vector<40x11xf32>
    %c0_17 = arith.constant 0 : index
    %c0_18 = arith.constant 0 : index
    %14 = vector.load %arg10[%c0_17, %c0_18] : memref<1x11xf32, #tpu.memory_space<vmem>>, vector<1x11xf32>
    %15 = vector.broadcast %14 : vector<1x11xf32> to vector<40x11xf32>
    %16 = arith.addf %13, %15 : vector<40x11xf32>
    %17 = arith.negf %16 : vector<40x11xf32>
    %18 = math.exp %17 : vector<40x11xf32>
    %cst_19 = arith.constant 1.000000e+00 : f32
    %19 = vector.broadcast %cst_19 : f32 to vector<40x11xf32>
    %20 = arith.addf %19, %18 : vector<40x11xf32>
    %21 = arith.divf %19, %20 : vector<40x11xf32>
    %cst_20 = arith.constant dense<0.000000e+00> : vector<16x11xf32>
    %22 = tpu.matmul %2, %21, %cst_20 {dimension_numbers = #tpu.dot_dimension_numbers<[1], [0], [0], [1], [0, 0, 1, 1], [], []>} : vector<16x40xf32>, vector<40x11xf32>, vector<16x11xf32> -> vector<16x11xf32>
    %cst_21 = arith.constant 1.000000e+00 : f32
    %23 = vector.broadcast %cst_21 : f32 to vector<16x11xf32>
    %24 = arith.addf %22, %23 : vector<16x11xf32>
    %25 = math.rsqrt %24 : vector<16x11xf32>
    %cst_22 = arith.constant dense<0.000000e+00> : vector<40x11xf32>
    %26 = tpu.matmul %0, %25, %cst_22 {dimension_numbers = #tpu.dot_dimension_numbers<[1], [0], [0], [1], [0, 0, 1, 1], [], []>} : vector<40x16xf32>, vector<16x11xf32>, vector<40x11xf32> -> vector<40x11xf32>
    %27 = arith.mulf %26, %21 : vector<40x11xf32>
    %cst_23 = arith.constant dense<0.000000e+00> : vector<40x11xf32>
    %28 = tpu.matmul %1, %25, %cst_23 {dimension_numbers = #tpu.dot_dimension_numbers<[1], [0], [0], [1], [0, 0, 1, 1], [], []>} : vector<40x16xf32>, vector<16x11xf32>, vector<40x11xf32> -> vector<40x11xf32>
    %29 = arith.mulf %27, %28 : vector<40x11xf32>
    %cst_24 = arith.constant 1.000000e+00 : f32
    %30 = vector.broadcast %cst_24 : f32 to vector<16x11xf32>
    %31 = arith.divf %30, %24 : vector<16x11xf32>
    %32 = tpu.iota {dimensions = array<i32: 1>} : vector<1x11xi32>
    %c0_25 = arith.constant 0 : index
    %c0_26 = arith.constant 0 : index
    %33 = vector.load %arg0[%c0_25, %c0_26] : memref<16x8xf32, #tpu.memory_space<vmem>>, vector<16x8xf32>
    %c0_27 = arith.constant 0 : index
    %c0_28 = arith.constant 0 : index
    %34 = vector.load %arg11[%c0_27, %c0_28] : memref<8x32xf32, #tpu.memory_space<vmem>>, vector<8x32xf32>
    %c0_29 = arith.constant 0 : index
    %c0_30 = arith.constant 0 : index
    %35 = vector.load %arg12[%c0_29, %c0_30] : memref<1x32xf32, #tpu.memory_space<vmem>>, vector<1x32xf32>
    %cst_31 = arith.constant dense<0.000000e+00> : vector<16x32xf32>
    %36 = tpu.matmul %33, %34, %cst_31 {dimension_numbers = #tpu.dot_dimension_numbers<[1], [0], [0], [1], [0, 0, 1, 1], [], []>} : vector<16x8xf32>, vector<8x32xf32>, vector<16x32xf32> -> vector<16x32xf32>
    %c0_i32 = arith.constant 0 : i32
    %37 = vector.broadcast %c0_i32 : i32 to vector<1x11xi32>
    %38 = arith.cmpi eq, %32, %37 : vector<1x11xi32>
    %cst_32 = arith.constant 0.000000e+00 : f32
    %39 = vector.shape_cast %38 : vector<1x11xi1> to vector<1x11xi1>
    %40 = vector.broadcast %39 : vector<1x11xi1> to vector<40x11xi1>
    %41 = vector.broadcast %cst_32 : f32 to vector<40x11xf32>
    %42 = arith.select %40, %29, %41 : vector<40x11xi1>, vector<40x11xf32>
    %cst_33 = arith.constant dense<0.000000e+00> : vector<40xf32>
    %43 = vector.multi_reduction <add>, %42, %cst_33 [1] : vector<40x11xf32> to vector<40xf32>
    %44 = vector.shape_cast %43 : vector<40xf32> to vector<40x1xf32>
    %45 = vector.broadcast %44 : vector<40x1xf32> to vector<40x16xf32>
    %46 = arith.mulf %45, %0 : vector<40x16xf32>
    %cst_34 = arith.constant dense<0.000000e+00> : vector<16x16xf32>
    %47 = tpu.matmul %2, %46, %cst_34 {dimension_numbers = #tpu.dot_dimension_numbers<[1], [0], [0], [1], [0, 0, 1, 1], [], []>} : vector<16x40xf32>, vector<40x16xf32>, vector<16x16xf32> -> vector<16x16xf32>
    %c0_i32_35 = arith.constant 0 : i32
    %48 = vector.broadcast %c0_i32_35 : i32 to vector<1x11xi32>
    %49 = arith.cmpi eq, %32, %48 : vector<1x11xi32>
    %cst_36 = arith.constant 0.000000e+00 : f32
    %50 = vector.shape_cast %49 : vector<1x11xi1> to vector<1x11xi1>
    %51 = vector.broadcast %50 : vector<1x11xi1> to vector<16x11xi1>
    %52 = vector.broadcast %cst_36 : f32 to vector<16x11xf32>
    %53 = arith.select %51, %31, %52 : vector<16x11xi1>, vector<16x11xf32>
    %cst_37 = arith.constant dense<0.000000e+00> : vector<16xf32>
    %54 = vector.multi_reduction <add>, %53, %cst_37 [1] : vector<16x11xf32> to vector<16xf32>
    %55 = vector.shape_cast %54 : vector<16xf32> to vector<16x1xf32>
    %56 = vector.broadcast %55 : vector<16x1xf32> to vector<16x16xf32>
    %57 = arith.mulf %3, %56 : vector<16x16xf32>
    %58 = arith.addf %47, %57 : vector<16x16xf32>
    %cst_38 = arith.constant dense<0.000000e+00> : vector<16x32xf32>
    %59 = tpu.matmul %58, %36, %cst_38 {dimension_numbers = #tpu.dot_dimension_numbers<[1], [0], [0], [1], [0, 0, 1, 1], [], []>} : vector<16x16xf32>, vector<16x32xf32>, vector<16x32xf32> -> vector<16x32xf32>
    %60 = vector.broadcast %35 : vector<1x32xf32> to vector<16x32xf32>
    %61 = arith.addf %59, %60 : vector<16x32xf32>
    %cst_39 = arith.constant dense<0.000000e+00> : vector<32xf32>
    %62 = vector.multi_reduction <add>, %61, %cst_39 [0] : vector<16x32xf32> to vector<32xf32>
    %63 = vector.shape_cast %62 : vector<32xf32> to vector<1x32xf32>
    %cst_40 = arith.constant 1.600000e+01 : f32
    %64 = vector.broadcast %cst_40 : f32 to vector<1x32xf32>
    %65 = arith.divf %63, %64 : vector<1x32xf32>
    %66 = vector.broadcast %65 : vector<1x32xf32> to vector<16x32xf32>
    %67 = arith.subf %61, %66 : vector<16x32xf32>
    %68 = arith.mulf %67, %67 : vector<16x32xf32>
    %cst_41 = arith.constant dense<0.000000e+00> : vector<32xf32>
    %69 = vector.multi_reduction <add>, %68, %cst_41 [0] : vector<16x32xf32> to vector<32xf32>
    %70 = vector.shape_cast %69 : vector<32xf32> to vector<1x32xf32>
    %cst_42 = arith.constant 1.600000e+01 : f32
    %71 = vector.broadcast %cst_42 : f32 to vector<1x32xf32>
    %72 = arith.divf %70, %71 : vector<1x32xf32>
    %73 = vector.broadcast %65 : vector<1x32xf32> to vector<16x32xf32>
    %74 = arith.subf %61, %73 : vector<16x32xf32>
    %cst_43 = arith.constant 9.99999974E-6 : f32
    %75 = vector.broadcast %cst_43 : f32 to vector<1x32xf32>
    %76 = arith.addf %72, %75 : vector<1x32xf32>
    %77 = math.rsqrt %76 : vector<1x32xf32>
    %78 = vector.broadcast %77 : vector<1x32xf32> to vector<16x32xf32>
    %79 = arith.mulf %74, %78 : vector<16x32xf32>
    %cst_44 = arith.constant 0.000000e+00 : f32
    %80 = vector.broadcast %cst_44 : f32 to vector<16x32xf32>
    %81 = arith.maximumf %79, %80 : vector<16x32xf32>
    %c0_45 = arith.constant 0 : index
    %c0_46 = arith.constant 0 : index
    %c0_47 = arith.constant 0 : index
    %82 = vector.load %arg13[%c0_45, %c0_46, %c0_47] : memref<10x32x32xf32, #tpu.memory_space<vmem>>, vector<1x32x32xf32>
    %83 = vector.shape_cast %82 : vector<1x32x32xf32> to vector<32x32xf32>
    %c0_48 = arith.constant 0 : index
    %c0_49 = arith.constant 0 : index
    %c0_50 = arith.constant 0 : index
    %84 = vector.load %arg14[%c0_48, %c0_49, %c0_50] : memref<10x1x32xf32, #tpu.memory_space<vmem>>, vector<1x1x32xf32>
    %85 = vector.shape_cast %84 : vector<1x1x32xf32> to vector<1x32xf32>
    %cst_51 = arith.constant dense<0.000000e+00> : vector<16x32xf32>
    %86 = tpu.matmul %81, %83, %cst_51 {dimension_numbers = #tpu.dot_dimension_numbers<[1], [0], [0], [1], [0, 0, 1, 1], [], []>} : vector<16x32xf32>, vector<32x32xf32>, vector<16x32xf32> -> vector<16x32xf32>
    %c1_i32 = arith.constant 1 : i32
    %87 = vector.broadcast %c1_i32 : i32 to vector<1x11xi32>
    %88 = arith.cmpi eq, %32, %87 : vector<1x11xi32>
    %cst_52 = arith.constant 0.000000e+00 : f32
    %89 = vector.shape_cast %88 : vector<1x11xi1> to vector<1x11xi1>
    %90 = vector.broadcast %89 : vector<1x11xi1> to vector<40x11xi1>
    %91 = vector.broadcast %cst_52 : f32 to vector<40x11xf32>
    %92 = arith.select %90, %29, %91 : vector<40x11xi1>, vector<40x11xf32>
    %cst_53 = arith.constant dense<0.000000e+00> : vector<40xf32>
    %93 = vector.multi_reduction <add>, %92, %cst_53 [1] : vector<40x11xf32> to vector<40xf32>
    %94 = vector.shape_cast %93 : vector<40xf32> to vector<40x1xf32>
    %95 = vector.broadcast %94 : vector<40x1xf32> to vector<40x16xf32>
    %96 = arith.mulf %95, %0 : vector<40x16xf32>
    %cst_54 = arith.constant dense<0.000000e+00> : vector<16x16xf32>
    %97 = tpu.matmul %2, %96, %cst_54 {dimension_numbers = #tpu.dot_dimension_numbers<[1], [0], [0], [1], [0, 0, 1, 1], [], []>} : vector<16x40xf32>, vector<40x16xf32>, vector<16x16xf32> -> vector<16x16xf32>
    %c1_i32_55 = arith.constant 1 : i32
    %98 = vector.broadcast %c1_i32_55 : i32 to vector<1x11xi32>
    %99 = arith.cmpi eq, %32, %98 : vector<1x11xi32>
    %cst_56 = arith.constant 0.000000e+00 : f32
    %100 = vector.shape_cast %99 : vector<1x11xi1> to vector<1x11xi1>
    %101 = vector.broadcast %100 : vector<1x11xi1> to vector<16x11xi1>
    %102 = vector.broadcast %cst_56 : f32 to vector<16x11xf32>
    %103 = arith.select %101, %31, %102 : vector<16x11xi1>, vector<16x11xf32>
    %cst_57 = arith.constant dense<0.000000e+00> : vector<16xf32>
    %104 = vector.multi_reduction <add>, %103, %cst_57 [1] : vector<16x11xf32> to vector<16xf32>
    %105 = vector.shape_cast %104 : vector<16xf32> to vector<16x1xf32>
    %106 = vector.broadcast %105 : vector<16x1xf32> to vector<16x16xf32>
    %107 = arith.mulf %3, %106 : vector<16x16xf32>
    %108 = arith.addf %97, %107 : vector<16x16xf32>
    %cst_58 = arith.constant dense<0.000000e+00> : vector<16x32xf32>
    %109 = tpu.matmul %108, %86, %cst_58 {dimension_numbers = #tpu.dot_dimension_numbers<[1], [0], [0], [1], [0, 0, 1, 1], [], []>} : vector<16x16xf32>, vector<16x32xf32>, vector<16x32xf32> -> vector<16x32xf32>
    %110 = vector.broadcast %85 : vector<1x32xf32> to vector<16x32xf32>
    %111 = arith.addf %109, %110 : vector<16x32xf32>
    %cst_59 = arith.constant dense<0.000000e+00> : vector<32xf32>
    %112 = vector.multi_reduction <add>, %111, %cst_59 [0] : vector<16x32xf32> to vector<32xf32>
    %113 = vector.shape_cast %112 : vector<32xf32> to vector<1x32xf32>
    %cst_60 = arith.constant 1.600000e+01 : f32
    %114 = vector.broadcast %cst_60 : f32 to vector<1x32xf32>
    %115 = arith.divf %113, %114 : vector<1x32xf32>
    %116 = vector.broadcast %115 : vector<1x32xf32> to vector<16x32xf32>
    %117 = arith.subf %111, %116 : vector<16x32xf32>
    %118 = arith.mulf %117, %117 : vector<16x32xf32>
    %cst_61 = arith.constant dense<0.000000e+00> : vector<32xf32>
    %119 = vector.multi_reduction <add>, %118, %cst_61 [0] : vector<16x32xf32> to vector<32xf32>
    %120 = vector.shape_cast %119 : vector<32xf32> to vector<1x32xf32>
    %cst_62 = arith.constant 1.600000e+01 : f32
    %121 = vector.broadcast %cst_62 : f32 to vector<1x32xf32>
    %122 = arith.divf %120, %121 : vector<1x32xf32>
    %123 = vector.broadcast %115 : vector<1x32xf32> to vector<16x32xf32>
    %124 = arith.subf %111, %123 : vector<16x32xf32>
    %cst_63 = arith.constant 9.99999974E-6 : f32
    %125 = vector.broadcast %cst_63 : f32 to vector<1x32xf32>
    %126 = arith.addf %122, %125 : vector<1x32xf32>
    %127 = math.rsqrt %126 : vector<1x32xf32>
    %128 = vector.broadcast %127 : vector<1x32xf32> to vector<16x32xf32>
    %129 = arith.mulf %124, %128 : vector<16x32xf32>
    %cst_64 = arith.constant 0.000000e+00 : f32
    %130 = vector.broadcast %cst_64 : f32 to vector<16x32xf32>
    %131 = arith.maximumf %129, %130 : vector<16x32xf32>
    %c1 = arith.constant 1 : index
    %c0_65 = arith.constant 0 : index
    %c0_66 = arith.constant 0 : index
    %132 = vector.load %arg13[%c1, %c0_65, %c0_66] : memref<10x32x32xf32, #tpu.memory_space<vmem>>, vector<1x32x32xf32>
    %133 = vector.shape_cast %132 : vector<1x32x32xf32> to vector<32x32xf32>
    %c1_67 = arith.constant 1 : index
    %c0_68 = arith.constant 0 : index
    %c0_69 = arith.constant 0 : index
    %134 = vector.load %arg14[%c1_67, %c0_68, %c0_69] : memref<10x1x32xf32, #tpu.memory_space<vmem>>, vector<1x1x32xf32>
    %135 = vector.shape_cast %134 : vector<1x1x32xf32> to vector<1x32xf32>
    %cst_70 = arith.constant dense<0.000000e+00> : vector<16x32xf32>
    %136 = tpu.matmul %131, %133, %cst_70 {dimension_numbers = #tpu.dot_dimension_numbers<[1], [0], [0], [1], [0, 0, 1, 1], [], []>} : vector<16x32xf32>, vector<32x32xf32>, vector<16x32xf32> -> vector<16x32xf32>
    %c2_i32 = arith.constant 2 : i32
    %137 = vector.broadcast %c2_i32 : i32 to vector<1x11xi32>
    %138 = arith.cmpi eq, %32, %137 : vector<1x11xi32>
    %cst_71 = arith.constant 0.000000e+00 : f32
    %139 = vector.shape_cast %138 : vector<1x11xi1> to vector<1x11xi1>
    %140 = vector.broadcast %139 : vector<1x11xi1> to vector<40x11xi1>
    %141 = vector.broadcast %cst_71 : f32 to vector<40x11xf32>
    %142 = arith.select %140, %29, %141 : vector<40x11xi1>, vector<40x11xf32>
    %cst_72 = arith.constant dense<0.000000e+00> : vector<40xf32>
    %143 = vector.multi_reduction <add>, %142, %cst_72 [1] : vector<40x11xf32> to vector<40xf32>
    %144 = vector.shape_cast %143 : vector<40xf32> to vector<40x1xf32>
    %145 = vector.broadcast %144 : vector<40x1xf32> to vector<40x16xf32>
    %146 = arith.mulf %145, %0 : vector<40x16xf32>
    %cst_73 = arith.constant dense<0.000000e+00> : vector<16x16xf32>
    %147 = tpu.matmul %2, %146, %cst_73 {dimension_numbers = #tpu.dot_dimension_numbers<[1], [0], [0], [1], [0, 0, 1, 1], [], []>} : vector<16x40xf32>, vector<40x16xf32>, vector<16x16xf32> -> vector<16x16xf32>
    %c2_i32_74 = arith.constant 2 : i32
    %148 = vector.broadcast %c2_i32_74 : i32 to vector<1x11xi32>
    %149 = arith.cmpi eq, %32, %148 : vector<1x11xi32>
    %cst_75 = arith.constant 0.000000e+00 : f32
    %150 = vector.shape_cast %149 : vector<1x11xi1> to vector<1x11xi1>
    %151 = vector.broadcast %150 : vector<1x11xi1> to vector<16x11xi1>
    %152 = vector.broadcast %cst_75 : f32 to vector<16x11xf32>
    %153 = arith.select %151, %31, %152 : vector<16x11xi1>, vector<16x11xf32>
    %cst_76 = arith.constant dense<0.000000e+00> : vector<16xf32>
    %154 = vector.multi_reduction <add>, %153, %cst_76 [1] : vector<16x11xf32> to vector<16xf32>
    %155 = vector.shape_cast %154 : vector<16xf32> to vector<16x1xf32>
    %156 = vector.broadcast %155 : vector<16x1xf32> to vector<16x16xf32>
    %157 = arith.mulf %3, %156 : vector<16x16xf32>
    %158 = arith.addf %147, %157 : vector<16x16xf32>
    %cst_77 = arith.constant dense<0.000000e+00> : vector<16x32xf32>
    %159 = tpu.matmul %158, %136, %cst_77 {dimension_numbers = #tpu.dot_dimension_numbers<[1], [0], [0], [1], [0, 0, 1, 1], [], []>} : vector<16x16xf32>, vector<16x32xf32>, vector<16x32xf32> -> vector<16x32xf32>
    %160 = vector.broadcast %135 : vector<1x32xf32> to vector<16x32xf32>
    %161 = arith.addf %159, %160 : vector<16x32xf32>
    %162 = arith.addf %161, %61 : vector<16x32xf32>
    %163 = arith.addf %61, %162 : vector<16x32xf32>
    %cst_78 = arith.constant dense<0.000000e+00> : vector<32xf32>
    %164 = vector.multi_reduction <add>, %162, %cst_78 [0] : vector<16x32xf32> to vector<32xf32>
    %165 = vector.shape_cast %164 : vector<32xf32> to vector<1x32xf32>
    %cst_79 = arith.constant 1.600000e+01 : f32
    %166 = vector.broadcast %cst_79 : f32 to vector<1x32xf32>
    %167 = arith.divf %165, %166 : vector<1x32xf32>
    %168 = vector.broadcast %167 : vector<1x32xf32> to vector<16x32xf32>
    %169 = arith.subf %162, %168 : vector<16x32xf32>
    %170 = arith.mulf %169, %169 : vector<16x32xf32>
    %cst_80 = arith.constant dense<0.000000e+00> : vector<32xf32>
    %171 = vector.multi_reduction <add>, %170, %cst_80 [0] : vector<16x32xf32> to vector<32xf32>
    %172 = vector.shape_cast %171 : vector<32xf32> to vector<1x32xf32>
    %cst_81 = arith.constant 1.600000e+01 : f32
    %173 = vector.broadcast %cst_81 : f32 to vector<1x32xf32>
    %174 = arith.divf %172, %173 : vector<1x32xf32>
    %175 = vector.broadcast %167 : vector<1x32xf32> to vector<16x32xf32>
    %176 = arith.subf %162, %175 : vector<16x32xf32>
    %cst_82 = arith.constant 9.99999974E-6 : f32
    %177 = vector.broadcast %cst_82 : f32 to vector<1x32xf32>
    %178 = arith.addf %174, %177 : vector<1x32xf32>
    %179 = math.rsqrt %178 : vector<1x32xf32>
    %180 = vector.broadcast %179 : vector<1x32xf32> to vector<16x32xf32>
    %181 = arith.mulf %176, %180 : vector<16x32xf32>
    %cst_83 = arith.constant 0.000000e+00 : f32
    %182 = vector.broadcast %cst_83 : f32 to vector<16x32xf32>
    %183 = arith.maximumf %181, %182 : vector<16x32xf32>
    %c2 = arith.constant 2 : index
    %c0_84 = arith.constant 0 : index
    %c0_85 = arith.constant 0 : index
    %184 = vector.load %arg13[%c2, %c0_84, %c0_85] : memref<10x32x32xf32, #tpu.memory_space<vmem>>, vector<1x32x32xf32>
    %185 = vector.shape_cast %184 : vector<1x32x32xf32> to vector<32x32xf32>
    %c2_86 = arith.constant 2 : index
    %c0_87 = arith.constant 0 : index
    %c0_88 = arith.constant 0 : index
    %186 = vector.load %arg14[%c2_86, %c0_87, %c0_88] : memref<10x1x32xf32, #tpu.memory_space<vmem>>, vector<1x1x32xf32>
    %187 = vector.shape_cast %186 : vector<1x1x32xf32> to vector<1x32xf32>
    %cst_89 = arith.constant dense<0.000000e+00> : vector<16x32xf32>
    %188 = tpu.matmul %183, %185, %cst_89 {dimension_numbers = #tpu.dot_dimension_numbers<[1], [0], [0], [1], [0, 0, 1, 1], [], []>} : vector<16x32xf32>, vector<32x32xf32>, vector<16x32xf32> -> vector<16x32xf32>
    %c3_i32 = arith.constant 3 : i32
    %189 = vector.broadcast %c3_i32 : i32 to vector<1x11xi32>
    %190 = arith.cmpi eq, %32, %189 : vector<1x11xi32>
    %cst_90 = arith.constant 0.000000e+00 : f32
    %191 = vector.shape_cast %190 : vector<1x11xi1> to vector<1x11xi1>
    %192 = vector.broadcast %191 : vector<1x11xi1> to vector<40x11xi1>
    %193 = vector.broadcast %cst_90 : f32 to vector<40x11xf32>
    %194 = arith.select %192, %29, %193 : vector<40x11xi1>, vector<40x11xf32>
    %cst_91 = arith.constant dense<0.000000e+00> : vector<40xf32>
    %195 = vector.multi_reduction <add>, %194, %cst_91 [1] : vector<40x11xf32> to vector<40xf32>
    %196 = vector.shape_cast %195 : vector<40xf32> to vector<40x1xf32>
    %197 = vector.broadcast %196 : vector<40x1xf32> to vector<40x16xf32>
    %198 = arith.mulf %197, %0 : vector<40x16xf32>
    %cst_92 = arith.constant dense<0.000000e+00> : vector<16x16xf32>
    %199 = tpu.matmul %2, %198, %cst_92 {dimension_numbers = #tpu.dot_dimension_numbers<[1], [0], [0], [1], [0, 0, 1, 1], [], []>} : vector<16x40xf32>, vector<40x16xf32>, vector<16x16xf32> -> vector<16x16xf32>
    %c3_i32_93 = arith.constant 3 : i32
    %200 = vector.broadcast %c3_i32_93 : i32 to vector<1x11xi32>
    %201 = arith.cmpi eq, %32, %200 : vector<1x11xi32>
    %cst_94 = arith.constant 0.000000e+00 : f32
    %202 = vector.shape_cast %201 : vector<1x11xi1> to vector<1x11xi1>
    %203 = vector.broadcast %202 : vector<1x11xi1> to vector<16x11xi1>
    %204 = vector.broadcast %cst_94 : f32 to vector<16x11xf32>
    %205 = arith.select %203, %31, %204 : vector<16x11xi1>, vector<16x11xf32>
    %cst_95 = arith.constant dense<0.000000e+00> : vector<16xf32>
    %206 = vector.multi_reduction <add>, %205, %cst_95 [1] : vector<16x11xf32> to vector<16xf32>
    %207 = vector.shape_cast %206 : vector<16xf32> to vector<16x1xf32>
    %208 = vector.broadcast %207 : vector<16x1xf32> to vector<16x16xf32>
    %209 = arith.mulf %3, %208 : vector<16x16xf32>
    %210 = arith.addf %199, %209 : vector<16x16xf32>
    %cst_96 = arith.constant dense<0.000000e+00> : vector<16x32xf32>
    %211 = tpu.matmul %210, %188, %cst_96 {dimension_numbers = #tpu.dot_dimension_numbers<[1], [0], [0], [1], [0, 0, 1, 1], [], []>} : vector<16x16xf32>, vector<16x32xf32>, vector<16x32xf32> -> vector<16x32xf32>
    %212 = vector.broadcast %187 : vector<1x32xf32> to vector<16x32xf32>
    %213 = arith.addf %211, %212 : vector<16x32xf32>
    %cst_97 = arith.constant dense<0.000000e+00> : vector<32xf32>
    %214 = vector.multi_reduction <add>, %213, %cst_97 [0] : vector<16x32xf32> to vector<32xf32>
    %215 = vector.shape_cast %214 : vector<32xf32> to vector<1x32xf32>
    %cst_98 = arith.constant 1.600000e+01 : f32
    %216 = vector.broadcast %cst_98 : f32 to vector<1x32xf32>
    %217 = arith.divf %215, %216 : vector<1x32xf32>
    %218 = vector.broadcast %217 : vector<1x32xf32> to vector<16x32xf32>
    %219 = arith.subf %213, %218 : vector<16x32xf32>
    %220 = arith.mulf %219, %219 : vector<16x32xf32>
    %cst_99 = arith.constant dense<0.000000e+00> : vector<32xf32>
    %221 = vector.multi_reduction <add>, %220, %cst_99 [0] : vector<16x32xf32> to vector<32xf32>
    %222 = vector.shape_cast %221 : vector<32xf32> to vector<1x32xf32>
    %cst_100 = arith.constant 1.600000e+01 : f32
    %223 = vector.broadcast %cst_100 : f32 to vector<1x32xf32>
    %224 = arith.divf %222, %223 : vector<1x32xf32>
    %225 = vector.broadcast %217 : vector<1x32xf32> to vector<16x32xf32>
    %226 = arith.subf %213, %225 : vector<16x32xf32>
    %cst_101 = arith.constant 9.99999974E-6 : f32
    %227 = vector.broadcast %cst_101 : f32 to vector<1x32xf32>
    %228 = arith.addf %224, %227 : vector<1x32xf32>
    %229 = math.rsqrt %228 : vector<1x32xf32>
    %230 = vector.broadcast %229 : vector<1x32xf32> to vector<16x32xf32>
    %231 = arith.mulf %226, %230 : vector<16x32xf32>
    %cst_102 = arith.constant 0.000000e+00 : f32
    %232 = vector.broadcast %cst_102 : f32 to vector<16x32xf32>
    %233 = arith.maximumf %231, %232 : vector<16x32xf32>
    %c3 = arith.constant 3 : index
    %c0_103 = arith.constant 0 : index
    %c0_104 = arith.constant 0 : index
    %234 = vector.load %arg13[%c3, %c0_103, %c0_104] : memref<10x32x32xf32, #tpu.memory_space<vmem>>, vector<1x32x32xf32>
    %235 = vector.shape_cast %234 : vector<1x32x32xf32> to vector<32x32xf32>
    %c3_105 = arith.constant 3 : index
    %c0_106 = arith.constant 0 : index
    %c0_107 = arith.constant 0 : index
    %236 = vector.load %arg14[%c3_105, %c0_106, %c0_107] : memref<10x1x32xf32, #tpu.memory_space<vmem>>, vector<1x1x32xf32>
    %237 = vector.shape_cast %236 : vector<1x1x32xf32> to vector<1x32xf32>
    %cst_108 = arith.constant dense<0.000000e+00> : vector<16x32xf32>
    %238 = tpu.matmul %233, %235, %cst_108 {dimension_numbers = #tpu.dot_dimension_numbers<[1], [0], [0], [1], [0, 0, 1, 1], [], []>} : vector<16x32xf32>, vector<32x32xf32>, vector<16x32xf32> -> vector<16x32xf32>
    %c4_i32 = arith.constant 4 : i32
    %239 = vector.broadcast %c4_i32 : i32 to vector<1x11xi32>
    %240 = arith.cmpi eq, %32, %239 : vector<1x11xi32>
    %cst_109 = arith.constant 0.000000e+00 : f32
    %241 = vector.shape_cast %240 : vector<1x11xi1> to vector<1x11xi1>
    %242 = vector.broadcast %241 : vector<1x11xi1> to vector<40x11xi1>
    %243 = vector.broadcast %cst_109 : f32 to vector<40x11xf32>
    %244 = arith.select %242, %29, %243 : vector<40x11xi1>, vector<40x11xf32>
    %cst_110 = arith.constant dense<0.000000e+00> : vector<40xf32>
    %245 = vector.multi_reduction <add>, %244, %cst_110 [1] : vector<40x11xf32> to vector<40xf32>
    %246 = vector.shape_cast %245 : vector<40xf32> to vector<40x1xf32>
    %247 = vector.broadcast %246 : vector<40x1xf32> to vector<40x16xf32>
    %248 = arith.mulf %247, %0 : vector<40x16xf32>
    %cst_111 = arith.constant dense<0.000000e+00> : vector<16x16xf32>
    %249 = tpu.matmul %2, %248, %cst_111 {dimension_numbers = #tpu.dot_dimension_numbers<[1], [0], [0], [1], [0, 0, 1, 1], [], []>} : vector<16x40xf32>, vector<40x16xf32>, vector<16x16xf32> -> vector<16x16xf32>
    %c4_i32_112 = arith.constant 4 : i32
    %250 = vector.broadcast %c4_i32_112 : i32 to vector<1x11xi32>
    %251 = arith.cmpi eq, %32, %250 : vector<1x11xi32>
    %cst_113 = arith.constant 0.000000e+00 : f32
    %252 = vector.shape_cast %251 : vector<1x11xi1> to vector<1x11xi1>
    %253 = vector.broadcast %252 : vector<1x11xi1> to vector<16x11xi1>
    %254 = vector.broadcast %cst_113 : f32 to vector<16x11xf32>
    %255 = arith.select %253, %31, %254 : vector<16x11xi1>, vector<16x11xf32>
    %cst_114 = arith.constant dense<0.000000e+00> : vector<16xf32>
    %256 = vector.multi_reduction <add>, %255, %cst_114 [1] : vector<16x11xf32> to vector<16xf32>
    %257 = vector.shape_cast %256 : vector<16xf32> to vector<16x1xf32>
    %258 = vector.broadcast %257 : vector<16x1xf32> to vector<16x16xf32>
    %259 = arith.mulf %3, %258 : vector<16x16xf32>
    %260 = arith.addf %249, %259 : vector<16x16xf32>
    %cst_115 = arith.constant dense<0.000000e+00> : vector<16x32xf32>
    %261 = tpu.matmul %260, %238, %cst_115 {dimension_numbers = #tpu.dot_dimension_numbers<[1], [0], [0], [1], [0, 0, 1, 1], [], []>} : vector<16x16xf32>, vector<16x32xf32>, vector<16x32xf32> -> vector<16x32xf32>
    %262 = vector.broadcast %237 : vector<1x32xf32> to vector<16x32xf32>
    %263 = arith.addf %261, %262 : vector<16x32xf32>
    %264 = arith.addf %263, %163 : vector<16x32xf32>
    %265 = arith.addf %163, %264 : vector<16x32xf32>
    %cst_116 = arith.constant dense<0.000000e+00> : vector<32xf32>
    %266 = vector.multi_reduction <add>, %264, %cst_116 [0] : vector<16x32xf32> to vector<32xf32>
    %267 = vector.shape_cast %266 : vector<32xf32> to vector<1x32xf32>
    %cst_117 = arith.constant 1.600000e+01 : f32
    %268 = vector.broadcast %cst_117 : f32 to vector<1x32xf32>
    %269 = arith.divf %267, %268 : vector<1x32xf32>
    %270 = vector.broadcast %269 : vector<1x32xf32> to vector<16x32xf32>
    %271 = arith.subf %264, %270 : vector<16x32xf32>
    %272 = arith.mulf %271, %271 : vector<16x32xf32>
    %cst_118 = arith.constant dense<0.000000e+00> : vector<32xf32>
    %273 = vector.multi_reduction <add>, %272, %cst_118 [0] : vector<16x32xf32> to vector<32xf32>
    %274 = vector.shape_cast %273 : vector<32xf32> to vector<1x32xf32>
    %cst_119 = arith.constant 1.600000e+01 : f32
    %275 = vector.broadcast %cst_119 : f32 to vector<1x32xf32>
    %276 = arith.divf %274, %275 : vector<1x32xf32>
    %277 = vector.broadcast %269 : vector<1x32xf32> to vector<16x32xf32>
    %278 = arith.subf %264, %277 : vector<16x32xf32>
    %cst_120 = arith.constant 9.99999974E-6 : f32
    %279 = vector.broadcast %cst_120 : f32 to vector<1x32xf32>
    %280 = arith.addf %276, %279 : vector<1x32xf32>
    %281 = math.rsqrt %280 : vector<1x32xf32>
    %282 = vector.broadcast %281 : vector<1x32xf32> to vector<16x32xf32>
    %283 = arith.mulf %278, %282 : vector<16x32xf32>
    %cst_121 = arith.constant 0.000000e+00 : f32
    %284 = vector.broadcast %cst_121 : f32 to vector<16x32xf32>
    %285 = arith.maximumf %283, %284 : vector<16x32xf32>
    %c4 = arith.constant 4 : index
    %c0_122 = arith.constant 0 : index
    %c0_123 = arith.constant 0 : index
    %286 = vector.load %arg13[%c4, %c0_122, %c0_123] : memref<10x32x32xf32, #tpu.memory_space<vmem>>, vector<1x32x32xf32>
    %287 = vector.shape_cast %286 : vector<1x32x32xf32> to vector<32x32xf32>
    %c4_124 = arith.constant 4 : index
    %c0_125 = arith.constant 0 : index
    %c0_126 = arith.constant 0 : index
    %288 = vector.load %arg14[%c4_124, %c0_125, %c0_126] : memref<10x1x32xf32, #tpu.memory_space<vmem>>, vector<1x1x32xf32>
    %289 = vector.shape_cast %288 : vector<1x1x32xf32> to vector<1x32xf32>
    %cst_127 = arith.constant dense<0.000000e+00> : vector<16x32xf32>
    %290 = tpu.matmul %285, %287, %cst_127 {dimension_numbers = #tpu.dot_dimension_numbers<[1], [0], [0], [1], [0, 0, 1, 1], [], []>} : vector<16x32xf32>, vector<32x32xf32>, vector<16x32xf32> -> vector<16x32xf32>
    %c5_i32 = arith.constant 5 : i32
    %291 = vector.broadcast %c5_i32 : i32 to vector<1x11xi32>
    %292 = arith.cmpi eq, %32, %291 : vector<1x11xi32>
    %cst_128 = arith.constant 0.000000e+00 : f32
    %293 = vector.shape_cast %292 : vector<1x11xi1> to vector<1x11xi1>
    %294 = vector.broadcast %293 : vector<1x11xi1> to vector<40x11xi1>
    %295 = vector.broadcast %cst_128 : f32 to vector<40x11xf32>
    %296 = arith.select %294, %29, %295 : vector<40x11xi1>, vector<40x11xf32>
    %cst_129 = arith.constant dense<0.000000e+00> : vector<40xf32>
    %297 = vector.multi_reduction <add>, %296, %cst_129 [1] : vector<40x11xf32> to vector<40xf32>
    %298 = vector.shape_cast %297 : vector<40xf32> to vector<40x1xf32>
    %299 = vector.broadcast %298 : vector<40x1xf32> to vector<40x16xf32>
    %300 = arith.mulf %299, %0 : vector<40x16xf32>
    %cst_130 = arith.constant dense<0.000000e+00> : vector<16x16xf32>
    %301 = tpu.matmul %2, %300, %cst_130 {dimension_numbers = #tpu.dot_dimension_numbers<[1], [0], [0], [1], [0, 0, 1, 1], [], []>} : vector<16x40xf32>, vector<40x16xf32>, vector<16x16xf32> -> vector<16x16xf32>
    %c5_i32_131 = arith.constant 5 : i32
    %302 = vector.broadcast %c5_i32_131 : i32 to vector<1x11xi32>
    %303 = arith.cmpi eq, %32, %302 : vector<1x11xi32>
    %cst_132 = arith.constant 0.000000e+00 : f32
    %304 = vector.shape_cast %303 : vector<1x11xi1> to vector<1x11xi1>
    %305 = vector.broadcast %304 : vector<1x11xi1> to vector<16x11xi1>
    %306 = vector.broadcast %cst_132 : f32 to vector<16x11xf32>
    %307 = arith.select %305, %31, %306 : vector<16x11xi1>, vector<16x11xf32>
    %cst_133 = arith.constant dense<0.000000e+00> : vector<16xf32>
    %308 = vector.multi_reduction <add>, %307, %cst_133 [1] : vector<16x11xf32> to vector<16xf32>
    %309 = vector.shape_cast %308 : vector<16xf32> to vector<16x1xf32>
    %310 = vector.broadcast %309 : vector<16x1xf32> to vector<16x16xf32>
    %311 = arith.mulf %3, %310 : vector<16x16xf32>
    %312 = arith.addf %301, %311 : vector<16x16xf32>
    %cst_134 = arith.constant dense<0.000000e+00> : vector<16x32xf32>
    %313 = tpu.matmul %312, %290, %cst_134 {dimension_numbers = #tpu.dot_dimension_numbers<[1], [0], [0], [1], [0, 0, 1, 1], [], []>} : vector<16x16xf32>, vector<16x32xf32>, vector<16x32xf32> -> vector<16x32xf32>
    %314 = vector.broadcast %289 : vector<1x32xf32> to vector<16x32xf32>
    %315 = arith.addf %313, %314 : vector<16x32xf32>
    %cst_135 = arith.constant dense<0.000000e+00> : vector<32xf32>
    %316 = vector.multi_reduction <add>, %315, %cst_135 [0] : vector<16x32xf32> to vector<32xf32>
    %317 = vector.shape_cast %316 : vector<32xf32> to vector<1x32xf32>
    %cst_136 = arith.constant 1.600000e+01 : f32
    %318 = vector.broadcast %cst_136 : f32 to vector<1x32xf32>
    %319 = arith.divf %317, %318 : vector<1x32xf32>
    %320 = vector.broadcast %319 : vector<1x32xf32> to vector<16x32xf32>
    %321 = arith.subf %315, %320 : vector<16x32xf32>
    %322 = arith.mulf %321, %321 : vector<16x32xf32>
    %cst_137 = arith.constant dense<0.000000e+00> : vector<32xf32>
    %323 = vector.multi_reduction <add>, %322, %cst_137 [0] : vector<16x32xf32> to vector<32xf32>
    %324 = vector.shape_cast %323 : vector<32xf32> to vector<1x32xf32>
    %cst_138 = arith.constant 1.600000e+01 : f32
    %325 = vector.broadcast %cst_138 : f32 to vector<1x32xf32>
    %326 = arith.divf %324, %325 : vector<1x32xf32>
    %327 = vector.broadcast %319 : vector<1x32xf32> to vector<16x32xf32>
    %328 = arith.subf %315, %327 : vector<16x32xf32>
    %cst_139 = arith.constant 9.99999974E-6 : f32
    %329 = vector.broadcast %cst_139 : f32 to vector<1x32xf32>
    %330 = arith.addf %326, %329 : vector<1x32xf32>
    %331 = math.rsqrt %330 : vector<1x32xf32>
    %332 = vector.broadcast %331 : vector<1x32xf32> to vector<16x32xf32>
    %333 = arith.mulf %328, %332 : vector<16x32xf32>
    %cst_140 = arith.constant 0.000000e+00 : f32
    %334 = vector.broadcast %cst_140 : f32 to vector<16x32xf32>
    %335 = arith.maximumf %333, %334 : vector<16x32xf32>
    %c5 = arith.constant 5 : index
    %c0_141 = arith.constant 0 : index
    %c0_142 = arith.constant 0 : index
    %336 = vector.load %arg13[%c5, %c0_141, %c0_142] : memref<10x32x32xf32, #tpu.memory_space<vmem>>, vector<1x32x32xf32>
    %337 = vector.shape_cast %336 : vector<1x32x32xf32> to vector<32x32xf32>
    %c5_143 = arith.constant 5 : index
    %c0_144 = arith.constant 0 : index
    %c0_145 = arith.constant 0 : index
    %338 = vector.load %arg14[%c5_143, %c0_144, %c0_145] : memref<10x1x32xf32, #tpu.memory_space<vmem>>, vector<1x1x32xf32>
    %339 = vector.shape_cast %338 : vector<1x1x32xf32> to vector<1x32xf32>
    %cst_146 = arith.constant dense<0.000000e+00> : vector<16x32xf32>
    %340 = tpu.matmul %335, %337, %cst_146 {dimension_numbers = #tpu.dot_dimension_numbers<[1], [0], [0], [1], [0, 0, 1, 1], [], []>} : vector<16x32xf32>, vector<32x32xf32>, vector<16x32xf32> -> vector<16x32xf32>
    %c6_i32 = arith.constant 6 : i32
    %341 = vector.broadcast %c6_i32 : i32 to vector<1x11xi32>
    %342 = arith.cmpi eq, %32, %341 : vector<1x11xi32>
    %cst_147 = arith.constant 0.000000e+00 : f32
    %343 = vector.shape_cast %342 : vector<1x11xi1> to vector<1x11xi1>
    %344 = vector.broadcast %343 : vector<1x11xi1> to vector<40x11xi1>
    %345 = vector.broadcast %cst_147 : f32 to vector<40x11xf32>
    %346 = arith.select %344, %29, %345 : vector<40x11xi1>, vector<40x11xf32>
    %cst_148 = arith.constant dense<0.000000e+00> : vector<40xf32>
    %347 = vector.multi_reduction <add>, %346, %cst_148 [1] : vector<40x11xf32> to vector<40xf32>
    %348 = vector.shape_cast %347 : vector<40xf32> to vector<40x1xf32>
    %349 = vector.broadcast %348 : vector<40x1xf32> to vector<40x16xf32>
    %350 = arith.mulf %349, %0 : vector<40x16xf32>
    %cst_149 = arith.constant dense<0.000000e+00> : vector<16x16xf32>
    %351 = tpu.matmul %2, %350, %cst_149 {dimension_numbers = #tpu.dot_dimension_numbers<[1], [0], [0], [1], [0, 0, 1, 1], [], []>} : vector<16x40xf32>, vector<40x16xf32>, vector<16x16xf32> -> vector<16x16xf32>
    %c6_i32_150 = arith.constant 6 : i32
    %352 = vector.broadcast %c6_i32_150 : i32 to vector<1x11xi32>
    %353 = arith.cmpi eq, %32, %352 : vector<1x11xi32>
    %cst_151 = arith.constant 0.000000e+00 : f32
    %354 = vector.shape_cast %353 : vector<1x11xi1> to vector<1x11xi1>
    %355 = vector.broadcast %354 : vector<1x11xi1> to vector<16x11xi1>
    %356 = vector.broadcast %cst_151 : f32 to vector<16x11xf32>
    %357 = arith.select %355, %31, %356 : vector<16x11xi1>, vector<16x11xf32>
    %cst_152 = arith.constant dense<0.000000e+00> : vector<16xf32>
    %358 = vector.multi_reduction <add>, %357, %cst_152 [1] : vector<16x11xf32> to vector<16xf32>
    %359 = vector.shape_cast %358 : vector<16xf32> to vector<16x1xf32>
    %360 = vector.broadcast %359 : vector<16x1xf32> to vector<16x16xf32>
    %361 = arith.mulf %3, %360 : vector<16x16xf32>
    %362 = arith.addf %351, %361 : vector<16x16xf32>
    %cst_153 = arith.constant dense<0.000000e+00> : vector<16x32xf32>
    %363 = tpu.matmul %362, %340, %cst_153 {dimension_numbers = #tpu.dot_dimension_numbers<[1], [0], [0], [1], [0, 0, 1, 1], [], []>} : vector<16x16xf32>, vector<16x32xf32>, vector<16x32xf32> -> vector<16x32xf32>
    %364 = vector.broadcast %339 : vector<1x32xf32> to vector<16x32xf32>
    %365 = arith.addf %363, %364 : vector<16x32xf32>
    %366 = arith.addf %365, %265 : vector<16x32xf32>
    %367 = arith.addf %265, %366 : vector<16x32xf32>
    %cst_154 = arith.constant dense<0.000000e+00> : vector<32xf32>
    %368 = vector.multi_reduction <add>, %366, %cst_154 [0] : vector<16x32xf32> to vector<32xf32>
    %369 = vector.shape_cast %368 : vector<32xf32> to vector<1x32xf32>
    %cst_155 = arith.constant 1.600000e+01 : f32
    %370 = vector.broadcast %cst_155 : f32 to vector<1x32xf32>
    %371 = arith.divf %369, %370 : vector<1x32xf32>
    %372 = vector.broadcast %371 : vector<1x32xf32> to vector<16x32xf32>
    %373 = arith.subf %366, %372 : vector<16x32xf32>
    %374 = arith.mulf %373, %373 : vector<16x32xf32>
    %cst_156 = arith.constant dense<0.000000e+00> : vector<32xf32>
    %375 = vector.multi_reduction <add>, %374, %cst_156 [0] : vector<16x32xf32> to vector<32xf32>
    %376 = vector.shape_cast %375 : vector<32xf32> to vector<1x32xf32>
    %cst_157 = arith.constant 1.600000e+01 : f32
    %377 = vector.broadcast %cst_157 : f32 to vector<1x32xf32>
    %378 = arith.divf %376, %377 : vector<1x32xf32>
    %379 = vector.broadcast %371 : vector<1x32xf32> to vector<16x32xf32>
    %380 = arith.subf %366, %379 : vector<16x32xf32>
    %cst_158 = arith.constant 9.99999974E-6 : f32
    %381 = vector.broadcast %cst_158 : f32 to vector<1x32xf32>
    %382 = arith.addf %378, %381 : vector<1x32xf32>
    %383 = math.rsqrt %382 : vector<1x32xf32>
    %384 = vector.broadcast %383 : vector<1x32xf32> to vector<16x32xf32>
    %385 = arith.mulf %380, %384 : vector<16x32xf32>
    %cst_159 = arith.constant 0.000000e+00 : f32
    %386 = vector.broadcast %cst_159 : f32 to vector<16x32xf32>
    %387 = arith.maximumf %385, %386 : vector<16x32xf32>
    %c6 = arith.constant 6 : index
    %c0_160 = arith.constant 0 : index
    %c0_161 = arith.constant 0 : index
    %388 = vector.load %arg13[%c6, %c0_160, %c0_161] : memref<10x32x32xf32, #tpu.memory_space<vmem>>, vector<1x32x32xf32>
    %389 = vector.shape_cast %388 : vector<1x32x32xf32> to vector<32x32xf32>
    %c6_162 = arith.constant 6 : index
    %c0_163 = arith.constant 0 : index
    %c0_164 = arith.constant 0 : index
    %390 = vector.load %arg14[%c6_162, %c0_163, %c0_164] : memref<10x1x32xf32, #tpu.memory_space<vmem>>, vector<1x1x32xf32>
    %391 = vector.shape_cast %390 : vector<1x1x32xf32> to vector<1x32xf32>
    %cst_165 = arith.constant dense<0.000000e+00> : vector<16x32xf32>
    %392 = tpu.matmul %387, %389, %cst_165 {dimension_numbers = #tpu.dot_dimension_numbers<[1], [0], [0], [1], [0, 0, 1, 1], [], []>} : vector<16x32xf32>, vector<32x32xf32>, vector<16x32xf32> -> vector<16x32xf32>
    %c7_i32 = arith.constant 7 : i32
    %393 = vector.broadcast %c7_i32 : i32 to vector<1x11xi32>
    %394 = arith.cmpi eq, %32, %393 : vector<1x11xi32>
    %cst_166 = arith.constant 0.000000e+00 : f32
    %395 = vector.shape_cast %394 : vector<1x11xi1> to vector<1x11xi1>
    %396 = vector.broadcast %395 : vector<1x11xi1> to vector<40x11xi1>
    %397 = vector.broadcast %cst_166 : f32 to vector<40x11xf32>
    %398 = arith.select %396, %29, %397 : vector<40x11xi1>, vector<40x11xf32>
    %cst_167 = arith.constant dense<0.000000e+00> : vector<40xf32>
    %399 = vector.multi_reduction <add>, %398, %cst_167 [1] : vector<40x11xf32> to vector<40xf32>
    %400 = vector.shape_cast %399 : vector<40xf32> to vector<40x1xf32>
    %401 = vector.broadcast %400 : vector<40x1xf32> to vector<40x16xf32>
    %402 = arith.mulf %401, %0 : vector<40x16xf32>
    %cst_168 = arith.constant dense<0.000000e+00> : vector<16x16xf32>
    %403 = tpu.matmul %2, %402, %cst_168 {dimension_numbers = #tpu.dot_dimension_numbers<[1], [0], [0], [1], [0, 0, 1, 1], [], []>} : vector<16x40xf32>, vector<40x16xf32>, vector<16x16xf32> -> vector<16x16xf32>
    %c7_i32_169 = arith.constant 7 : i32
    %404 = vector.broadcast %c7_i32_169 : i32 to vector<1x11xi32>
    %405 = arith.cmpi eq, %32, %404 : vector<1x11xi32>
    %cst_170 = arith.constant 0.000000e+00 : f32
    %406 = vector.shape_cast %405 : vector<1x11xi1> to vector<1x11xi1>
    %407 = vector.broadcast %406 : vector<1x11xi1> to vector<16x11xi1>
    %408 = vector.broadcast %cst_170 : f32 to vector<16x11xf32>
    %409 = arith.select %407, %31, %408 : vector<16x11xi1>, vector<16x11xf32>
    %cst_171 = arith.constant dense<0.000000e+00> : vector<16xf32>
    %410 = vector.multi_reduction <add>, %409, %cst_171 [1] : vector<16x11xf32> to vector<16xf32>
    %411 = vector.shape_cast %410 : vector<16xf32> to vector<16x1xf32>
    %412 = vector.broadcast %411 : vector<16x1xf32> to vector<16x16xf32>
    %413 = arith.mulf %3, %412 : vector<16x16xf32>
    %414 = arith.addf %403, %413 : vector<16x16xf32>
    %cst_172 = arith.constant dense<0.000000e+00> : vector<16x32xf32>
    %415 = tpu.matmul %414, %392, %cst_172 {dimension_numbers = #tpu.dot_dimension_numbers<[1], [0], [0], [1], [0, 0, 1, 1], [], []>} : vector<16x16xf32>, vector<16x32xf32>, vector<16x32xf32> -> vector<16x32xf32>
    %416 = vector.broadcast %391 : vector<1x32xf32> to vector<16x32xf32>
    %417 = arith.addf %415, %416 : vector<16x32xf32>
    %cst_173 = arith.constant dense<0.000000e+00> : vector<32xf32>
    %418 = vector.multi_reduction <add>, %417, %cst_173 [0] : vector<16x32xf32> to vector<32xf32>
    %419 = vector.shape_cast %418 : vector<32xf32> to vector<1x32xf32>
    %cst_174 = arith.constant 1.600000e+01 : f32
    %420 = vector.broadcast %cst_174 : f32 to vector<1x32xf32>
    %421 = arith.divf %419, %420 : vector<1x32xf32>
    %422 = vector.broadcast %421 : vector<1x32xf32> to vector<16x32xf32>
    %423 = arith.subf %417, %422 : vector<16x32xf32>
    %424 = arith.mulf %423, %423 : vector<16x32xf32>
    %cst_175 = arith.constant dense<0.000000e+00> : vector<32xf32>
    %425 = vector.multi_reduction <add>, %424, %cst_175 [0] : vector<16x32xf32> to vector<32xf32>
    %426 = vector.shape_cast %425 : vector<32xf32> to vector<1x32xf32>
    %cst_176 = arith.constant 1.600000e+01 : f32
    %427 = vector.broadcast %cst_176 : f32 to vector<1x32xf32>
    %428 = arith.divf %426, %427 : vector<1x32xf32>
    %429 = vector.broadcast %421 : vector<1x32xf32> to vector<16x32xf32>
    %430 = arith.subf %417, %429 : vector<16x32xf32>
    %cst_177 = arith.constant 9.99999974E-6 : f32
    %431 = vector.broadcast %cst_177 : f32 to vector<1x32xf32>
    %432 = arith.addf %428, %431 : vector<1x32xf32>
    %433 = math.rsqrt %432 : vector<1x32xf32>
    %434 = vector.broadcast %433 : vector<1x32xf32> to vector<16x32xf32>
    %435 = arith.mulf %430, %434 : vector<16x32xf32>
    %cst_178 = arith.constant 0.000000e+00 : f32
    %436 = vector.broadcast %cst_178 : f32 to vector<16x32xf32>
    %437 = arith.maximumf %435, %436 : vector<16x32xf32>
    %c7 = arith.constant 7 : index
    %c0_179 = arith.constant 0 : index
    %c0_180 = arith.constant 0 : index
    %438 = vector.load %arg13[%c7, %c0_179, %c0_180] : memref<10x32x32xf32, #tpu.memory_space<vmem>>, vector<1x32x32xf32>
    %439 = vector.shape_cast %438 : vector<1x32x32xf32> to vector<32x32xf32>
    %c7_181 = arith.constant 7 : index
    %c0_182 = arith.constant 0 : index
    %c0_183 = arith.constant 0 : index
    %440 = vector.load %arg14[%c7_181, %c0_182, %c0_183] : memref<10x1x32xf32, #tpu.memory_space<vmem>>, vector<1x1x32xf32>
    %441 = vector.shape_cast %440 : vector<1x1x32xf32> to vector<1x32xf32>
    %cst_184 = arith.constant dense<0.000000e+00> : vector<16x32xf32>
    %442 = tpu.matmul %437, %439, %cst_184 {dimension_numbers = #tpu.dot_dimension_numbers<[1], [0], [0], [1], [0, 0, 1, 1], [], []>} : vector<16x32xf32>, vector<32x32xf32>, vector<16x32xf32> -> vector<16x32xf32>
    %c8_i32 = arith.constant 8 : i32
    %443 = vector.broadcast %c8_i32 : i32 to vector<1x11xi32>
    %444 = arith.cmpi eq, %32, %443 : vector<1x11xi32>
    %cst_185 = arith.constant 0.000000e+00 : f32
    %445 = vector.shape_cast %444 : vector<1x11xi1> to vector<1x11xi1>
    %446 = vector.broadcast %445 : vector<1x11xi1> to vector<40x11xi1>
    %447 = vector.broadcast %cst_185 : f32 to vector<40x11xf32>
    %448 = arith.select %446, %29, %447 : vector<40x11xi1>, vector<40x11xf32>
    %cst_186 = arith.constant dense<0.000000e+00> : vector<40xf32>
    %449 = vector.multi_reduction <add>, %448, %cst_186 [1] : vector<40x11xf32> to vector<40xf32>
    %450 = vector.shape_cast %449 : vector<40xf32> to vector<40x1xf32>
    %451 = vector.broadcast %450 : vector<40x1xf32> to vector<40x16xf32>
    %452 = arith.mulf %451, %0 : vector<40x16xf32>
    %cst_187 = arith.constant dense<0.000000e+00> : vector<16x16xf32>
    %453 = tpu.matmul %2, %452, %cst_187 {dimension_numbers = #tpu.dot_dimension_numbers<[1], [0], [0], [1], [0, 0, 1, 1], [], []>} : vector<16x40xf32>, vector<40x16xf32>, vector<16x16xf32> -> vector<16x16xf32>
    %c8_i32_188 = arith.constant 8 : i32
    %454 = vector.broadcast %c8_i32_188 : i32 to vector<1x11xi32>
    %455 = arith.cmpi eq, %32, %454 : vector<1x11xi32>
    %cst_189 = arith.constant 0.000000e+00 : f32
    %456 = vector.shape_cast %455 : vector<1x11xi1> to vector<1x11xi1>
    %457 = vector.broadcast %456 : vector<1x11xi1> to vector<16x11xi1>
    %458 = vector.broadcast %cst_189 : f32 to vector<16x11xf32>
    %459 = arith.select %457, %31, %458 : vector<16x11xi1>, vector<16x11xf32>
    %cst_190 = arith.constant dense<0.000000e+00> : vector<16xf32>
    %460 = vector.multi_reduction <add>, %459, %cst_190 [1] : vector<16x11xf32> to vector<16xf32>
    %461 = vector.shape_cast %460 : vector<16xf32> to vector<16x1xf32>
    %462 = vector.broadcast %461 : vector<16x1xf32> to vector<16x16xf32>
    %463 = arith.mulf %3, %462 : vector<16x16xf32>
    %464 = arith.addf %453, %463 : vector<16x16xf32>
    %cst_191 = arith.constant dense<0.000000e+00> : vector<16x32xf32>
    %465 = tpu.matmul %464, %442, %cst_191 {dimension_numbers = #tpu.dot_dimension_numbers<[1], [0], [0], [1], [0, 0, 1, 1], [], []>} : vector<16x16xf32>, vector<16x32xf32>, vector<16x32xf32> -> vector<16x32xf32>
    %466 = vector.broadcast %441 : vector<1x32xf32> to vector<16x32xf32>
    %467 = arith.addf %465, %466 : vector<16x32xf32>
    %468 = arith.addf %467, %367 : vector<16x32xf32>
    %469 = arith.addf %367, %468 : vector<16x32xf32>
    %cst_192 = arith.constant dense<0.000000e+00> : vector<32xf32>
    %470 = vector.multi_reduction <add>, %468, %cst_192 [0] : vector<16x32xf32> to vector<32xf32>
    %471 = vector.shape_cast %470 : vector<32xf32> to vector<1x32xf32>
    %cst_193 = arith.constant 1.600000e+01 : f32
    %472 = vector.broadcast %cst_193 : f32 to vector<1x32xf32>
    %473 = arith.divf %471, %472 : vector<1x32xf32>
    %474 = vector.broadcast %473 : vector<1x32xf32> to vector<16x32xf32>
    %475 = arith.subf %468, %474 : vector<16x32xf32>
    %476 = arith.mulf %475, %475 : vector<16x32xf32>
    %cst_194 = arith.constant dense<0.000000e+00> : vector<32xf32>
    %477 = vector.multi_reduction <add>, %476, %cst_194 [0] : vector<16x32xf32> to vector<32xf32>
    %478 = vector.shape_cast %477 : vector<32xf32> to vector<1x32xf32>
    %cst_195 = arith.constant 1.600000e+01 : f32
    %479 = vector.broadcast %cst_195 : f32 to vector<1x32xf32>
    %480 = arith.divf %478, %479 : vector<1x32xf32>
    %481 = vector.broadcast %473 : vector<1x32xf32> to vector<16x32xf32>
    %482 = arith.subf %468, %481 : vector<16x32xf32>
    %cst_196 = arith.constant 9.99999974E-6 : f32
    %483 = vector.broadcast %cst_196 : f32 to vector<1x32xf32>
    %484 = arith.addf %480, %483 : vector<1x32xf32>
    %485 = math.rsqrt %484 : vector<1x32xf32>
    %486 = vector.broadcast %485 : vector<1x32xf32> to vector<16x32xf32>
    %487 = arith.mulf %482, %486 : vector<16x32xf32>
    %cst_197 = arith.constant 0.000000e+00 : f32
    %488 = vector.broadcast %cst_197 : f32 to vector<16x32xf32>
    %489 = arith.maximumf %487, %488 : vector<16x32xf32>
    %c8 = arith.constant 8 : index
    %c0_198 = arith.constant 0 : index
    %c0_199 = arith.constant 0 : index
    %490 = vector.load %arg13[%c8, %c0_198, %c0_199] : memref<10x32x32xf32, #tpu.memory_space<vmem>>, vector<1x32x32xf32>
    %491 = vector.shape_cast %490 : vector<1x32x32xf32> to vector<32x32xf32>
    %c8_200 = arith.constant 8 : index
    %c0_201 = arith.constant 0 : index
    %c0_202 = arith.constant 0 : index
    %492 = vector.load %arg14[%c8_200, %c0_201, %c0_202] : memref<10x1x32xf32, #tpu.memory_space<vmem>>, vector<1x1x32xf32>
    %493 = vector.shape_cast %492 : vector<1x1x32xf32> to vector<1x32xf32>
    %cst_203 = arith.constant dense<0.000000e+00> : vector<16x32xf32>
    %494 = tpu.matmul %489, %491, %cst_203 {dimension_numbers = #tpu.dot_dimension_numbers<[1], [0], [0], [1], [0, 0, 1, 1], [], []>} : vector<16x32xf32>, vector<32x32xf32>, vector<16x32xf32> -> vector<16x32xf32>
    %c9_i32 = arith.constant 9 : i32
    %495 = vector.broadcast %c9_i32 : i32 to vector<1x11xi32>
    %496 = arith.cmpi eq, %32, %495 : vector<1x11xi32>
    %cst_204 = arith.constant 0.000000e+00 : f32
    %497 = vector.shape_cast %496 : vector<1x11xi1> to vector<1x11xi1>
    %498 = vector.broadcast %497 : vector<1x11xi1> to vector<40x11xi1>
    %499 = vector.broadcast %cst_204 : f32 to vector<40x11xf32>
    %500 = arith.select %498, %29, %499 : vector<40x11xi1>, vector<40x11xf32>
    %cst_205 = arith.constant dense<0.000000e+00> : vector<40xf32>
    %501 = vector.multi_reduction <add>, %500, %cst_205 [1] : vector<40x11xf32> to vector<40xf32>
    %502 = vector.shape_cast %501 : vector<40xf32> to vector<40x1xf32>
    %503 = vector.broadcast %502 : vector<40x1xf32> to vector<40x16xf32>
    %504 = arith.mulf %503, %0 : vector<40x16xf32>
    %cst_206 = arith.constant dense<0.000000e+00> : vector<16x16xf32>
    %505 = tpu.matmul %2, %504, %cst_206 {dimension_numbers = #tpu.dot_dimension_numbers<[1], [0], [0], [1], [0, 0, 1, 1], [], []>} : vector<16x40xf32>, vector<40x16xf32>, vector<16x16xf32> -> vector<16x16xf32>
    %c9_i32_207 = arith.constant 9 : i32
    %506 = vector.broadcast %c9_i32_207 : i32 to vector<1x11xi32>
    %507 = arith.cmpi eq, %32, %506 : vector<1x11xi32>
    %cst_208 = arith.constant 0.000000e+00 : f32
    %508 = vector.shape_cast %507 : vector<1x11xi1> to vector<1x11xi1>
    %509 = vector.broadcast %508 : vector<1x11xi1> to vector<16x11xi1>
    %510 = vector.broadcast %cst_208 : f32 to vector<16x11xf32>
    %511 = arith.select %509, %31, %510 : vector<16x11xi1>, vector<16x11xf32>
    %cst_209 = arith.constant dense<0.000000e+00> : vector<16xf32>
    %512 = vector.multi_reduction <add>, %511, %cst_209 [1] : vector<16x11xf32> to vector<16xf32>
    %513 = vector.shape_cast %512 : vector<16xf32> to vector<16x1xf32>
    %514 = vector.broadcast %513 : vector<16x1xf32> to vector<16x16xf32>
    %515 = arith.mulf %3, %514 : vector<16x16xf32>
    %516 = arith.addf %505, %515 : vector<16x16xf32>
    %cst_210 = arith.constant dense<0.000000e+00> : vector<16x32xf32>
    %517 = tpu.matmul %516, %494, %cst_210 {dimension_numbers = #tpu.dot_dimension_numbers<[1], [0], [0], [1], [0, 0, 1, 1], [], []>} : vector<16x16xf32>, vector<16x32xf32>, vector<16x32xf32> -> vector<16x32xf32>
    %518 = vector.broadcast %493 : vector<1x32xf32> to vector<16x32xf32>
    %519 = arith.addf %517, %518 : vector<16x32xf32>
    %cst_211 = arith.constant dense<0.000000e+00> : vector<32xf32>
    %520 = vector.multi_reduction <add>, %519, %cst_211 [0] : vector<16x32xf32> to vector<32xf32>
    %521 = vector.shape_cast %520 : vector<32xf32> to vector<1x32xf32>
    %cst_212 = arith.constant 1.600000e+01 : f32
    %522 = vector.broadcast %cst_212 : f32 to vector<1x32xf32>
    %523 = arith.divf %521, %522 : vector<1x32xf32>
    %524 = vector.broadcast %523 : vector<1x32xf32> to vector<16x32xf32>
    %525 = arith.subf %519, %524 : vector<16x32xf32>
    %526 = arith.mulf %525, %525 : vector<16x32xf32>
    %cst_213 = arith.constant dense<0.000000e+00> : vector<32xf32>
    %527 = vector.multi_reduction <add>, %526, %cst_213 [0] : vector<16x32xf32> to vector<32xf32>
    %528 = vector.shape_cast %527 : vector<32xf32> to vector<1x32xf32>
    %cst_214 = arith.constant 1.600000e+01 : f32
    %529 = vector.broadcast %cst_214 : f32 to vector<1x32xf32>
    %530 = arith.divf %528, %529 : vector<1x32xf32>
    %531 = vector.broadcast %523 : vector<1x32xf32> to vector<16x32xf32>
    %532 = arith.subf %519, %531 : vector<16x32xf32>
    %cst_215 = arith.constant 9.99999974E-6 : f32
    %533 = vector.broadcast %cst_215 : f32 to vector<1x32xf32>
    %534 = arith.addf %530, %533 : vector<1x32xf32>
    %535 = math.rsqrt %534 : vector<1x32xf32>
    %536 = vector.broadcast %535 : vector<1x32xf32> to vector<16x32xf32>
    %537 = arith.mulf %532, %536 : vector<16x32xf32>
    %cst_216 = arith.constant 0.000000e+00 : f32
    %538 = vector.broadcast %cst_216 : f32 to vector<16x32xf32>
    %539 = arith.maximumf %537, %538 : vector<16x32xf32>
    %c9 = arith.constant 9 : index
    %c0_217 = arith.constant 0 : index
    %c0_218 = arith.constant 0 : index
    %540 = vector.load %arg13[%c9, %c0_217, %c0_218] : memref<10x32x32xf32, #tpu.memory_space<vmem>>, vector<1x32x32xf32>
    %541 = vector.shape_cast %540 : vector<1x32x32xf32> to vector<32x32xf32>
    %c9_219 = arith.constant 9 : index
    %c0_220 = arith.constant 0 : index
    %c0_221 = arith.constant 0 : index
    %542 = vector.load %arg14[%c9_219, %c0_220, %c0_221] : memref<10x1x32xf32, #tpu.memory_space<vmem>>, vector<1x1x32xf32>
    %543 = vector.shape_cast %542 : vector<1x1x32xf32> to vector<1x32xf32>
    %cst_222 = arith.constant dense<0.000000e+00> : vector<16x32xf32>
    %544 = tpu.matmul %539, %541, %cst_222 {dimension_numbers = #tpu.dot_dimension_numbers<[1], [0], [0], [1], [0, 0, 1, 1], [], []>} : vector<16x32xf32>, vector<32x32xf32>, vector<16x32xf32> -> vector<16x32xf32>
    %c10_i32 = arith.constant 10 : i32
    %545 = vector.broadcast %c10_i32 : i32 to vector<1x11xi32>
    %546 = arith.cmpi eq, %32, %545 : vector<1x11xi32>
    %cst_223 = arith.constant 0.000000e+00 : f32
    %547 = vector.shape_cast %546 : vector<1x11xi1> to vector<1x11xi1>
    %548 = vector.broadcast %547 : vector<1x11xi1> to vector<40x11xi1>
    %549 = vector.broadcast %cst_223 : f32 to vector<40x11xf32>
    %550 = arith.select %548, %29, %549 : vector<40x11xi1>, vector<40x11xf32>
    %cst_224 = arith.constant dense<0.000000e+00> : vector<40xf32>
    %551 = vector.multi_reduction <add>, %550, %cst_224 [1] : vector<40x11xf32> to vector<40xf32>
    %552 = vector.shape_cast %551 : vector<40xf32> to vector<40x1xf32>
    %553 = vector.broadcast %552 : vector<40x1xf32> to vector<40x16xf32>
    %554 = arith.mulf %553, %0 : vector<40x16xf32>
    %cst_225 = arith.constant dense<0.000000e+00> : vector<16x16xf32>
    %555 = tpu.matmul %2, %554, %cst_225 {dimension_numbers = #tpu.dot_dimension_numbers<[1], [0], [0], [1], [0, 0, 1, 1], [], []>} : vector<16x40xf32>, vector<40x16xf32>, vector<16x16xf32> -> vector<16x16xf32>
    %c10_i32_226 = arith.constant 10 : i32
    %556 = vector.broadcast %c10_i32_226 : i32 to vector<1x11xi32>
    %557 = arith.cmpi eq, %32, %556 : vector<1x11xi32>
    %cst_227 = arith.constant 0.000000e+00 : f32
    %558 = vector.shape_cast %557 : vector<1x11xi1> to vector<1x11xi1>
    %559 = vector.broadcast %558 : vector<1x11xi1> to vector<16x11xi1>
    %560 = vector.broadcast %cst_227 : f32 to vector<16x11xf32>
    %561 = arith.select %559, %31, %560 : vector<16x11xi1>, vector<16x11xf32>
    %cst_228 = arith.constant dense<0.000000e+00> : vector<16xf32>
    %562 = vector.multi_reduction <add>, %561, %cst_228 [1] : vector<16x11xf32> to vector<16xf32>
    %563 = vector.shape_cast %562 : vector<16xf32> to vector<16x1xf32>
    %564 = vector.broadcast %563 : vector<16x1xf32> to vector<16x16xf32>
    %565 = arith.mulf %3, %564 : vector<16x16xf32>
    %566 = arith.addf %555, %565 : vector<16x16xf32>
    %cst_229 = arith.constant dense<0.000000e+00> : vector<16x32xf32>
    %567 = tpu.matmul %566, %544, %cst_229 {dimension_numbers = #tpu.dot_dimension_numbers<[1], [0], [0], [1], [0, 0, 1, 1], [], []>} : vector<16x16xf32>, vector<16x32xf32>, vector<16x32xf32> -> vector<16x32xf32>
    %568 = vector.broadcast %543 : vector<1x32xf32> to vector<16x32xf32>
    %569 = arith.addf %567, %568 : vector<16x32xf32>
    %570 = arith.addf %569, %469 : vector<16x32xf32>
    %cst_230 = arith.constant 0.000000e+00 : f32
    %571 = vector.broadcast %cst_230 : f32 to vector<16x32xf32>
    %572 = arith.maximumf %570, %571 : vector<16x32xf32>
    %c0_231 = arith.constant 0 : index
    %c0_232 = arith.constant 0 : index
    %c0_233 = arith.constant 0 : index
    %573 = vector.load %arg6[%c0_231, %c0_232, %c0_233] : memref<2x16x32xf32, #tpu.memory_space<vmem>>, vector<2x16x32xf32>
    %cst_234 = arith.constant 5.000000e-01 : f32
    %574 = vector.broadcast %cst_234 : f32 to vector<2x16x32xf32>
    %575 = arith.cmpf ogt, %573, %574 : vector<2x16x32xf32>
    %576 = vector.shape_cast %572 : vector<16x32xf32> to vector<1x16x32xf32>
    %cst_235 = arith.constant -3.40282347E+38 : f32
    %577 = vector.shape_cast %576 : vector<1x16x32xf32> to vector<1x16x32xf32>
    %578 = vector.broadcast %577 : vector<1x16x32xf32> to vector<2x16x32xf32>
    %579 = vector.broadcast %cst_235 : f32 to vector<2x16x32xf32>
    %580 = arith.select %575, %578, %579 : vector<2x16x32xi1>, vector<2x16x32xf32>
    %cst_236 = arith.constant dense<0xFF800000> : vector<2x32xf32>
    %581 = vector.multi_reduction <maximumf>, %580, %cst_236 [1] : vector<2x16x32xf32> to vector<2x32xf32>
    %c0_237 = arith.constant 0 : index
    %c0_238 = arith.constant 0 : index
    %582 = vector.load %arg15[%c0_237, %c0_238] : memref<32x3xf32, #tpu.memory_space<vmem>>, vector<32x3xf32>
    %cst_239 = arith.constant dense<0.000000e+00> : vector<2x3xf32>
    %583 = tpu.matmul %581, %582, %cst_239 {dimension_numbers = #tpu.dot_dimension_numbers<[1], [0], [0], [1], [0, 0, 1, 1], [], []>} : vector<2x32xf32>, vector<32x3xf32>, vector<2x3xf32> -> vector<2x3xf32>
    %c0_240 = arith.constant 0 : index
    %c0_241 = arith.constant 0 : index
    %584 = vector.load %arg16[%c0_240, %c0_241] : memref<1x3xf32, #tpu.memory_space<vmem>>, vector<1x3xf32>
    %585 = vector.broadcast %584 : vector<1x3xf32> to vector<2x3xf32>
    %586 = arith.addf %583, %585 : vector<2x3xf32>
    %c0_242 = arith.constant 0 : index
    %c0_243 = arith.constant 0 : index
    %587 = vector.load %arg17[%c0_242, %c0_243] : memref<2x3xf32, #tpu.memory_space<vmem>>, vector<2x3xf32>
    tpu.vector_store %arg17[%c0_242, %c0_243], %586 {strides = array<i32>} : memref<2x3xf32, #tpu.memory_space<vmem>>, vector<2x3xf32>,
    return
  }
}

</mosaic_0001>

<llo_original>
// kernel: model_forward.1
$region0: #{model_forward.1}
  #allocation0 [shape = 'u32[]', space=smem, size = 0x4, offset = 0x4, fixed_abs, tag = 'smem constant byte address 0x4 - core index']
  #allocation1 [shape = 'u32[144,128]{1,0:T(1,128)}', space=vmem, size = 0x12000, scoped, tag = 'internal scratch']
  %s0 = inlined_call_operand.vmem [shape: f32[16,8], index: 0, kind: input, shape index: {}]
  %s1 = inlined_call_operand.vmem [shape: f32[40,6], index: 1, kind: input, shape index: {}]
  %s2 = inlined_call_operand.vmem [shape: f32[40,16], index: 2, kind: input, shape index: {}]
  %s3 = inlined_call_operand.vmem [shape: f32[40,16], index: 3, kind: input, shape index: {}]
  %s4 = inlined_call_operand.vmem [shape: f32[16,40], index: 4, kind: input, shape index: {}]
  %s5 = inlined_call_operand.vmem [shape: f32[16,16], index: 5, kind: input, shape index: {}]
  %s6 = inlined_call_operand.vmem [shape: f32[2,16,32], index: 6, kind: input, shape index: {}]
  %s7 = inlined_call_operand.vmem [shape: f32[6,66], index: 7, kind: input, shape index: {}]
  %s8 = inlined_call_operand.vmem [shape: f32[1,66], index: 8, kind: input, shape index: {}]
  %s9 = inlined_call_operand.vmem [shape: f32[66,11], index: 9, kind: input, shape index: {}]
  %s10 = inlined_call_operand.vmem [shape: f32[1,11], index: 10, kind: input, shape index: {}]
  %s11 = inlined_call_operand.vmem [shape: f32[8,32], index: 11, kind: input, shape index: {}]
  %s12 = inlined_call_operand.vmem [shape: f32[1,32], index: 12, kind: input, shape index: {}]
  %s13 = inlined_call_operand.vmem [shape: f32[10,32,32], index: 13, kind: input, shape index: {}]
  %s14 = inlined_call_operand.vmem [shape: f32[10,1,32], index: 14, kind: input, shape index: {}]
  %s15 = inlined_call_operand.vmem [shape: f32[32,3], index: 15, kind: input, shape index: {}]
  %s16 = inlined_call_operand.vmem [shape: f32[1,3], index: 16, kind: input, shape index: {}]
  %s17 = inlined_call_operand.hbm [shape: f32[2,3], index: 17, kind: output, shape index: {}]
  %s18 = sld [smem:[#allocation0]]
  $region78: #{model_forward.1} parent=0
    _
  %s20 = ssub.s32 1, %s18
  %s21 = scalar_select 0, %s20, %s18
  $region1: #{model_forward.1} parent=0
    #allocation2 [shape = 'u8[1024]{0}', space=vmem, size = 0x400, scoped, tag = 'output window, operand 0, single buffered']
    #allocation3 [shape = 's32[1]{0}', space=sflag, size = 0x4, scoped, tag = 'scoped memory for model_forward.1']
    %22 = vsyncpa [#allocation3], 0
    // Predicated region
    $region2: #{model_forward.1} parent=1 // pred_check
      _
    $region3: #{model_forward.1} parent=1 // pred_check_branch
      %24 = sbr.rel (0) target = $region5
    $region4: #{model_forward.1} parent=1 // pred_region
      _
    $region5: #{model_forward.1} parent=1 // pred_fallthru
      _
    // Predicated region
    $region6: #{model_forward.1} parent=1 // pred_check
      _
    $region7: #{model_forward.1} parent=1 // pred_check_branch
      %26 = sbr.rel (0) target = $region9
    $region8: #{model_forward.1} parent=1 // pred_region
      _
    $region9: #{model_forward.1} parent=1 // pred_fallthru
      _
    // Predicated region
    $region10: #{model_forward.1} parent=1 // pred_check
      _
    $region11: #{model_forward.1} parent=1 // pred_check_branch
      %28 = sbr.rel (0) target = $region13
    $region12: #{model_forward.1} parent=1 // pred_region
      _
    $region13: #{model_forward.1} parent=1 // pred_fallthru
      _
    // Predicated region
    $region14: #{model_forward.1} parent=1 // pred_check
      _
    $region15: #{model_forward.1} parent=1 // pred_check_branch
      %30 = sbr.rel (0) target = $region17
    $region16: #{model_forward.1} parent=1 // pred_region
      _
    $region17: #{model_forward.1} parent=1 // pred_fallthru
      _
    // Predicated region
    $region18: #{model_forward.1} parent=1 // pred_check
      _
    $region19: #{model_forward.1} parent=1 // pred_check_branch
      %32 = sbr.rel (0) target = $region21
    $region20: #{model_forward.1} parent=1 // pred_region
      _
    $region21: #{model_forward.1} parent=1 // pred_fallthru
      _
    // Predicated region
    $region22: #{model_forward.1} parent=1 // pred_check
      _
    $region23: #{model_forward.1} parent=1 // pred_check_branch
      %34 = sbr.rel (0) target = $region25
    $region24: #{model_forward.1} parent=1 // pred_region
      _
    $region25: #{model_forward.1} parent=1 // pred_fallthru
      _
    // Predicated region
    $region26: #{model_forward.1} parent=1 // pred_check
      _
    $region27: #{model_forward.1} parent=1 // pred_check_branch
      %36 = sbr.rel (0) target = $region29
    $region28: #{model_forward.1} parent=1 // pred_region
      _
    $region29: #{model_forward.1} parent=1 // pred_fallthru
      _
    // Predicated region
    $region30: #{model_forward.1} parent=1 // pred_check
      _
    $region31: #{model_forward.1} parent=1 // pred_check_branch
      %38 = sbr.rel (0) target = $region33
    $region32: #{model_forward.1} parent=1 // pred_region
      _
    $region33: #{model_forward.1} parent=1 // pred_fallthru
      _
    // Predicated region
    $region34: #{model_forward.1} parent=1 // pred_check
      _
    $region35: #{model_forward.1} parent=1 // pred_check_branch
      %40 = sbr.rel (0) target = $region37
    $region36: #{model_forward.1} parent=1 // pred_region
      _
    $region37: #{model_forward.1} parent=1 // pred_fallthru
      _
    // Predicated region
    $region38: #{model_forward.1} parent=1 // pred_check
      _
    $region39: #{model_forward.1} parent=1 // pred_check_branch
      %42 = sbr.rel (0) target = $region41
    $region40: #{model_forward.1} parent=1 // pred_region
      _
    $region41: #{model_forward.1} parent=1 // pred_fallthru
      _
    // Predicated region
    $region42: #{model_forward.1} parent=1 // pred_check
      _
    $region43: #{model_forward.1} parent=1 // pred_check_branch
      %44 = sbr.rel (0) target = $region45
    $region44: #{model_forward.1} parent=1 // pred_region
      _
    $region45: #{model_forward.1} parent=1 // pred_fallthru
      _
    // Predicated region
    $region46: #{model_forward.1} parent=1 // pred_check
      _
    $region47: #{model_forward.1} parent=1 // pred_check_branch
      %46 = sbr.rel (0) target = $region49
    $region48: #{model_forward.1} parent=1 // pred_region
      _
    $region49: #{model_forward.1} parent=1 // pred_fallthru
      _
    // Predicated region
    $region50: #{model_forward.1} parent=1 // pred_check
      _
    $region51: #{model_forward.1} parent=1 // pred_check_branch
      %48 = sbr.rel (0) target = $region53
    $region52: #{model_forward.1} parent=1 // pred_region
      _
    $region53: #{model_forward.1} parent=1 // pred_fallthru
      _
    // Predicated region
    $region54: #{model_forward.1} parent=1 // pred_check
      _
    $region55: #{model_forward.1} parent=1 // pred_check_branch
      %50 = sbr.rel (0) target = $region57
    $region56: #{model_forward.1} parent=1 // pred_region
      _
    $region57: #{model_forward.1} parent=1 // pred_fallthru
      _
    // Predicated region
    $region58: #{model_forward.1} parent=1 // pred_check
      _
    $region59: #{model_forward.1} parent=1 // pred_check_branch
      %52 = sbr.rel (0) target = $region61
    $region60: #{model_forward.1} parent=1 // pred_region
      _
    $region61: #{model_forward.1} parent=1 // pred_fallthru
      _
    // Predicated region
    $region62: #{model_forward.1} parent=1 // pred_check
      _
    $region63: #{model_forward.1} parent=1 // pred_check_branch
      %54 = sbr.rel (0) target = $region65
    $region64: #{model_forward.1} parent=1 // pred_region
      _
    $region65: #{model_forward.1} parent=1 // pred_fallthru
      _
    // Predicated region
    $region66: #{model_forward.1} parent=1 // pred_check
      _
    $region67: #{model_forward.1} parent=1 // pred_check_branch
      %56 = sbr.rel (0) target = $region69
    $region68: #{model_forward.1} parent=1 // pred_region
      _
    $region69: #{model_forward.1} parent=1 // pred_fallthru
      _
    %v57 = vld [vmem:[%s2] sm:$0xff]
    %v58 = vld [vmem:[%s2 + $0x8] sm:$0xff]
    %v59 = vld [vmem:[%s2 + $0x10] sm:$0xff]
    %v60 = vld [vmem:[%s2 + $0x18] sm:$0xff]
    %v61 = vld [vmem:[%s2 + $0x20] sm:$0xff]
    %v62 = vld [vmem:[%s3] sm:$0xff]
    %v63 = vld [vmem:[%s3 + $0x8] sm:$0xff]
    %v64 = vld [vmem:[%s3 + $0x10] sm:$0xff]
    %v65 = vld [vmem:[%s3 + $0x18] sm:$0xff]
    %v66 = vld [vmem:[%s3 + $0x20] sm:$0xff]
    %v67 = vld [vmem:[%s4] sm:$0xff]
    %v68 = vld [vmem:[%s4 + $0x8] sm:$0xff]
    %v69 = vld [vmem:[%s5] sm:$0xff]
    %v70 = vld [vmem:[%s5 + $0x8] sm:$0xff]
    %v71 = vld [vmem:[%s1] sm:$0xff]
    %v72 = vld [vmem:[%s1 + $0x8] sm:$0xff]
    %v73 = vld [vmem:[%s1 + $0x10] sm:$0xff]
    %v74 = vld [vmem:[%s1 + $0x18] sm:$0xff]
    %v75 = vld [vmem:[%s1 + $0x20] sm:$0xff]
    %v76 = vld [vmem:[%s7] sm:$0x3f]
    %v77 = vld [vmem:[%s8] sm:$0x1]
    %v79 = vlaneseq
    %v80 = vshrl.u32 %v79, 7
    %v81 = vsub.s32 0, %v80
    %v82 = vrot.slane %v77, %v81
    %vm84 = vcmask 48128
    %v86 = vsel %vm84, %v71, 0
    %v89 = vsel %vm84, %v72, 0
    %v92 = vsel %vm84, %v73, 0
    %v95 = vsel %vm84, %v74, 0
    %v98 = vsel %vm84, %v75, 0
    %vm100 = vcmask 1045504
    %v102 = vsel %vm100, %v76, 0
    %104 = vmatprep.subr.mxu0 0.0
    %105 = vmatpush1.msra.mxu0 0.0
    %106 = vmatprep.subr.mxu0 0.0
    %107 = vmatpush1.msra.mxu0 0.0
    %108 = vmatprep.subr.mxu0 0.0
    %109 = vmatpush1.msra.mxu0 0.0
    %110 = vmatprep.subr.mxu0 0.0
    %111 = vmatpush1.msra.mxu0 0.0
    %112 = vmatprep.subr.mxu0 0.0
    %113 = vmatpush1.msra.mxu0 0.0
    %114 = vmatprep.subr.mxu0 0.0
    %115 = vmatpush1.msra.mxu0 0.0
    %116 = vmatprep.subr.mxu0 0.0
    %117 = vmatpush1.msra.mxu0 0.0
    %118 = vmatprep.subr.mxu0 0.0
    %119 = vmatpush1.msra.mxu0 0.0
    %120 = vmatprep.subr.mxu0 0.0
    %121 = vmatpush1.msra.mxu0 0.0
    %122 = vmatprep.subr.mxu0 0.0
    %123 = vmatpush1.msra.mxu0 0.0
    %124 = vmatprep.subr.mxu0 0.0
    %125 = vmatpush1.msra.mxu0 0.0
    %126 = vmatprep.subr.mxu0 0.0
    %127 = vmatpush1.msra.mxu0 0.0
    %128 = vmatprep.subr.mxu0 0.0
    %129 = vmatpush1.msra.mxu0 0.0
    %130 = vmatprep.subr.mxu0 0.0
    %131 = vmatpush1.msra.mxu0 0.0
    %132 = vmatprep.subr.mxu0 0.0
    %133 = vmatpush1.msra.mxu0 0.0
    %134 = vmatprep.subr.mxu0 0.0
    %135 = vmatpush1.msra.mxu0 %v102
    %136 = vmatprep.subr.mxu0 0.0
    %137 = vmatpush2.msra.mxu0 0.0
    %138 = vmatprep.subr.mxu0 0.0
    %139 = vmatpush2.msra.mxu0 0.0
    %140 = vmatprep.subr.mxu0 0.0
    %141 = vmatpush2.msra.mxu0 0.0
    %142 = vmatprep.subr.mxu0 0.0
    %143 = vmatpush2.msra.mxu0 0.0
    %144 = vmatprep.subr.mxu0 0.0
    %145 = vmatpush2.msra.mxu0 0.0
    %146 = vmatprep.subr.mxu0 0.0
    %147 = vmatpush2.msra.mxu0 0.0
    %148 = vmatprep.subr.mxu0 0.0
    %149 = vmatpush2.msra.mxu0 0.0
    %150 = vmatprep.subr.mxu0 0.0
    %151 = vmatpush2.msra.mxu0 0.0
    %152 = vmatprep.subr.mxu0 0.0
    %153 = vmatpush2.msra.mxu0 0.0
    %154 = vmatprep.subr.mxu0 0.0
    %155 = vmatpush2.msra.mxu0 0.0
    %156 = vmatprep.subr.mxu0 0.0
    %157 = vmatpush2.msra.mxu0 0.0
    %158 = vmatprep.subr.mxu0 0.0
    %159 = vmatpush2.msra.mxu0 0.0
    %160 = vmatprep.subr.mxu0 0.0
    %161 = vmatpush2.msra.mxu0 0.0
    %162 = vmatprep.subr.mxu0 0.0
    %163 = vmatpush2.msra.mxu0 0.0
    %164 = vmatprep.subr.mxu0 0.0
    %165 = vmatpush2.msra.mxu0 0.0
    %166 = vmatprep.subr.mxu0 0.0
    %167 = vmatpush2.msra.mxu0 0.0
    %168 = vmatprep.mubr.f32.mxu0 0.0
    %169 = vmatmul.mubr.f32.gmra.mxu0 %v86
    %v170 = vpop.f32.mrf.mxu0
    %v171 = vadd.f32 %v82, %v170
    %v172 = vpop.f32.mrf.mxu0
    %173 = vmatprep.mubr.f32.mxu0 0.0
    %174 = vmatmul.mubr.f32.gmra.mxu0 %v89
    %v175 = vpop.f32.mrf.mxu0
    %v176 = vadd.f32 %v82, %v175
    %v177 = vpop.f32.mrf.mxu0
    %178 = vmatprep.mubr.f32.mxu0 0.0
    %179 = vmatmul.mubr.f32.gmra.mxu0 %v92
    %v180 = vpop.f32.mrf.mxu0
    %v181 = vadd.f32 %v82, %v180
    %v182 = vpop.f32.mrf.mxu0
    %183 = vmatprep.mubr.f32.mxu0 0.0
    %184 = vmatmul.mubr.f32.gmra.mxu0 %v95
    %v185 = vpop.f32.mrf.mxu0
    %v186 = vadd.f32 %v82, %v185
    %v187 = vpop.f32.mrf.mxu0
    %188 = vmatprep.mubr.f32.mxu0 0.0
    %189 = vmatmul.mubr.f32.gmra.mxu0 %v98
    %v190 = vpop.f32.mrf.mxu0
    %v191 = vadd.f32 %v82, %v190
    %v192 = vpop.f32.mrf.mxu0
    %193 = vdwg.mxu0
    %v194 = vmax.f32 %v171, 0.0
    %v195 = vmax.f32 %v176, 0.0
    %v196 = vmax.f32 %v181, 0.0
    %v197 = vmax.f32 %v186, 0.0
    %v198 = vmax.f32 %v191, 0.0
    %v199 = vld [vmem:[%s9] sm:$0xff]
    %v200 = vld [vmem:[%s9 + $0x8] sm:$0xff]
    %v201 = vld [vmem:[%s9 + $0x10] sm:$0xff]
    %v202 = vld [vmem:[%s9 + $0x18] sm:$0xff]
    %v203 = vld [vmem:[%s9 + $0x20] sm:$0xff]
    %v204 = vld [vmem:[%s9 + $0x28] sm:$0xff]
    %v205 = vld [vmem:[%s9 + $0x30] sm:$0xff]
    %v206 = vld [vmem:[%s9 + $0x38] sm:$0xff]
    %v207 = vld [vmem:[%s9 + $0x40] sm:$0x3]
    %v208 = vld [vmem:[%s10] sm:$0x1]
    %v210 = vlaneseq
    %v211 = vshrl.u32 %v210, 7
    %v212 = vsub.s32 0, %v211
    %v213 = vrot.slane %v208, %v212
    %vm215 = vcmask 539648
    %v217 = vsel %vm215, %v194, 0
    %v220 = vsel %vm215, %v195, 0
    %v223 = vsel %vm215, %v196, 0
    %v226 = vsel %vm215, %v197, 0
    %v229 = vsel %vm215, %v198, 0
    %vm231 = vcmask 1041408
    %v233 = vsel %vm231, %v207, 0
    %235 = vmatprep.subr.mxu0 0.0
    %236 = vmatpush1.msra.mxu0 0.0
    %237 = vmatprep.subr.mxu0 0.0
    %238 = vmatpush1.msra.mxu0 0.0
    %239 = vmatprep.subr.mxu0 0.0
    %240 = vmatpush1.msra.mxu0 0.0
    %241 = vmatprep.subr.mxu0 0.0
    %242 = vmatpush1.msra.mxu0 0.0
    %243 = vmatprep.subr.mxu0 0.0
    %244 = vmatpush1.msra.mxu0 0.0
    %245 = vmatprep.subr.mxu0 0.0
    %246 = vmatpush1.msra.mxu0 0.0
    %247 = vmatprep.subr.mxu0 0.0
    %248 = vmatpush1.msra.mxu0 0.0
    %249 = vmatprep.subr.mxu0 0.0
    %250 = vmatpush1.msra.mxu0 %v233
    %251 = vmatprep.subr.mxu0 0.0
    %252 = vmatpush1.msra.mxu0 %v206
    %253 = vmatprep.subr.mxu0 0.0
    %254 = vmatpush1.msra.mxu0 %v205
    %255 = vmatprep.subr.mxu0 0.0
    %256 = vmatpush1.msra.mxu0 %v204
    %257 = vmatprep.subr.mxu0 0.0
    %258 = vmatpush1.msra.mxu0 %v203
    %259 = vmatprep.subr.mxu0 0.0
    %260 = vmatpush1.msra.mxu0 %v202
    %261 = vmatprep.subr.mxu0 0.0
    %262 = vmatpush1.msra.mxu0 %v201
    %263 = vmatprep.subr.mxu0 0.0
    %264 = vmatpush1.msra.mxu0 %v200
    %265 = vmatprep.subr.mxu0 0.0
    %266 = vmatpush1.msra.mxu0 %v199
    %267 = vmatprep.subr.mxu0 0.0
    %268 = vmatpush2.msra.mxu0 0.0
    %269 = vmatprep.subr.mxu0 0.0
    %270 = vmatpush2.msra.mxu0 0.0
    %271 = vmatprep.subr.mxu0 0.0
    %272 = vmatpush2.msra.mxu0 0.0
    %273 = vmatprep.subr.mxu0 0.0
    %274 = vmatpush2.msra.mxu0 0.0
    %275 = vmatprep.subr.mxu0 0.0
    %276 = vmatpush2.msra.mxu0 0.0
    %277 = vmatprep.subr.mxu0 0.0
    %278 = vmatpush2.msra.mxu0 0.0
    %279 = vmatprep.subr.mxu0 0.0
    %280 = vmatpush2.msra.mxu0 0.0
    %281 = vmatprep.subr.mxu0 0.0
    %282 = vmatpush2.msra.mxu0 0.0
    %283 = vmatprep.subr.mxu0 0.0
    %284 = vmatpush2.msra.mxu0 0.0
    %285 = vmatprep.subr.mxu0 0.0
    %286 = vmatpush2.msra.mxu0 0.0
    %287 = vmatprep.subr.mxu0 0.0
    %288 = vmatpush2.msra.mxu0 0.0
    %289 = vmatprep.subr.mxu0 0.0
    %290 = vmatpush2.msra.mxu0 0.0
    %291 = vmatprep.subr.mxu0 0.0
    %292 = vmatpush2.msra.mxu0 0.0
    %293 = vmatprep.subr.mxu0 0.0
    %294 = vmatpush2.msra.mxu0 0.0
    %295 = vmatprep.subr.mxu0 0.0
    %296 = vmatpush2.msra.mxu0 0.0
    %297 = vmatprep.subr.mxu0 0.0
    %298 = vmatpush2.msra.mxu0 0.0
    %299 = vmatprep.mubr.f32.mxu0 0.0
    %300 = vmatmul.mubr.f32.gmra.mxu0 %v217
    %v301 = vpop.f32.mrf.mxu0
    %v302 = vadd.f32 %v213, %v301
    %v303 = vpop.f32.mrf.mxu0
    %304 = vmatprep.mubr.f32.mxu0 0.0
    %305 = vmatmul.mubr.f32.gmra.mxu0 %v220
    %v306 = vpop.f32.mrf.mxu0
    %v307 = vadd.f32 %v213, %v306
    %v308 = vpop.f32.mrf.mxu0
    %309 = vmatprep.mubr.f32.mxu0 0.0
    %310 = vmatmul.mubr.f32.gmra.mxu0 %v223
    %v311 = vpop.f32.mrf.mxu0
    %v312 = vadd.f32 %v213, %v311
    %v313 = vpop.f32.mrf.mxu0
    %314 = vmatprep.mubr.f32.mxu0 0.0
    %315 = vmatmul.mubr.f32.gmra.mxu0 %v226
    %v316 = vpop.f32.mrf.mxu0
    %v317 = vadd.f32 %v213, %v316
    %v318 = vpop.f32.mrf.mxu0
    %319 = vmatprep.mubr.f32.mxu0 0.0
    %320 = vmatmul.mubr.f32.gmra.mxu0 %v229
    %v321 = vpop.f32.mrf.mxu0
    %v322 = vadd.f32 %v213, %v321
    %v323 = vpop.f32.mrf.mxu0
    %324 = vdwg.mxu0
    %v325 = vxor.u32 %v302, 2147483648
    %v326 = vxor.u32 %v307, 2147483648
    %v327 = vxor.u32 %v312, 2147483648
    %v328 = vxor.u32 %v317, 2147483648
    %v329 = vxor.u32 %v322, 2147483648
    %v330 = vmul.f32 %v325, 1.442695
    %v331 = vpow.pop %v330
    %v332 = vmul.f32 %v326, 1.442695
    %v333 = vpow.pop %v332
    %v334 = vmul.f32 %v327, 1.442695
    %v335 = vpow.pop %v334
    %v336 = vmul.f32 %v328, 1.442695
    %v337 = vpow.pop %v336
    %v338 = vmul.f32 %v329, 1.442695
    %v339 = vpow.pop %v338
    %v340 = vadd.f32 %v331, 1.0
    %v341 = vadd.f32 %v333, 1.0
    %v342 = vadd.f32 %v335, 1.0
    %v343 = vadd.f32 %v337, 1.0
    %v344 = vadd.f32 %v339, 1.0
    %v345 = vrcp.pop %v340
    %v346 = vmul.f32 1.0, %v345
    %v347 = vrcp.pop %v341
    %v348 = vmul.f32 1.0, %v347
    %v349 = vrcp.pop %v342
    %v350 = vmul.f32 1.0, %v349
    %v351 = vrcp.pop %v343
    %v352 = vmul.f32 1.0, %v351
    %v353 = vrcp.pop %v344
    %v354 = vmul.f32 1.0, %v353
    %vm355 = vcmask 326656
    %v357 = vsel %vm355, %v67, 0
    %v360 = vsel %vm355, %v68, 0
    %362 = vmatprep.subr.mxu0 0.0
    %363 = vmatpush1.msra.mxu0 0.0
    %364 = vmatprep.subr.mxu0 0.0
    %365 = vmatpush1.msra.mxu0 0.0
    %366 = vmatprep.subr.mxu0 0.0
    %367 = vmatpush1.msra.mxu0 0.0
    %368 = vmatprep.subr.mxu0 0.0
    %369 = vmatpush1.msra.mxu0 0.0
    %370 = vmatprep.subr.mxu0 0.0
    %371 = vmatpush1.msra.mxu0 0.0
    %372 = vmatprep.subr.mxu0 0.0
    %373 = vmatpush1.msra.mxu0 0.0
    %374 = vmatprep.subr.mxu0 0.0
    %375 = vmatpush1.msra.mxu0 0.0
    %376 = vmatprep.subr.mxu0 0.0
    %377 = vmatpush1.msra.mxu0 0.0
    %378 = vmatprep.subr.mxu0 0.0
    %379 = vmatpush1.msra.mxu0 0.0
    %380 = vmatprep.subr.mxu0 0.0
    %381 = vmatpush1.msra.mxu0 0.0
    %382 = vmatprep.subr.mxu0 0.0
    %383 = vmatpush1.msra.mxu0 0.0
    %384 = vmatprep.subr.mxu0 0.0
    %385 = vmatpush1.msra.mxu0 %v354
    %386 = vmatprep.subr.mxu0 0.0
    %387 = vmatpush1.msra.mxu0 %v352
    %388 = vmatprep.subr.mxu0 0.0
    %389 = vmatpush1.msra.mxu0 %v350
    %390 = vmatprep.subr.mxu0 0.0
    %391 = vmatpush1.msra.mxu0 %v348
    %392 = vmatprep.subr.mxu0 0.0
    %393 = vmatpush1.msra.mxu0 %v346
    %394 = vmatprep.subr.mxu0 0.0
    %395 = vmatpush2.msra.mxu0 0.0
    %396 = vmatprep.subr.mxu0 0.0
    %397 = vmatpush2.msra.mxu0 0.0
    %398 = vmatprep.subr.mxu0 0.0
    %399 = vmatpush2.msra.mxu0 0.0
    %400 = vmatprep.subr.mxu0 0.0
    %401 = vmatpush2.msra.mxu0 0.0
    %402 = vmatprep.subr.mxu0 0.0
    %403 = vmatpush2.msra.mxu0 0.0
    %404 = vmatprep.subr.mxu0 0.0
    %405 = vmatpush2.msra.mxu0 0.0
    %406 = vmatprep.subr.mxu0 0.0
    %407 = vmatpush2.msra.mxu0 0.0
    %408 = vmatprep.subr.mxu0 0.0
    %409 = vmatpush2.msra.mxu0 0.0
    %410 = vmatprep.subr.mxu0 0.0
    %411 = vmatpush2.msra.mxu0 0.0
    %412 = vmatprep.subr.mxu0 0.0
    %413 = vmatpush2.msra.mxu0 0.0
    %414 = vmatprep.subr.mxu0 0.0
    %415 = vmatpush2.msra.mxu0 0.0
    %416 = vmatprep.subr.mxu0 0.0
    %417 = vmatpush2.msra.mxu0 0.0
    %418 = vmatprep.subr.mxu0 0.0
    %419 = vmatpush2.msra.mxu0 0.0
    %420 = vmatprep.subr.mxu0 0.0
    %421 = vmatpush2.msra.mxu0 0.0
    %422 = vmatprep.subr.mxu0 0.0
    %423 = vmatpush2.msra.mxu0 0.0
    %424 = vmatprep.subr.mxu0 0.0
    %425 = vmatpush2.msra.mxu0 0.0
    %426 = vmatprep.mubr.f32.mxu0 0.0
    %427 = vmatmul.mubr.f32.gmra.mxu0 %v357
    %v428 = vpop.f32.mrf.mxu0
    %v429 = vadd.f32 1.0, %v428
    %v430 = vpop.f32.mrf.mxu0
    %431 = vmatprep.mubr.f32.mxu0 0.0
    %432 = vmatmul.mubr.f32.gmra.mxu0 %v360
    %v433 = vpop.f32.mrf.mxu0
    %v434 = vadd.f32 1.0, %v433
    %v435 = vpop.f32.mrf.mxu0
    %436 = vdwg.mxu0
    %v437 = vrsqrt.pop %v429
    %v438 = vrsqrt.pop %v434
    %vm439 = vcmask 130048
    %v441 = vsel %vm439, %v57, 0
    %v444 = vsel %vm439, %v58, 0
    %v447 = vsel %vm439, %v59, 0
    %v450 = vsel %vm439, %v60, 0
    %v453 = vsel %vm439, %v61, 0
    %455 = vmatprep.subr.mxu0 0.0
    %456 = vmatpush1.msra.mxu0 0.0
    %457 = vmatprep.subr.mxu0 0.0
    %458 = vmatpush1.msra.mxu0 0.0
    %459 = vmatprep.subr.mxu0 0.0
    %460 = vmatpush1.msra.mxu0 0.0
    %461 = vmatprep.subr.mxu0 0.0
    %462 = vmatpush1.msra.mxu0 0.0
    %463 = vmatprep.subr.mxu0 0.0
    %464 = vmatpush1.msra.mxu0 0.0
    %465 = vmatprep.subr.mxu0 0.0
    %466 = vmatpush1.msra.mxu0 0.0
    %467 = vmatprep.subr.mxu0 0.0
    %468 = vmatpush1.msra.mxu0 0.0
    %469 = vmatprep.subr.mxu0 0.0
    %470 = vmatpush1.msra.mxu0 0.0
    %471 = vmatprep.subr.mxu0 0.0
    %472 = vmatpush1.msra.mxu0 0.0
    %473 = vmatprep.subr.mxu0 0.0
    %474 = vmatpush1.msra.mxu0 0.0
    %475 = vmatprep.subr.mxu0 0.0
    %476 = vmatpush1.msra.mxu0 0.0
    %477 = vmatprep.subr.mxu0 0.0
    %478 = vmatpush1.msra.mxu0 0.0
    %479 = vmatprep.subr.mxu0 0.0
    %480 = vmatpush1.msra.mxu0 0.0
    %481 = vmatprep.subr.mxu0 0.0
    %482 = vmatpush1.msra.mxu0 0.0
    %483 = vmatprep.subr.mxu0 0.0
    %484 = vmatpush1.msra.mxu0 %v438
    %485 = vmatprep.subr.mxu0 0.0
    %486 = vmatpush1.msra.mxu0 %v437
    %487 = vmatprep.subr.mxu0 0.0
    %488 = vmatpush2.msra.mxu0 0.0
    %489 = vmatprep.subr.mxu0 0.0
    %490 = vmatpush2.msra.mxu0 0.0
    %491 = vmatprep.subr.mxu0 0.0
    %492 = vmatpush2.msra.mxu0 0.0
    %493 = vmatprep.subr.mxu0 0.0
    %494 = vmatpush2.msra.mxu0 0.0
    %495 = vmatprep.subr.mxu0 0.0
    %496 = vmatpush2.msra.mxu0 0.0
    %497 = vmatprep.subr.mxu0 0.0
    %498 = vmatpush2.msra.mxu0 0.0
    %499 = vmatprep.subr.mxu0 0.0
    %500 = vmatpush2.msra.mxu0 0.0
    %501 = vmatprep.subr.mxu0 0.0
    %502 = vmatpush2.msra.mxu0 0.0
    %503 = vmatprep.subr.mxu0 0.0
    %504 = vmatpush2.msra.mxu0 0.0
    %505 = vmatprep.subr.mxu0 0.0
    %506 = vmatpush2.msra.mxu0 0.0
    %507 = vmatprep.subr.mxu0 0.0
    %508 = vmatpush2.msra.mxu0 0.0
    %509 = vmatprep.subr.mxu0 0.0
    %510 = vmatpush2.msra.mxu0 0.0
    %511 = vmatprep.subr.mxu0 0.0
    %512 = vmatpush2.msra.mxu0 0.0
    %513 = vmatprep.subr.mxu0 0.0
    %514 = vmatpush2.msra.mxu0 0.0
    %515 = vmatprep.subr.mxu0 0.0
    %516 = vmatpush2.msra.mxu0 0.0
    %517 = vmatprep.subr.mxu0 0.0
    %518 = vmatpush2.msra.mxu0 0.0
    %519 = vmatprep.mubr.f32.mxu0 0.0
    %520 = vmatmul.mubr.f32.gmra.mxu0 %v441
    %v521 = vpop.f32.mrf.mxu0
    %v522 = vadd.f32 0.0, %v521
    %v523 = vpop.f32.mrf.mxu0
    %524 = vmatprep.mubr.f32.mxu0 0.0
    %525 = vmatmul.mubr.f32.gmra.mxu0 %v444
    %v526 = vpop.f32.mrf.mxu0
    %v527 = vadd.f32 0.0, %v526
    %v528 = vpop.f32.mrf.mxu0
    %529 = vmatprep.mubr.f32.mxu0 0.0
    %530 = vmatmul.mubr.f32.gmra.mxu0 %v447
    %v531 = vpop.f32.mrf.mxu0
    %v532 = vadd.f32 0.0, %v531
    %v533 = vpop.f32.mrf.mxu0
    %534 = vmatprep.mubr.f32.mxu0 0.0
    %535 = vmatmul.mubr.f32.gmra.mxu0 %v450
    %v536 = vpop.f32.mrf.mxu0
    %v537 = vadd.f32 0.0, %v536
    %v538 = vpop.f32.mrf.mxu0
    %539 = vmatprep.mubr.f32.mxu0 0.0
    %540 = vmatmul.mubr.f32.gmra.mxu0 %v453
    %v541 = vpop.f32.mrf.mxu0
    %v542 = vadd.f32 0.0, %v541
    %v543 = vpop.f32.mrf.mxu0
    %544 = vdwg.mxu0
    %v545 = vmul.f32 %v522, %v346
    %v546 = vmul.f32 %v527, %v348
    %v547 = vmul.f32 %v532, %v350
    %v548 = vmul.f32 %v537, %v352
    %v549 = vmul.f32 %v542, %v354
    %v551 = vsel %vm439, %v62, 0
    %v554 = vsel %vm439, %v63, 0
    %v557 = vsel %vm439, %v64, 0
    %v560 = vsel %vm439, %v65, 0
    %v563 = vsel %vm439, %v66, 0
    %565 = vmatprep.subr.mxu0 0.0
    %566 = vmatpush1.msra.mxu0 0.0
    %567 = vmatprep.subr.mxu0 0.0
    %568 = vmatpush1.msra.mxu0 0.0
    %569 = vmatprep.subr.mxu0 0.0
    %570 = vmatpush1.msra.mxu0 0.0
    %571 = vmatprep.subr.mxu0 0.0
    %572 = vmatpush1.msra.mxu0 0.0
    %573 = vmatprep.subr.mxu0 0.0
    %574 = vmatpush1.msra.mxu0 0.0
    %575 = vmatprep.subr.mxu0 0.0
    %576 = vmatpush1.msra.mxu0 0.0
    %577 = vmatprep.subr.mxu0 0.0
    %578 = vmatpush1.msra.mxu0 0.0
    %579 = vmatprep.subr.mxu0 0.0
    %580 = vmatpush1.msra.mxu0 0.0
    %581 = vmatprep.subr.mxu0 0.0
    %582 = vmatpush1.msra.mxu0 0.0
    %583 = vmatprep.subr.mxu0 0.0
    %584 = vmatpush1.msra.mxu0 0.0
    %585 = vmatprep.subr.mxu0 0.0
    %586 = vmatpush1.msra.mxu0 0.0
    %587 = vmatprep.subr.mxu0 0.0
    %588 = vmatpush1.msra.mxu0 0.0
    %589 = vmatprep.subr.mxu0 0.0
    %590 = vmatpush1.msra.mxu0 0.0
    %591 = vmatprep.subr.mxu0 0.0
    %592 = vmatpush1.msra.mxu0 0.0
    %593 = vmatprep.subr.mxu0 0.0
    %594 = vmatpush1.msra.mxu0 %v438
    %595 = vmatprep.subr.mxu0 0.0
    %596 = vmatpush1.msra.mxu0 %v437
    %597 = vmatprep.subr.mxu0 0.0
    %598 = vmatpush2.msra.mxu0 0.0
    %599 = vmatprep.subr.mxu0 0.0
    %600 = vmatpush2.msra.mxu0 0.0
    %601 = vmatprep.subr.mxu0 0.0
    %602 = vmatpush2.msra.mxu0 0.0
    %603 = vmatprep.subr.mxu0 0.0
    %604 = vmatpush2.msra.mxu0 0.0
    %605 = vmatprep.subr.mxu0 0.0
    %606 = vmatpush2.msra.mxu0 0.0
    %607 = vmatprep.subr.mxu0 0.0
    %608 = vmatpush2.msra.mxu0 0.0
    %609 = vmatprep.subr.mxu0 0.0
    %610 = vmatpush2.msra.mxu0 0.0
    %611 = vmatprep.subr.mxu0 0.0
    %612 = vmatpush2.msra.mxu0 0.0
    %613 = vmatprep.subr.mxu0 0.0
    %614 = vmatpush2.msra.mxu0 0.0
    %615 = vmatprep.subr.mxu0 0.0
    %616 = vmatpush2.msra.mxu0 0.0
    %617 = vmatprep.subr.mxu0 0.0
    %618 = vmatpush2.msra.mxu0 0.0
    %619 = vmatprep.subr.mxu0 0.0
    %620 = vmatpush2.msra.mxu0 0.0
    %621 = vmatprep.subr.mxu0 0.0
    %622 = vmatpush2.msra.mxu0 0.0
    %623 = vmatprep.subr.mxu0 0.0
    %624 = vmatpush2.msra.mxu0 0.0
    %625 = vmatprep.subr.mxu0 0.0
    %626 = vmatpush2.msra.mxu0 0.0
    %627 = vmatprep.subr.mxu0 0.0
    %628 = vmatpush2.msra.mxu0 0.0
    %629 = vmatprep.mubr.f32.mxu0 0.0
    %630 = vmatmul.mubr.f32.gmra.mxu0 %v551
    %v631 = vpop.f32.mrf.mxu0
    %v632 = vadd.f32 0.0, %v631
    %v633 = vpop.f32.mrf.mxu0
    %634 = vmatprep.mubr.f32.mxu0 0.0
    %635 = vmatmul.mubr.f32.gmra.mxu0 %v554
    %v636 = vpop.f32.mrf.mxu0
    %v637 = vadd.f32 0.0, %v636
    %v638 = vpop.f32.mrf.mxu0
    %639 = vmatprep.mubr.f32.mxu0 0.0
    %640 = vmatmul.mubr.f32.gmra.mxu0 %v557
    %v641 = vpop.f32.mrf.mxu0
    %v642 = vadd.f32 0.0, %v641
    %v643 = vpop.f32.mrf.mxu0
    %644 = vmatprep.mubr.f32.mxu0 0.0
    %645 = vmatmul.mubr.f32.gmra.mxu0 %v560
    %v646 = vpop.f32.mrf.mxu0
    %v647 = vadd.f32 0.0, %v646
    %v648 = vpop.f32.mrf.mxu0
    %649 = vmatprep.mubr.f32.mxu0 0.0
    %650 = vmatmul.mubr.f32.gmra.mxu0 %v563
    %v651 = vpop.f32.mrf.mxu0
    %v652 = vadd.f32 0.0, %v651
    %v653 = vpop.f32.mrf.mxu0
    %654 = vdwg.mxu0
    %v655 = vmul.f32 %v545, %v632
    %v656 = vmul.f32 %v546, %v637
    %v657 = vmul.f32 %v547, %v642
    %v658 = vmul.f32 %v548, %v647
    %v659 = vmul.f32 %v549, %v652
    %v660 = vrcp.pop %v429
    %v661 = vmul.f32 1.0, %v660
    %v662 = vrcp.pop %v434
    %v663 = vmul.f32 1.0, %v662
    %v664 = vlaneseq
    %v665 = vand.u32 %v664, 127
    %v666 = vld [vmem:[%s0] sm:$0xff]
    %v667 = vld [vmem:[%s0 + $0x8] sm:$0xff]
    %v668 = vld [vmem:[%s11] sm:$0xff]
    %v669 = vld [vmem:[%s12] sm:$0x1]
    %vm670 = vcmask 64512
    %v672 = vsel %vm670, %v666, 0
    %v675 = vsel %vm670, %v667, 0
    %677 = vmatprep.subr.mxu0 0.0
    %678 = vmatpush1.msra.mxu0 0.0
    %679 = vmatprep.subr.mxu0 0.0
    %680 = vmatpush1.msra.mxu0 0.0
    %681 = vmatprep.subr.mxu0 0.0
    %682 = vmatpush1.msra.mxu0 0.0
    %683 = vmatprep.subr.mxu0 0.0
    %684 = vmatpush1.msra.mxu0 0.0
    %685 = vmatprep.subr.mxu0 0.0
    %686 = vmatpush1.msra.mxu0 0.0
    %687 = vmatprep.subr.mxu0 0.0
    %688 = vmatpush1.msra.mxu0 0.0
    %689 = vmatprep.subr.mxu0 0.0
    %690 = vmatpush1.msra.mxu0 0.0
    %691 = vmatprep.subr.mxu0 0.0
    %692 = vmatpush1.msra.mxu0 0.0
    %693 = vmatprep.subr.mxu0 0.0
    %694 = vmatpush1.msra.mxu0 0.0
    %695 = vmatprep.subr.mxu0 0.0
    %696 = vmatpush1.msra.mxu0 0.0
    %697 = vmatprep.subr.mxu0 0.0
    %698 = vmatpush1.msra.mxu0 0.0
    %699 = vmatprep.subr.mxu0 0.0
    %700 = vmatpush1.msra.mxu0 0.0
    %701 = vmatprep.subr.mxu0 0.0
    %702 = vmatpush1.msra.mxu0 0.0
    %703 = vmatprep.subr.mxu0 0.0
    %704 = vmatpush1.msra.mxu0 0.0
    %705 = vmatprep.subr.mxu0 0.0
    %706 = vmatpush1.msra.mxu0 0.0
    %707 = vmatprep.subr.mxu0 0.0
    %708 = vmatpush1.msra.mxu0 %v668
    %709 = vmatprep.subr.mxu0 0.0
    %710 = vmatpush2.msra.mxu0 0.0
    %711 = vmatprep.subr.mxu0 0.0
    %712 = vmatpush2.msra.mxu0 0.0
    %713 = vmatprep.subr.mxu0 0.0
    %714 = vmatpush2.msra.mxu0 0.0
    %715 = vmatprep.subr.mxu0 0.0
    %716 = vmatpush2.msra.mxu0 0.0
    %717 = vmatprep.subr.mxu0 0.0
    %718 = vmatpush2.msra.mxu0 0.0
    %719 = vmatprep.subr.mxu0 0.0
    %720 = vmatpush2.msra.mxu0 0.0
    %721 = vmatprep.subr.mxu0 0.0
    %722 = vmatpush2.msra.mxu0 0.0
    %723 = vmatprep.subr.mxu0 0.0
    %724 = vmatpush2.msra.mxu0 0.0
    %725 = vmatprep.subr.mxu0 0.0
    %726 = vmatpush2.msra.mxu0 0.0
    %727 = vmatprep.subr.mxu0 0.0
    %728 = vmatpush2.msra.mxu0 0.0
    %729 = vmatprep.subr.mxu0 0.0
    %730 = vmatpush2.msra.mxu0 0.0
    %731 = vmatprep.subr.mxu0 0.0
    %732 = vmatpush2.msra.mxu0 0.0
    %733 = vmatprep.subr.mxu0 0.0
    %734 = vmatpush2.msra.mxu0 0.0
    %735 = vmatprep.subr.mxu0 0.0
    %736 = vmatpush2.msra.mxu0 0.0
    %737 = vmatprep.subr.mxu0 0.0
    %738 = vmatpush2.msra.mxu0 0.0
    %739 = vmatprep.subr.mxu0 0.0
    %740 = vmatpush2.msra.mxu0 0.0
    %741 = vmatprep.mubr.f32.mxu0 0.0
    %742 = vmatmul.mubr.f32.gmra.mxu0 %v672
    %v743 = vpop.f32.mrf.mxu0
    %v744 = vadd.f32 0.0, %v743
    %v745 = vpop.f32.mrf.mxu0
    %746 = vmatprep.mubr.f32.mxu0 0.0
    %747 = vmatmul.mubr.f32.gmra.mxu0 %v675
    %v748 = vpop.f32.mrf.mxu0
    %v749 = vadd.f32 0.0, %v748
    %v750 = vpop.f32.mrf.mxu0
    %751 = vdwg.mxu0
    %vm752 = vcmp.eq.s32.totalorder %v665, 0
    %v753 = vsel %vm752, 1, 0
    %vm754 = vcmp.eq.s32.totalorder %v753, 1
    %v755 = vsel %vm754, %v655, 0.0
    %v756 = vsel %vm754, %v656, 0.0
    %v757 = vsel %vm754, %v657, 0.0
    %v758 = vsel %vm754, %v658, 0.0
    %v759 = vsel %vm754, %v659, 0.0
    %vm760 = vcmask 89088
    %v761 = vsel %vm760, %v755, 0.0
    %762 = vadd.xlane.f32.xlu0 %v761
    %v763 = vpop.xlane.xlu0 %762
    %v764 = vsel %vm760, %v756, 0.0
    %765 = vadd.xlane.f32.xlu0 %v764
    %v766 = vpop.xlane.xlu0 %765
    %v767 = vsel %vm760, %v757, 0.0
    %768 = vadd.xlane.f32.xlu0 %v767
    %v769 = vpop.xlane.xlu0 %768
    %v770 = vsel %vm760, %v758, 0.0
    %771 = vadd.xlane.f32.xlu0 %v770
    %v772 = vpop.xlane.xlu0 %771
    %v773 = vsel %vm760, %v759, 0.0
    %774 = vadd.xlane.f32.xlu0 %v773
    %v775 = vpop.xlane.xlu0 %774
    %v776 = vmul.f32 %v763, %v57
    %v777 = vmul.f32 %v766, %v58
    %v778 = vmul.f32 %v769, %v59
    %v779 = vmul.f32 %v772, %v60
    %v780 = vmul.f32 %v775, %v61
    %v781 = vsel %vm754, %v661, 0.0
    %v782 = vsel %vm754, %v663, 0.0
    %v783 = vsel %vm760, %v781, 0.0
    %784 = vadd.xlane.f32.xlu0 %v783
    %v785 = vpop.xlane.xlu0 %784
    %v786 = vsel %vm760, %v782, 0.0
    %787 = vadd.xlane.f32.xlu0 %v786
    %v788 = vpop.xlane.xlu0 %787
    %v789 = vmul.f32 %v69, %v785
    %v790 = vmul.f32 %v70, %v788
    %791 = vmatprep.subr.mxu0 0.0
    %792 = vmatpush1.msra.mxu0 0.0
    %793 = vmatprep.subr.mxu0 0.0
    %794 = vmatpush1.msra.mxu0 0.0
    %795 = vmatprep.subr.mxu0 0.0
    %796 = vmatpush1.msra.mxu0 0.0
    %797 = vmatprep.subr.mxu0 0.0
    %798 = vmatpush1.msra.mxu0 0.0
    %799 = vmatprep.subr.mxu0 0.0
    %800 = vmatpush1.msra.mxu0 0.0
    %801 = vmatprep.subr.mxu0 0.0
    %802 = vmatpush1.msra.mxu0 0.0
    %803 = vmatprep.subr.mxu0 0.0
    %804 = vmatpush1.msra.mxu0 0.0
    %805 = vmatprep.subr.mxu0 0.0
    %806 = vmatpush1.msra.mxu0 0.0
    %807 = vmatprep.subr.mxu0 0.0
    %808 = vmatpush1.msra.mxu0 0.0
    %809 = vmatprep.subr.mxu0 0.0
    %810 = vmatpush1.msra.mxu0 0.0
    %811 = vmatprep.subr.mxu0 0.0
    %812 = vmatpush1.msra.mxu0 0.0
    %813 = vmatprep.subr.mxu0 0.0
    %814 = vmatpush1.msra.mxu0 %v780
    %815 = vmatprep.subr.mxu0 0.0
    %816 = vmatpush1.msra.mxu0 %v779
    %817 = vmatprep.subr.mxu0 0.0
    %818 = vmatpush1.msra.mxu0 %v778
    %819 = vmatprep.subr.mxu0 0.0
    %820 = vmatpush1.msra.mxu0 %v777
    %821 = vmatprep.subr.mxu0 0.0
    %822 = vmatpush1.msra.mxu0 %v776
    %823 = vmatprep.subr.mxu0 0.0
    %824 = vmatpush2.msra.mxu0 0.0
    %825 = vmatprep.subr.mxu0 0.0
    %826 = vmatpush2.msra.mxu0 0.0
    %827 = vmatprep.subr.mxu0 0.0
    %828 = vmatpush2.msra.mxu0 0.0
    %829 = vmatprep.subr.mxu0 0.0
    %830 = vmatpush2.msra.mxu0 0.0
    %831 = vmatprep.subr.mxu0 0.0
    %832 = vmatpush2.msra.mxu0 0.0
    %833 = vmatprep.subr.mxu0 0.0
    %834 = vmatpush2.msra.mxu0 0.0
    %835 = vmatprep.subr.mxu0 0.0
    %836 = vmatpush2.msra.mxu0 0.0
    %837 = vmatprep.subr.mxu0 0.0
    %838 = vmatpush2.msra.mxu0 0.0
    %839 = vmatprep.subr.mxu0 0.0
    %840 = vmatpush2.msra.mxu0 0.0
    %841 = vmatprep.subr.mxu0 0.0
    %842 = vmatpush2.msra.mxu0 0.0
    %843 = vmatprep.subr.mxu0 0.0
    %844 = vmatpush2.msra.mxu0 0.0
    %845 = vmatprep.subr.mxu0 0.0
    %846 = vmatpush2.msra.mxu0 0.0
    %847 = vmatprep.subr.mxu0 0.0
    %848 = vmatpush2.msra.mxu0 0.0
    %849 = vmatprep.subr.mxu0 0.0
    %850 = vmatpush2.msra.mxu0 0.0
    %851 = vmatprep.subr.mxu0 0.0
    %852 = vmatpush2.msra.mxu0 0.0
    %853 = vmatprep.subr.mxu0 0.0
    %854 = vmatpush2.msra.mxu0 0.0
    %855 = vmatprep.mubr.f32.mxu0 0.0
    %856 = vmatmul.mubr.f32.gmra.mxu0 %v357
    %v857 = vpop.f32.mrf.mxu0
    %v858 = vadd.f32 %v789, %v857
    %v859 = vpop.f32.mrf.mxu0
    %860 = vmatprep.mubr.f32.mxu0 0.0
    %861 = vmatmul.mubr.f32.gmra.mxu0 %v360
    %v862 = vpop.f32.mrf.mxu0
    %v863 = vadd.f32 %v790, %v862
    %v864 = vpop.f32.mrf.mxu0
    %865 = vdwg.mxu0
    %v867 = vlaneseq
    %v868 = vshrl.u32 %v867, 7
    %v869 = vsub.s32 0, %v868
    %v870 = vrot.slane %v669, %v869
    %v873 = vsel %vm439, %v858, 0
    %v876 = vsel %vm439, %v863, 0
    %878 = vmatprep.subr.mxu0 0.0
    %879 = vmatpush1.msra.mxu0 0.0
    %880 = vmatprep.subr.mxu0 0.0
    %881 = vmatpush1.msra.mxu0 0.0
    %882 = vmatprep.subr.mxu0 0.0
    %883 = vmatpush1.msra.mxu0 0.0
    %884 = vmatprep.subr.mxu0 0.0
    %885 = vmatpush1.msra.mxu0 0.0
    %886 = vmatprep.subr.mxu0 0.0
    %887 = vmatpush1.msra.mxu0 0.0
    %888 = vmatprep.subr.mxu0 0.0
    %889 = vmatpush1.msra.mxu0 0.0
    %890 = vmatprep.subr.mxu0 0.0
    %891 = vmatpush1.msra.mxu0 0.0
    %892 = vmatprep.subr.mxu0 0.0
    %893 = vmatpush1.msra.mxu0 0.0
    %894 = vmatprep.subr.mxu0 0.0
    %895 = vmatpush1.msra.mxu0 0.0
    %896 = vmatprep.subr.mxu0 0.0
    %897 = vmatpush1.msra.mxu0 0.0
    %898 = vmatprep.subr.mxu0 0.0
    %899 = vmatpush1.msra.mxu0 0.0
    %900 = vmatprep.subr.mxu0 0.0
    %901 = vmatpush1.msra.mxu0 0.0
    %902 = vmatprep.subr.mxu0 0.0
    %903 = vmatpush1.msra.mxu0 0.0
    %904 = vmatprep.subr.mxu0 0.0
    %905 = vmatpush1.msra.mxu0 0.0
    %906 = vmatprep.subr.mxu0 0.0
    %907 = vmatpush1.msra.mxu0 %v749
    %908 = vmatprep.subr.mxu0 0.0
    %909 = vmatpush1.msra.mxu0 %v744
    %910 = vmatprep.subr.mxu0 0.0
    %911 = vmatpush2.msra.mxu0 0.0
    %912 = vmatprep.subr.mxu0 0.0
    %913 = vmatpush2.msra.mxu0 0.0
    %914 = vmatprep.subr.mxu0 0.0
    %915 = vmatpush2.msra.mxu0 0.0
    %916 = vmatprep.subr.mxu0 0.0
    %917 = vmatpush2.msra.mxu0 0.0
    %918 = vmatprep.subr.mxu0 0.0
    %919 = vmatpush2.msra.mxu0 0.0
    %920 = vmatprep.subr.mxu0 0.0
    %921 = vmatpush2.msra.mxu0 0.0
    %922 = vmatprep.subr.mxu0 0.0
    %923 = vmatpush2.msra.mxu0 0.0
    %924 = vmatprep.subr.mxu0 0.0
    %925 = vmatpush2.msra.mxu0 0.0
    %926 = vmatprep.subr.mxu0 0.0
    %927 = vmatpush2.msra.mxu0 0.0
    %928 = vmatprep.subr.mxu0 0.0
    %929 = vmatpush2.msra.mxu0 0.0
    %930 = vmatprep.subr.mxu0 0.0
    %931 = vmatpush2.msra.mxu0 0.0
    %932 = vmatprep.subr.mxu0 0.0
    %933 = vmatpush2.msra.mxu0 0.0
    %934 = vmatprep.subr.mxu0 0.0
    %935 = vmatpush2.msra.mxu0 0.0
    %936 = vmatprep.subr.mxu0 0.0
    %937 = vmatpush2.msra.mxu0 0.0
    %938 = vmatprep.subr.mxu0 0.0
    %939 = vmatpush2.msra.mxu0 0.0
    %940 = vmatprep.subr.mxu0 0.0
    %941 = vmatpush2.msra.mxu0 0.0
    %942 = vmatprep.mubr.f32.mxu0 0.0
    %943 = vmatmul.mubr.f32.gmra.mxu0 %v873
    %v944 = vpop.f32.mrf.mxu0
    %v945 = vadd.f32 %v870, %v944
    %v946 = vpop.f32.mrf.mxu0
    %947 = vmatprep.mubr.f32.mxu0 0.0
    %948 = vmatmul.mubr.f32.gmra.mxu0 %v876
    %v949 = vpop.f32.mrf.mxu0
    %v950 = vadd.f32 %v870, %v949
    %v951 = vpop.f32.mrf.mxu0
    %952 = vdwg.mxu0
    %vm953 = vcmask 261120
    %v954 = vsel %vm953, %v945, 0.0
    %v955 = vsel %vm953, %v950, 0.0
    %v956 = vadd.f32 %v954, %v955
    %v957 = vrot.slane %v956, 4
    %v958 = vadd.f32 %v956, %v957
    %v959 = vrot.slane %v958, 2
    %v960 = vadd.f32 %v958, %v959
    %v961 = vrot.slane %v960, 1
    %v962 = vadd.f32 %v960, %v961
    %v963 = vrcp.pop 16.0
    %v964 = vmul.f32 %v962, %v963
    %v965 = vsub.f32 %v945, %v964
    %v966 = vsub.f32 %v950, %v964
    %v967 = vmul.f32 %v965, %v965
    %v968 = vmul.f32 %v966, %v966
    %v969 = vsel %vm953, %v967, 0.0
    %v970 = vsel %vm953, %v968, 0.0
    %v971 = vadd.f32 %v969, %v970
    %v972 = vrot.slane %v971, 4
    %v973 = vadd.f32 %v971, %v972
    %v974 = vrot.slane %v973, 2
    %v975 = vadd.f32 %v973, %v974
    %v976 = vrot.slane %v975, 1
    %v977 = vadd.f32 %v975, %v976
    %v978 = vmul.f32 %v977, %v963
    %v979 = vadd.f32 %v978, 1e-05
    %v980 = vrsqrt.pop %v979
    %v981 = vmul.f32 %v965, %v980
    %v982 = vmul.f32 %v966, %v980
    %v983 = vmax.f32 %v981, 0.0
    %v984 = vmax.f32 %v982, 0.0
    %v985 = vld [vmem:[%s13] sm:$0xff]
    %v986 = vld [vmem:[%s13 + $0x8] sm:$0xff]
    %v987 = vld [vmem:[%s13 + $0x10] sm:$0xff]
    %v988 = vld [vmem:[%s13 + $0x18] sm:$0xff]
    %v989 = vld [vmem:[%s14] sm:$0x1]
    %v991 = vsel %vm953, %v983, 0
    %v994 = vsel %vm953, %v984, 0
    %996 = vmatprep.subr.mxu0 0.0
    %997 = vmatpush1.msra.mxu0 0.0
    %998 = vmatprep.subr.mxu0 0.0
    %999 = vmatpush1.msra.mxu0 0.0
    %1000 = vmatprep.subr.mxu0 0.0
    %1001 = vmatpush1.msra.mxu0 0.0
    %1002 = vmatprep.subr.mxu0 0.0
    %1003 = vmatpush1.msra.mxu0 0.0
    %1004 = vmatprep.subr.mxu0 0.0
    %1005 = vmatpush1.msra.mxu0 0.0
    %1006 = vmatprep.subr.mxu0 0.0
    %1007 = vmatpush1.msra.mxu0 0.0
    %1008 = vmatprep.subr.mxu0 0.0
    %1009 = vmatpush1.msra.mxu0 0.0
    %1010 = vmatprep.subr.mxu0 0.0
    %1011 = vmatpush1.msra.mxu0 0.0
    %1012 = vmatprep.subr.mxu0 0.0
    %1013 = vmatpush1.msra.mxu0 0.0
    %1014 = vmatprep.subr.mxu0 0.0
    %1015 = vmatpush1.msra.mxu0 0.0
    %1016 = vmatprep.subr.mxu0 0.0
    %1017 = vmatpush1.msra.mxu0 0.0
    %1018 = vmatprep.subr.mxu0 0.0
    %1019 = vmatpush1.msra.mxu0 0.0
    %1020 = vmatprep.subr.mxu0 0.0
    %1021 = vmatpush1.msra.mxu0 %v988
    %1022 = vmatprep.subr.mxu0 0.0
    %1023 = vmatpush1.msra.mxu0 %v987
    %1024 = vmatprep.subr.mxu0 0.0
    %1025 = vmatpush1.msra.mxu0 %v986
    %1026 = vmatprep.subr.mxu0 0.0
    %1027 = vmatpush1.msra.mxu0 %v985
    %1028 = vmatprep.subr.mxu0 0.0
    %1029 = vmatpush2.msra.mxu0 0.0
    %1030 = vmatprep.subr.mxu0 0.0
    %1031 = vmatpush2.msra.mxu0 0.0
    %1032 = vmatprep.subr.mxu0 0.0
    %1033 = vmatpush2.msra.mxu0 0.0
    %1034 = vmatprep.subr.mxu0 0.0
    %1035 = vmatpush2.msra.mxu0 0.0
    %1036 = vmatprep.subr.mxu0 0.0
    %1037 = vmatpush2.msra.mxu0 0.0
    %1038 = vmatprep.subr.mxu0 0.0
    %1039 = vmatpush2.msra.mxu0 0.0
    %1040 = vmatprep.subr.mxu0 0.0
    %1041 = vmatpush2.msra.mxu0 0.0
    %1042 = vmatprep.subr.mxu0 0.0
    %1043 = vmatpush2.msra.mxu0 0.0
    %1044 = vmatprep.subr.mxu0 0.0
    %1045 = vmatpush2.msra.mxu0 0.0
    %1046 = vmatprep.subr.mxu0 0.0
    %1047 = vmatpush2.msra.mxu0 0.0
    %1048 = vmatprep.subr.mxu0 0.0
    %1049 = vmatpush2.msra.mxu0 0.0
    %1050 = vmatprep.subr.mxu0 0.0
    %1051 = vmatpush2.msra.mxu0 0.0
    %1052 = vmatprep.subr.mxu0 0.0
    %1053 = vmatpush2.msra.mxu0 0.0
    %1054 = vmatprep.subr.mxu0 0.0
    %1055 = vmatpush2.msra.mxu0 0.0
    %1056 = vmatprep.subr.mxu0 0.0
    %1057 = vmatpush2.msra.mxu0 0.0
    %1058 = vmatprep.subr.mxu0 0.0
    %1059 = vmatpush2.msra.mxu0 0.0
    %1060 = vmatprep.mubr.f32.mxu0 0.0
    %1061 = vmatmul.mubr.f32.gmra.mxu0 %v991
    %v1062 = vpop.f32.mrf.mxu0
    %v1063 = vadd.f32 0.0, %v1062
    %v1064 = vpop.f32.mrf.mxu0
    %1065 = vmatprep.mubr.f32.mxu0 0.0
    %1066 = vmatmul.mubr.f32.gmra.mxu0 %v994
    %v1067 = vpop.f32.mrf.mxu0
    %v1068 = vadd.f32 0.0, %v1067
    %v1069 = vpop.f32.mrf.mxu0
    %1070 = vdwg.mxu0
    %vm1071 = vcmp.eq.s32.totalorder %v665, 1
    %v1072 = vsel %vm1071, 1, 0
    %vm1073 = vcmp.eq.s32.totalorder %v1072, 1
    %v1074 = vsel %vm1073, %v655, 0.0
    %v1075 = vsel %vm1073, %v656, 0.0
    %v1076 = vsel %vm1073, %v657, 0.0
    %v1077 = vsel %vm1073, %v658, 0.0
    %v1078 = vsel %vm1073, %v659, 0.0
    %v1079 = vsel %vm760, %v1074, 0.0
    %1080 = vadd.xlane.f32.xlu0 %v1079
    %v1081 = vpop.xlane.xlu0 %1080
    %v1082 = vsel %vm760, %v1075, 0.0
    %1083 = vadd.xlane.f32.xlu0 %v1082
    %v1084 = vpop.xlane.xlu0 %1083
    %v1085 = vsel %vm760, %v1076, 0.0
    %1086 = vadd.xlane.f32.xlu0 %v1085
    %v1087 = vpop.xlane.xlu0 %1086
    %v1088 = vsel %vm760, %v1077, 0.0
    %1089 = vadd.xlane.f32.xlu0 %v1088
    %v1090 = vpop.xlane.xlu0 %1089
    %v1091 = vsel %vm760, %v1078, 0.0
    %1092 = vadd.xlane.f32.xlu0 %v1091
    %v1093 = vpop.xlane.xlu0 %1092
    %v1094 = vmul.f32 %v1081, %v57
    %v1095 = vmul.f32 %v1084, %v58
    %v1096 = vmul.f32 %v1087, %v59
    %v1097 = vmul.f32 %v1090, %v60
    %v1098 = vmul.f32 %v1093, %v61
    %v1099 = vsel %vm1073, %v661, 0.0
    %v1100 = vsel %vm1073, %v663, 0.0
    %v1101 = vsel %vm760, %v1099, 0.0
    %1102 = vadd.xlane.f32.xlu0 %v1101
    %v1103 = vpop.xlane.xlu0 %1102
    %v1104 = vsel %vm760, %v1100, 0.0
    %1105 = vadd.xlane.f32.xlu0 %v1104
    %v1106 = vpop.xlane.xlu0 %1105
    %v1107 = vmul.f32 %v69, %v1103
    %v1108 = vmul.f32 %v70, %v1106
    %1109 = vmatprep.subr.mxu0 0.0
    %1110 = vmatpush1.msra.mxu0 0.0
    %1111 = vmatprep.subr.mxu0 0.0
    %1112 = vmatpush1.msra.mxu0 0.0
    %1113 = vmatprep.subr.mxu0 0.0
    %1114 = vmatpush1.msra.mxu0 0.0
    %1115 = vmatprep.subr.mxu0 0.0
    %1116 = vmatpush1.msra.mxu0 0.0
    %1117 = vmatprep.subr.mxu0 0.0
    %1118 = vmatpush1.msra.mxu0 0.0
    %1119 = vmatprep.subr.mxu0 0.0
    %1120 = vmatpush1.msra.mxu0 0.0
    %1121 = vmatprep.subr.mxu0 0.0
    %1122 = vmatpush1.msra.mxu0 0.0
    %1123 = vmatprep.subr.mxu0 0.0
    %1124 = vmatpush1.msra.mxu0 0.0
    %1125 = vmatprep.subr.mxu0 0.0
    %1126 = vmatpush1.msra.mxu0 0.0
    %1127 = vmatprep.subr.mxu0 0.0
    %1128 = vmatpush1.msra.mxu0 0.0
    %1129 = vmatprep.subr.mxu0 0.0
    %1130 = vmatpush1.msra.mxu0 0.0
    %1131 = vmatprep.subr.mxu0 0.0
    %1132 = vmatpush1.msra.mxu0 %v1098
    %1133 = vmatprep.subr.mxu0 0.0
    %1134 = vmatpush1.msra.mxu0 %v1097
    %1135 = vmatprep.subr.mxu0 0.0
    %1136 = vmatpush1.msra.mxu0 %v1096
    %1137 = vmatprep.subr.mxu0 0.0
    %1138 = vmatpush1.msra.mxu0 %v1095
    %1139 = vmatprep.subr.mxu0 0.0
    %1140 = vmatpush1.msra.mxu0 %v1094
    %1141 = vmatprep.subr.mxu0 0.0
    %1142 = vmatpush2.msra.mxu0 0.0
    %1143 = vmatprep.subr.mxu0 0.0
    %1144 = vmatpush2.msra.mxu0 0.0
    %1145 = vmatprep.subr.mxu0 0.0
    %1146 = vmatpush2.msra.mxu0 0.0
    %1147 = vmatprep.subr.mxu0 0.0
    %1148 = vmatpush2.msra.mxu0 0.0
    %1149 = vmatprep.subr.mxu0 0.0
    %1150 = vmatpush2.msra.mxu0 0.0
    %1151 = vmatprep.subr.mxu0 0.0
    %1152 = vmatpush2.msra.mxu0 0.0
    %1153 = vmatprep.subr.mxu0 0.0
    %1154 = vmatpush2.msra.mxu0 0.0
    %1155 = vmatprep.subr.mxu0 0.0
    %1156 = vmatpush2.msra.mxu0 0.0
    %1157 = vmatprep.subr.mxu0 0.0
    %1158 = vmatpush2.msra.mxu0 0.0
    %1159 = vmatprep.subr.mxu0 0.0
    %1160 = vmatpush2.msra.mxu0 0.0
    %1161 = vmatprep.subr.mxu0 0.0
    %1162 = vmatpush2.msra.mxu0 0.0
    %1163 = vmatprep.subr.mxu0 0.0
    %1164 = vmatpush2.msra.mxu0 0.0
    %1165 = vmatprep.subr.mxu0 0.0
    %1166 = vmatpush2.msra.mxu0 0.0
    %1167 = vmatprep.subr.mxu0 0.0
    %1168 = vmatpush2.msra.mxu0 0.0
    %1169 = vmatprep.subr.mxu0 0.0
    %1170 = vmatpush2.msra.mxu0 0.0
    %1171 = vmatprep.subr.mxu0 0.0
    %1172 = vmatpush2.msra.mxu0 0.0
    %1173 = vmatprep.mubr.f32.mxu0 0.0
    %1174 = vmatmul.mubr.f32.gmra.mxu0 %v357
    %v1175 = vpop.f32.mrf.mxu0
    %v1176 = vadd.f32 %v1107, %v1175
    %v1177 = vpop.f32.mrf.mxu0
    %1178 = vmatprep.mubr.f32.mxu0 0.0
    %1179 = vmatmul.mubr.f32.gmra.mxu0 %v360
    %v1180 = vpop.f32.mrf.mxu0
    %v1181 = vadd.f32 %v1108, %v1180
    %v1182 = vpop.f32.mrf.mxu0
    %1183 = vdwg.mxu0
    %v1185 = vlaneseq
    %v1186 = vshrl.u32 %v1185, 7
    %v1187 = vsub.s32 0, %v1186
    %v1188 = vrot.slane %v989, %v1187
    %v1191 = vsel %vm439, %v1176, 0
    %v1194 = vsel %vm439, %v1181, 0
    %1196 = vmatprep.subr.mxu0 0.0
    %1197 = vmatpush1.msra.mxu0 0.0
    %1198 = vmatprep.subr.mxu0 0.0
    %1199 = vmatpush1.msra.mxu0 0.0
    %1200 = vmatprep.subr.mxu0 0.0
    %1201 = vmatpush1.msra.mxu0 0.0
    %1202 = vmatprep.subr.mxu0 0.0
    %1203 = vmatpush1.msra.mxu0 0.0
    %1204 = vmatprep.subr.mxu0 0.0
    %1205 = vmatpush1.msra.mxu0 0.0
    %1206 = vmatprep.subr.mxu0 0.0
    %1207 = vmatpush1.msra.mxu0 0.0
    %1208 = vmatprep.subr.mxu0 0.0
    %1209 = vmatpush1.msra.mxu0 0.0
    %1210 = vmatprep.subr.mxu0 0.0
    %1211 = vmatpush1.msra.mxu0 0.0
    %1212 = vmatprep.subr.mxu0 0.0
    %1213 = vmatpush1.msra.mxu0 0.0
    %1214 = vmatprep.subr.mxu0 0.0
    %1215 = vmatpush1.msra.mxu0 0.0
    %1216 = vmatprep.subr.mxu0 0.0
    %1217 = vmatpush1.msra.mxu0 0.0
    %1218 = vmatprep.subr.mxu0 0.0
    %1219 = vmatpush1.msra.mxu0 0.0
    %1220 = vmatprep.subr.mxu0 0.0
    %1221 = vmatpush1.msra.mxu0 0.0
    %1222 = vmatprep.subr.mxu0 0.0
    %1223 = vmatpush1.msra.mxu0 0.0
    %1224 = vmatprep.subr.mxu0 0.0
    %1225 = vmatpush1.msra.mxu0 %v1068
    %1226 = vmatprep.subr.mxu0 0.0
    %1227 = vmatpush1.msra.mxu0 %v1063
    %1228 = vmatprep.subr.mxu0 0.0
    %1229 = vmatpush2.msra.mxu0 0.0
    %1230 = vmatprep.subr.mxu0 0.0
    %1231 = vmatpush2.msra.mxu0 0.0
    %1232 = vmatprep.subr.mxu0 0.0
    %1233 = vmatpush2.msra.mxu0 0.0
    %1234 = vmatprep.subr.mxu0 0.0
    %1235 = vmatpush2.msra.mxu0 0.0
    %1236 = vmatprep.subr.mxu0 0.0
    %1237 = vmatpush2.msra.mxu0 0.0
    %1238 = vmatprep.subr.mxu0 0.0
    %1239 = vmatpush2.msra.mxu0 0.0
    %1240 = vmatprep.subr.mxu0 0.0
    %1241 = vmatpush2.msra.mxu0 0.0
    %1242 = vmatprep.subr.mxu0 0.0
    %1243 = vmatpush2.msra.mxu0 0.0
    %1244 = vmatprep.subr.mxu0 0.0
    %1245 = vmatpush2.msra.mxu0 0.0
    %1246 = vmatprep.subr.mxu0 0.0
    %1247 = vmatpush2.msra.mxu0 0.0
    %1248 = vmatprep.subr.mxu0 0.0
    %1249 = vmatpush2.msra.mxu0 0.0
    %1250 = vmatprep.subr.mxu0 0.0
    %1251 = vmatpush2.msra.mxu0 0.0
    %1252 = vmatprep.subr.mxu0 0.0
    %1253 = vmatpush2.msra.mxu0 0.0
    %1254 = vmatprep.subr.mxu0 0.0
    %1255 = vmatpush2.msra.mxu0 0.0
    %1256 = vmatprep.subr.mxu0 0.0
    %1257 = vmatpush2.msra.mxu0 0.0
    %1258 = vmatprep.subr.mxu0 0.0
    %1259 = vmatpush2.msra.mxu0 0.0
    %1260 = vmatprep.mubr.f32.mxu0 0.0
    %1261 = vmatmul.mubr.f32.gmra.mxu0 %v1191
    %v1262 = vpop.f32.mrf.mxu0
    %v1263 = vadd.f32 %v1188, %v1262
    %v1264 = vpop.f32.mrf.mxu0
    %1265 = vmatprep.mubr.f32.mxu0 0.0
    %1266 = vmatmul.mubr.f32.gmra.mxu0 %v1194
    %v1267 = vpop.f32.mrf.mxu0
    %v1268 = vadd.f32 %v1188, %v1267
    %v1269 = vpop.f32.mrf.mxu0
    %1270 = vdwg.mxu0
    %v1271 = vsel %vm953, %v1263, 0.0
    %v1272 = vsel %vm953, %v1268, 0.0
    %v1273 = vadd.f32 %v1271, %v1272
    %v1274 = vrot.slane %v1273, 4
    %v1275 = vadd.f32 %v1273, %v1274
    %v1276 = vrot.slane %v1275, 2
    %v1277 = vadd.f32 %v1275, %v1276
    %v1278 = vrot.slane %v1277, 1
    %v1279 = vadd.f32 %v1277, %v1278
    %v1280 = vmul.f32 %v1279, %v963
    %v1281 = vsub.f32 %v1263, %v1280
    %v1282 = vsub.f32 %v1268, %v1280
    %v1283 = vmul.f32 %v1281, %v1281
    %v1284 = vmul.f32 %v1282, %v1282
    %v1285 = vsel %vm953, %v1283, 0.0
    %v1286 = vsel %vm953, %v1284, 0.0
    %v1287 = vadd.f32 %v1285, %v1286
    %v1288 = vrot.slane %v1287, 4
    %v1289 = vadd.f32 %v1287, %v1288
    %v1290 = vrot.slane %v1289, 2
    %v1291 = vadd.f32 %v1289, %v1290
    %v1292 = vrot.slane %v1291, 1
    %v1293 = vadd.f32 %v1291, %v1292
    %v1294 = vmul.f32 %v1293, %v963
    %v1295 = vadd.f32 %v1294, 1e-05
    %v1296 = vrsqrt.pop %v1295
    %v1297 = vmul.f32 %v1281, %v1296
    %v1298 = vmul.f32 %v1282, %v1296
    %v1299 = vmax.f32 %v1297, 0.0
    %v1300 = vmax.f32 %v1298, 0.0
    %s1301 = scalar_lea.vmem %s13, 32
    %v1302 = vld [vmem:[%s1301] sm:$0xff]
    %v1303 = vld [vmem:[%s1301 + $0x8] sm:$0xff]
    %v1304 = vld [vmem:[%s1301 + $0x10] sm:$0xff]
    %v1305 = vld [vmem:[%s1301 + $0x18] sm:$0xff]
    %s1306 = scalar_lea.vmem %s14, 1
    %v1307 = vld [vmem:[%s1306] sm:$0x1]
    %v1309 = vsel %vm953, %v1299, 0
    %v1312 = vsel %vm953, %v1300, 0
    %1314 = vmatprep.subr.mxu0 0.0
    %1315 = vmatpush1.msra.mxu0 0.0
    %1316 = vmatprep.subr.mxu0 0.0
    %1317 = vmatpush1.msra.mxu0 0.0
    %1318 = vmatprep.subr.mxu0 0.0
    %1319 = vmatpush1.msra.mxu0 0.0
    %1320 = vmatprep.subr.mxu0 0.0
    %1321 = vmatpush1.msra.mxu0 0.0
    %1322 = vmatprep.subr.mxu0 0.0
    %1323 = vmatpush1.msra.mxu0 0.0
    %1324 = vmatprep.subr.mxu0 0.0
    %1325 = vmatpush1.msra.mxu0 0.0
    %1326 = vmatprep.subr.mxu0 0.0
    %1327 = vmatpush1.msra.mxu0 0.0
    %1328 = vmatprep.subr.mxu0 0.0
    %1329 = vmatpush1.msra.mxu0 0.0
    %1330 = vmatprep.subr.mxu0 0.0
    %1331 = vmatpush1.msra.mxu0 0.0
    %1332 = vmatprep.subr.mxu0 0.0
    %1333 = vmatpush1.msra.mxu0 0.0
    %1334 = vmatprep.subr.mxu0 0.0
    %1335 = vmatpush1.msra.mxu0 0.0
    %1336 = vmatprep.subr.mxu0 0.0
    %1337 = vmatpush1.msra.mxu0 0.0
    %1338 = vmatprep.subr.mxu0 0.0
    %1339 = vmatpush1.msra.mxu0 %v1305
    %1340 = vmatprep.subr.mxu0 0.0
    %1341 = vmatpush1.msra.mxu0 %v1304
    %1342 = vmatprep.subr.mxu0 0.0
    %1343 = vmatpush1.msra.mxu0 %v1303
    %1344 = vmatprep.subr.mxu0 0.0
    %1345 = vmatpush1.msra.mxu0 %v1302
    %1346 = vmatprep.subr.mxu0 0.0
    %1347 = vmatpush2.msra.mxu0 0.0
    %1348 = vmatprep.subr.mxu0 0.0
    %1349 = vmatpush2.msra.mxu0 0.0
    %1350 = vmatprep.subr.mxu0 0.0
    %1351 = vmatpush2.msra.mxu0 0.0
    %1352 = vmatprep.subr.mxu0 0.0
    %1353 = vmatpush2.msra.mxu0 0.0
    %1354 = vmatprep.subr.mxu0 0.0
    %1355 = vmatpush2.msra.mxu0 0.0
    %1356 = vmatprep.subr.mxu0 0.0
    %1357 = vmatpush2.msra.mxu0 0.0
    %1358 = vmatprep.subr.mxu0 0.0
    %1359 = vmatpush2.msra.mxu0 0.0
    %1360 = vmatprep.subr.mxu0 0.0
    %1361 = vmatpush2.msra.mxu0 0.0
    %1362 = vmatprep.subr.mxu0 0.0
    %1363 = vmatpush2.msra.mxu0 0.0
    %1364 = vmatprep.subr.mxu0 0.0
    %1365 = vmatpush2.msra.mxu0 0.0
    %1366 = vmatprep.subr.mxu0 0.0
    %1367 = vmatpush2.msra.mxu0 0.0
    %1368 = vmatprep.subr.mxu0 0.0
    %1369 = vmatpush2.msra.mxu0 0.0
    %1370 = vmatprep.subr.mxu0 0.0
    %1371 = vmatpush2.msra.mxu0 0.0
    %1372 = vmatprep.subr.mxu0 0.0
    %1373 = vmatpush2.msra.mxu0 0.0
    %1374 = vmatprep.subr.mxu0 0.0
    %1375 = vmatpush2.msra.mxu0 0.0
    %1376 = vmatprep.subr.mxu0 0.0
    %1377 = vmatpush2.msra.mxu0 0.0
    %1378 = vmatprep.mubr.f32.mxu0 0.0
    %1379 = vmatmul.mubr.f32.gmra.mxu0 %v1309
    %v1380 = vpop.f32.mrf.mxu0
    %v1381 = vadd.f32 0.0, %v1380
    %v1382 = vpop.f32.mrf.mxu0
    %1383 = vmatprep.mubr.f32.mxu0 0.0
    %1384 = vmatmul.mubr.f32.gmra.mxu0 %v1312
    %v1385 = vpop.f32.mrf.mxu0
    %v1386 = vadd.f32 0.0, %v1385
    %v1387 = vpop.f32.mrf.mxu0
    %1388 = vdwg.mxu0
    %vm1389 = vcmp.eq.s32.totalorder %v665, 2
    %v1390 = vsel %vm1389, 1, 0
    %vm1391 = vcmp.eq.s32.totalorder %v1390, 1
    %v1392 = vsel %vm1391, %v655, 0.0
    %v1393 = vsel %vm1391, %v656, 0.0
    %v1394 = vsel %vm1391, %v657, 0.0
    %v1395 = vsel %vm1391, %v658, 0.0
    %v1396 = vsel %vm1391, %v659, 0.0
    %v1397 = vsel %vm760, %v1392, 0.0
    %1398 = vadd.xlane.f32.xlu0 %v1397
    %v1399 = vpop.xlane.xlu0 %1398
    %v1400 = vsel %vm760, %v1393, 0.0
    %1401 = vadd.xlane.f32.xlu0 %v1400
    %v1402 = vpop.xlane.xlu0 %1401
    %v1403 = vsel %vm760, %v1394, 0.0
    %1404 = vadd.xlane.f32.xlu0 %v1403
    %v1405 = vpop.xlane.xlu0 %1404
    %v1406 = vsel %vm760, %v1395, 0.0
    %1407 = vadd.xlane.f32.xlu0 %v1406
    %v1408 = vpop.xlane.xlu0 %1407
    %v1409 = vsel %vm760, %v1396, 0.0
    %1410 = vadd.xlane.f32.xlu0 %v1409
    %v1411 = vpop.xlane.xlu0 %1410
    %v1412 = vmul.f32 %v1399, %v57
    %v1413 = vmul.f32 %v1402, %v58
    %v1414 = vmul.f32 %v1405, %v59
    %v1415 = vmul.f32 %v1408, %v60
    %v1416 = vmul.f32 %v1411, %v61
    %v1417 = vsel %vm1391, %v661, 0.0
    %v1418 = vsel %vm1391, %v663, 0.0
    %v1419 = vsel %vm760, %v1417, 0.0
    %1420 = vadd.xlane.f32.xlu0 %v1419
    %v1421 = vpop.xlane.xlu0 %1420
    %v1422 = vsel %vm760, %v1418, 0.0
    %1423 = vadd.xlane.f32.xlu0 %v1422
    %v1424 = vpop.xlane.xlu0 %1423
    %v1425 = vmul.f32 %v69, %v1421
    %v1426 = vmul.f32 %v70, %v1424
    %1427 = vmatprep.subr.mxu0 0.0
    %1428 = vmatpush1.msra.mxu0 0.0
    %1429 = vmatprep.subr.mxu0 0.0
    %1430 = vmatpush1.msra.mxu0 0.0
    %1431 = vmatprep.subr.mxu0 0.0
    %1432 = vmatpush1.msra.mxu0 0.0
    %1433 = vmatprep.subr.mxu0 0.0
    %1434 = vmatpush1.msra.mxu0 0.0
    %1435 = vmatprep.subr.mxu0 0.0
    %1436 = vmatpush1.msra.mxu0 0.0
    %1437 = vmatprep.subr.mxu0 0.0
    %1438 = vmatpush1.msra.mxu0 0.0
    %1439 = vmatprep.subr.mxu0 0.0
    %1440 = vmatpush1.msra.mxu0 0.0
    %1441 = vmatprep.subr.mxu0 0.0
    %1442 = vmatpush1.msra.mxu0 0.0
    %1443 = vmatprep.subr.mxu0 0.0
    %1444 = vmatpush1.msra.mxu0 0.0
    %1445 = vmatprep.subr.mxu0 0.0
    %1446 = vmatpush1.msra.mxu0 0.0
    %1447 = vmatprep.subr.mxu0 0.0
    %1448 = vmatpush1.msra.mxu0 0.0
    %1449 = vmatprep.subr.mxu0 0.0
    %1450 = vmatpush1.msra.mxu0 %v1416
    %1451 = vmatprep.subr.mxu0 0.0
    %1452 = vmatpush1.msra.mxu0 %v1415
    %1453 = vmatprep.subr.mxu0 0.0
    %1454 = vmatpush1.msra.mxu0 %v1414
    %1455 = vmatprep.subr.mxu0 0.0
    %1456 = vmatpush1.msra.mxu0 %v1413
    %1457 = vmatprep.subr.mxu0 0.0
    %1458 = vmatpush1.msra.mxu0 %v1412
    %1459 = vmatprep.subr.mxu0 0.0
    %1460 = vmatpush2.msra.mxu0 0.0
    %1461 = vmatprep.subr.mxu0 0.0
    %1462 = vmatpush2.msra.mxu0 0.0
    %1463 = vmatprep.subr.mxu0 0.0
    %1464 = vmatpush2.msra.mxu0 0.0
    %1465 = vmatprep.subr.mxu0 0.0
    %1466 = vmatpush2.msra.mxu0 0.0
    %1467 = vmatprep.subr.mxu0 0.0
    %1468 = vmatpush2.msra.mxu0 0.0
    %1469 = vmatprep.subr.mxu0 0.0
    %1470 = vmatpush2.msra.mxu0 0.0
    %1471 = vmatprep.subr.mxu0 0.0
    %1472 = vmatpush2.msra.mxu0 0.0
    %1473 = vmatprep.subr.mxu0 0.0
    %1474 = vmatpush2.msra.mxu0 0.0
    %1475 = vmatprep.subr.mxu0 0.0
    %1476 = vmatpush2.msra.mxu0 0.0
    %1477 = vmatprep.subr.mxu0 0.0
    %1478 = vmatpush2.msra.mxu0 0.0
    %1479 = vmatprep.subr.mxu0 0.0
    %1480 = vmatpush2.msra.mxu0 0.0
    %1481 = vmatprep.subr.mxu0 0.0
    %1482 = vmatpush2.msra.mxu0 0.0
    %1483 = vmatprep.subr.mxu0 0.0
    %1484 = vmatpush2.msra.mxu0 0.0
    %1485 = vmatprep.subr.mxu0 0.0
    %1486 = vmatpush2.msra.mxu0 0.0
    %1487 = vmatprep.subr.mxu0 0.0
    %1488 = vmatpush2.msra.mxu0 0.0
    %1489 = vmatprep.subr.mxu0 0.0
    %1490 = vmatpush2.msra.mxu0 0.0
    %1491 = vmatprep.mubr.f32.mxu0 0.0
    %1492 = vmatmul.mubr.f32.gmra.mxu0 %v357
    %v1493 = vpop.f32.mrf.mxu0
    %v1494 = vadd.f32 %v1425, %v1493
    %v1495 = vpop.f32.mrf.mxu0
    %1496 = vmatprep.mubr.f32.mxu0 0.0
    %1497 = vmatmul.mubr.f32.gmra.mxu0 %v360
    %v1498 = vpop.f32.mrf.mxu0
    %v1499 = vadd.f32 %v1426, %v1498
    %v1500 = vpop.f32.mrf.mxu0
    %1501 = vdwg.mxu0
    %v1503 = vlaneseq
    %v1504 = vshrl.u32 %v1503, 7
    %v1505 = vsub.s32 0, %v1504
    %v1506 = vrot.slane %v1307, %v1505
    %v1509 = vsel %vm439, %v1494, 0
    %v1512 = vsel %vm439, %v1499, 0
    %1514 = vmatprep.subr.mxu0 0.0
    %1515 = vmatpush1.msra.mxu0 0.0
    %1516 = vmatprep.subr.mxu0 0.0
    %1517 = vmatpush1.msra.mxu0 0.0
    %1518 = vmatprep.subr.mxu0 0.0
    %1519 = vmatpush1.msra.mxu0 0.0
    %1520 = vmatprep.subr.mxu0 0.0
    %1521 = vmatpush1.msra.mxu0 0.0
    %1522 = vmatprep.subr.mxu0 0.0
    %1523 = vmatpush1.msra.mxu0 0.0
    %1524 = vmatprep.subr.mxu0 0.0
    %1525 = vmatpush1.msra.mxu0 0.0
    %1526 = vmatprep.subr.mxu0 0.0
    %1527 = vmatpush1.msra.mxu0 0.0
    %1528 = vmatprep.subr.mxu0 0.0
    %1529 = vmatpush1.msra.mxu0 0.0
    %1530 = vmatprep.subr.mxu0 0.0
    %1531 = vmatpush1.msra.mxu0 0.0
    %1532 = vmatprep.subr.mxu0 0.0
    %1533 = vmatpush1.msra.mxu0 0.0
    %1534 = vmatprep.subr.mxu0 0.0
    %1535 = vmatpush1.msra.mxu0 0.0
    %1536 = vmatprep.subr.mxu0 0.0
    %1537 = vmatpush1.msra.mxu0 0.0
    %1538 = vmatprep.subr.mxu0 0.0
    %1539 = vmatpush1.msra.mxu0 0.0
    %1540 = vmatprep.subr.mxu0 0.0
    %1541 = vmatpush1.msra.mxu0 0.0
    %1542 = vmatprep.subr.mxu0 0.0
    %1543 = vmatpush1.msra.mxu0 %v1386
    %1544 = vmatprep.subr.mxu0 0.0
    %1545 = vmatpush1.msra.mxu0 %v1381
    %1546 = vmatprep.subr.mxu0 0.0
    %1547 = vmatpush2.msra.mxu0 0.0
    %1548 = vmatprep.subr.mxu0 0.0
    %1549 = vmatpush2.msra.mxu0 0.0
    %1550 = vmatprep.subr.mxu0 0.0
    %1551 = vmatpush2.msra.mxu0 0.0
    %1552 = vmatprep.subr.mxu0 0.0
    %1553 = vmatpush2.msra.mxu0 0.0
    %1554 = vmatprep.subr.mxu0 0.0
    %1555 = vmatpush2.msra.mxu0 0.0
    %1556 = vmatprep.subr.mxu0 0.0
    %1557 = vmatpush2.msra.mxu0 0.0
    %1558 = vmatprep.subr.mxu0 0.0
    %1559 = vmatpush2.msra.mxu0 0.0
    %1560 = vmatprep.subr.mxu0 0.0
    %1561 = vmatpush2.msra.mxu0 0.0
    %1562 = vmatprep.subr.mxu0 0.0
    %1563 = vmatpush2.msra.mxu0 0.0
    %1564 = vmatprep.subr.mxu0 0.0
    %1565 = vmatpush2.msra.mxu0 0.0
    %1566 = vmatprep.subr.mxu0 0.0
    %1567 = vmatpush2.msra.mxu0 0.0
    %1568 = vmatprep.subr.mxu0 0.0
    %1569 = vmatpush2.msra.mxu0 0.0
    %1570 = vmatprep.subr.mxu0 0.0
    %1571 = vmatpush2.msra.mxu0 0.0
    %1572 = vmatprep.subr.mxu0 0.0
    %1573 = vmatpush2.msra.mxu0 0.0
    %1574 = vmatprep.subr.mxu0 0.0
    %1575 = vmatpush2.msra.mxu0 0.0
    %1576 = vmatprep.subr.mxu0 0.0
    %1577 = vmatpush2.msra.mxu0 0.0
    %1578 = vmatprep.mubr.f32.mxu0 0.0
    %1579 = vmatmul.mubr.f32.gmra.mxu0 %v1509
    %v1580 = vpop.f32.mrf.mxu0
    %v1581 = vadd.f32 %v1506, %v1580
    %v1582 = vpop.f32.mrf.mxu0
    %1583 = vmatprep.mubr.f32.mxu0 0.0
    %1584 = vmatmul.mubr.f32.gmra.mxu0 %v1512
    %v1585 = vpop.f32.mrf.mxu0
    %v1586 = vadd.f32 %v1506, %v1585
    %v1587 = vpop.f32.mrf.mxu0
    %1588 = vdwg.mxu0
    %v1589 = vadd.f32 %v1581, %v945
    %v1590 = vadd.f32 %v1586, %v950
    %v1591 = vadd.f32 %v945, %v1589
    %v1592 = vadd.f32 %v950, %v1590
    %v1593 = vsel %vm953, %v1589, 0.0
    %v1594 = vsel %vm953, %v1590, 0.0
    %v1595 = vadd.f32 %v1593, %v1594
    %v1596 = vrot.slane %v1595, 4
    %v1597 = vadd.f32 %v1595, %v1596
    %v1598 = vrot.slane %v1597, 2
    %v1599 = vadd.f32 %v1597, %v1598
    %v1600 = vrot.slane %v1599, 1
    %v1601 = vadd.f32 %v1599, %v1600
    %v1602 = vmul.f32 %v1601, %v963
    %v1603 = vsub.f32 %v1589, %v1602
    %v1604 = vsub.f32 %v1590, %v1602
    %v1605 = vmul.f32 %v1603, %v1603
    %v1606 = vmul.f32 %v1604, %v1604
    %v1607 = vsel %vm953, %v1605, 0.0
    %v1608 = vsel %vm953, %v1606, 0.0
    %v1609 = vadd.f32 %v1607, %v1608
    %v1610 = vrot.slane %v1609, 4
    %v1611 = vadd.f32 %v1609, %v1610
    %v1612 = vrot.slane %v1611, 2
    %v1613 = vadd.f32 %v1611, %v1612
    %v1614 = vrot.slane %v1613, 1
    %v1615 = vadd.f32 %v1613, %v1614
    %v1616 = vmul.f32 %v1615, %v963
    %v1617 = vadd.f32 %v1616, 1e-05
    %v1618 = vrsqrt.pop %v1617
    %v1619 = vmul.f32 %v1603, %v1618
    %v1620 = vmul.f32 %v1604, %v1618
    %v1621 = vmax.f32 %v1619, 0.0
    %v1622 = vmax.f32 %v1620, 0.0
    %s1623 = scalar_lea.vmem %s13, 64
    %v1624 = vld [vmem:[%s1623] sm:$0xff]
    %v1625 = vld [vmem:[%s1623 + $0x8] sm:$0xff]
    %v1626 = vld [vmem:[%s1623 + $0x10] sm:$0xff]
    %v1627 = vld [vmem:[%s1623 + $0x18] sm:$0xff]
    %s1628 = scalar_lea.vmem %s14, 2
    %v1629 = vld [vmem:[%s1628] sm:$0x1]
    %v1631 = vsel %vm953, %v1621, 0
    %v1634 = vsel %vm953, %v1622, 0
    %1636 = vmatprep.subr.mxu0 0.0
    %1637 = vmatpush1.msra.mxu0 0.0
    %1638 = vmatprep.subr.mxu0 0.0
    %1639 = vmatpush1.msra.mxu0 0.0
    %1640 = vmatprep.subr.mxu0 0.0
    %1641 = vmatpush1.msra.mxu0 0.0
    %1642 = vmatprep.subr.mxu0 0.0
    %1643 = vmatpush1.msra.mxu0 0.0
    %1644 = vmatprep.subr.mxu0 0.0
    %1645 = vmatpush1.msra.mxu0 0.0
    %1646 = vmatprep.subr.mxu0 0.0
    %1647 = vmatpush1.msra.mxu0 0.0
    %1648 = vmatprep.subr.mxu0 0.0
    %1649 = vmatpush1.msra.mxu0 0.0
    %1650 = vmatprep.subr.mxu0 0.0
    %1651 = vmatpush1.msra.mxu0 0.0
    %1652 = vmatprep.subr.mxu0 0.0
    %1653 = vmatpush1.msra.mxu0 0.0
    %1654 = vmatprep.subr.mxu0 0.0
    %1655 = vmatpush1.msra.mxu0 0.0
    %1656 = vmatprep.subr.mxu0 0.0
    %1657 = vmatpush1.msra.mxu0 0.0
    %1658 = vmatprep.subr.mxu0 0.0
    %1659 = vmatpush1.msra.mxu0 0.0
    %1660 = vmatprep.subr.mxu0 0.0
    %1661 = vmatpush1.msra.mxu0 %v1627
    %1662 = vmatprep.subr.mxu0 0.0
    %1663 = vmatpush1.msra.mxu0 %v1626
    %1664 = vmatprep.subr.mxu0 0.0
    %1665 = vmatpush1.msra.mxu0 %v1625
    %1666 = vmatprep.subr.mxu0 0.0
    %1667 = vmatpush1.msra.mxu0 %v1624
    %1668 = vmatprep.subr.mxu0 0.0
    %1669 = vmatpush2.msra.mxu0 0.0
    %1670 = vmatprep.subr.mxu0 0.0
    %1671 = vmatpush2.msra.mxu0 0.0
    %1672 = vmatprep.subr.mxu0 0.0
    %1673 = vmatpush2.msra.mxu0 0.0
    %1674 = vmatprep.subr.mxu0 0.0
    %1675 = vmatpush2.msra.mxu0 0.0
    %1676 = vmatprep.subr.mxu0 0.0
    %1677 = vmatpush2.msra.mxu0 0.0
    %1678 = vmatprep.subr.mxu0 0.0
    %1679 = vmatpush2.msra.mxu0 0.0
    %1680 = vmatprep.subr.mxu0 0.0
    %1681 = vmatpush2.msra.mxu0 0.0
    %1682 = vmatprep.subr.mxu0 0.0
    %1683 = vmatpush2.msra.mxu0 0.0
    %1684 = vmatprep.subr.mxu0 0.0
    %1685 = vmatpush2.msra.mxu0 0.0
    %1686 = vmatprep.subr.mxu0 0.0
    %1687 = vmatpush2.msra.mxu0 0.0
    %1688 = vmatprep.subr.mxu0 0.0
    %1689 = vmatpush2.msra.mxu0 0.0
    %1690 = vmatprep.subr.mxu0 0.0
    %1691 = vmatpush2.msra.mxu0 0.0
    %1692 = vmatprep.subr.mxu0 0.0
    %1693 = vmatpush2.msra.mxu0 0.0
    %1694 = vmatprep.subr.mxu0 0.0
    %1695 = vmatpush2.msra.mxu0 0.0
    %1696 = vmatprep.subr.mxu0 0.0
    %1697 = vmatpush2.msra.mxu0 0.0
    %1698 = vmatprep.subr.mxu0 0.0
    %1699 = vmatpush2.msra.mxu0 0.0
    %1700 = vmatprep.mubr.f32.mxu0 0.0
    %1701 = vmatmul.mubr.f32.gmra.mxu0 %v1631
    %v1702 = vpop.f32.mrf.mxu0
    %v1703 = vadd.f32 0.0, %v1702
    %v1704 = vpop.f32.mrf.mxu0
    %1705 = vmatprep.mubr.f32.mxu0 0.0
    %1706 = vmatmul.mubr.f32.gmra.mxu0 %v1634
    %v1707 = vpop.f32.mrf.mxu0
    %v1708 = vadd.f32 0.0, %v1707
    %v1709 = vpop.f32.mrf.mxu0
    %1710 = vdwg.mxu0
    %vm1711 = vcmp.eq.s32.totalorder %v665, 3
    %v1712 = vsel %vm1711, 1, 0
    %vm1713 = vcmp.eq.s32.totalorder %v1712, 1
    %v1714 = vsel %vm1713, %v655, 0.0
    %v1715 = vsel %vm1713, %v656, 0.0
    %v1716 = vsel %vm1713, %v657, 0.0
    %v1717 = vsel %vm1713, %v658, 0.0
    %v1718 = vsel %vm1713, %v659, 0.0
    %v1719 = vsel %vm760, %v1714, 0.0
    %1720 = vadd.xlane.f32.xlu0 %v1719
    %v1721 = vpop.xlane.xlu0 %1720
    %v1722 = vsel %vm760, %v1715, 0.0
    %1723 = vadd.xlane.f32.xlu0 %v1722
    %v1724 = vpop.xlane.xlu0 %1723
    %v1725 = vsel %vm760, %v1716, 0.0
    %1726 = vadd.xlane.f32.xlu0 %v1725
    %v1727 = vpop.xlane.xlu0 %1726
    %v1728 = vsel %vm760, %v1717, 0.0
    %1729 = vadd.xlane.f32.xlu0 %v1728
    %v1730 = vpop.xlane.xlu0 %1729
    %v1731 = vsel %vm760, %v1718, 0.0
    %1732 = vadd.xlane.f32.xlu0 %v1731
    %v1733 = vpop.xlane.xlu0 %1732
    %v1734 = vmul.f32 %v1721, %v57
    %v1735 = vmul.f32 %v1724, %v58
    %v1736 = vmul.f32 %v1727, %v59
    %v1737 = vmul.f32 %v1730, %v60
    %v1738 = vmul.f32 %v1733, %v61
    %v1739 = vsel %vm1713, %v661, 0.0
    %v1740 = vsel %vm1713, %v663, 0.0
    %v1741 = vsel %vm760, %v1739, 0.0
    %1742 = vadd.xlane.f32.xlu0 %v1741
    %v1743 = vpop.xlane.xlu0 %1742
    %v1744 = vsel %vm760, %v1740, 0.0
    %1745 = vadd.xlane.f32.xlu0 %v1744
    %v1746 = vpop.xlane.xlu0 %1745
    %v1747 = vmul.f32 %v69, %v1743
    %v1748 = vmul.f32 %v70, %v1746
    %1749 = vmatprep.subr.mxu0 0.0
    %1750 = vmatpush1.msra.mxu0 0.0
    %1751 = vmatprep.subr.mxu0 0.0
    %1752 = vmatpush1.msra.mxu0 0.0
    %1753 = vmatprep.subr.mxu0 0.0
    %1754 = vmatpush1.msra.mxu0 0.0
    %1755 = vmatprep.subr.mxu0 0.0
    %1756 = vmatpush1.msra.mxu0 0.0
    %1757 = vmatprep.subr.mxu0 0.0
    %1758 = vmatpush1.msra.mxu0 0.0
    %1759 = vmatprep.subr.mxu0 0.0
    %1760 = vmatpush1.msra.mxu0 0.0
    %1761 = vmatprep.subr.mxu0 0.0
    %1762 = vmatpush1.msra.mxu0 0.0
    %1763 = vmatprep.subr.mxu0 0.0
    %1764 = vmatpush1.msra.mxu0 0.0
    %1765 = vmatprep.subr.mxu0 0.0
    %1766 = vmatpush1.msra.mxu0 0.0
    %1767 = vmatprep.subr.mxu0 0.0
    %1768 = vmatpush1.msra.mxu0 0.0
    %1769 = vmatprep.subr.mxu0 0.0
    %1770 = vmatpush1.msra.mxu0 0.0
    %1771 = vmatprep.subr.mxu0 0.0
    %1772 = vmatpush1.msra.mxu0 %v1738
    %1773 = vmatprep.subr.mxu0 0.0
    %1774 = vmatpush1.msra.mxu0 %v1737
    %1775 = vmatprep.subr.mxu0 0.0
    %1776 = vmatpush1.msra.mxu0 %v1736
    %1777 = vmatprep.subr.mxu0 0.0
    %1778 = vmatpush1.msra.mxu0 %v1735
    %1779 = vmatprep.subr.mxu0 0.0
    %1780 = vmatpush1.msra.mxu0 %v1734
    %1781 = vmatprep.subr.mxu0 0.0
    %1782 = vmatpush2.msra.mxu0 0.0
    %1783 = vmatprep.subr.mxu0 0.0
    %1784 = vmatpush2.msra.mxu0 0.0
    %1785 = vmatprep.subr.mxu0 0.0
    %1786 = vmatpush2.msra.mxu0 0.0
    %1787 = vmatprep.subr.mxu0 0.0
    %1788 = vmatpush2.msra.mxu0 0.0
    %1789 = vmatprep.subr.mxu0 0.0
    %1790 = vmatpush2.msra.mxu0 0.0
    %1791 = vmatprep.subr.mxu0 0.0
    %1792 = vmatpush2.msra.mxu0 0.0
    %1793 = vmatprep.subr.mxu0 0.0
    %1794 = vmatpush2.msra.mxu0 0.0
    %1795 = vmatprep.subr.mxu0 0.0
    %1796 = vmatpush2.msra.mxu0 0.0
    %1797 = vmatprep.subr.mxu0 0.0
    %1798 = vmatpush2.msra.mxu0 0.0
    %1799 = vmatprep.subr.mxu0 0.0
    %1800 = vmatpush2.msra.mxu0 0.0
    %1801 = vmatprep.subr.mxu0 0.0
    %1802 = vmatpush2.msra.mxu0 0.0
    %1803 = vmatprep.subr.mxu0 0.0
    %1804 = vmatpush2.msra.mxu0 0.0
    %1805 = vmatprep.subr.mxu0 0.0
    %1806 = vmatpush2.msra.mxu0 0.0
    %1807 = vmatprep.subr.mxu0 0.0
    %1808 = vmatpush2.msra.mxu0 0.0
    %1809 = vmatprep.subr.mxu0 0.0
    %1810 = vmatpush2.msra.mxu0 0.0
    %1811 = vmatprep.subr.mxu0 0.0
    %1812 = vmatpush2.msra.mxu0 0.0
    %1813 = vmatprep.mubr.f32.mxu0 0.0
    %1814 = vmatmul.mubr.f32.gmra.mxu0 %v357
    %v1815 = vpop.f32.mrf.mxu0
    %v1816 = vadd.f32 %v1747, %v1815
    %v1817 = vpop.f32.mrf.mxu0
    %1818 = vmatprep.mubr.f32.mxu0 0.0
    %1819 = vmatmul.mubr.f32.gmra.mxu0 %v360
    %v1820 = vpop.f32.mrf.mxu0
    %v1821 = vadd.f32 %v1748, %v1820
    %v1822 = vpop.f32.mrf.mxu0
    %1823 = vdwg.mxu0
    %v1825 = vlaneseq
    %v1826 = vshrl.u32 %v1825, 7
    %v1827 = vsub.s32 0, %v1826
    %v1828 = vrot.slane %v1629, %v1827
    %v1831 = vsel %vm439, %v1816, 0
    %v1834 = vsel %vm439, %v1821, 0
    %1836 = vmatprep.subr.mxu0 0.0
    %1837 = vmatpush1.msra.mxu0 0.0
    %1838 = vmatprep.subr.mxu0 0.0
    %1839 = vmatpush1.msra.mxu0 0.0
    %1840 = vmatprep.subr.mxu0 0.0
    %1841 = vmatpush1.msra.mxu0 0.0
    %1842 = vmatprep.subr.mxu0 0.0
    %1843 = vmatpush1.msra.mxu0 0.0
    %1844 = vmatprep.subr.mxu0 0.0
    %1845 = vmatpush1.msra.mxu0 0.0
    %1846 = vmatprep.subr.mxu0 0.0
    %1847 = vmatpush1.msra.mxu0 0.0
    %1848 = vmatprep.subr.mxu0 0.0
    %1849 = vmatpush1.msra.mxu0 0.0
    %1850 = vmatprep.subr.mxu0 0.0
    %1851 = vmatpush1.msra.mxu0 0.0
    %1852 = vmatprep.subr.mxu0 0.0
    %1853 = vmatpush1.msra.mxu0 0.0
    %1854 = vmatprep.subr.mxu0 0.0
    %1855 = vmatpush1.msra.mxu0 0.0
    %1856 = vmatprep.subr.mxu0 0.0
    %1857 = vmatpush1.msra.mxu0 0.0
    %1858 = vmatprep.subr.mxu0 0.0
    %1859 = vmatpush1.msra.mxu0 0.0
    %1860 = vmatprep.subr.mxu0 0.0
    %1861 = vmatpush1.msra.mxu0 0.0
    %1862 = vmatprep.subr.mxu0 0.0
    %1863 = vmatpush1.msra.mxu0 0.0
    %1864 = vmatprep.subr.mxu0 0.0
    %1865 = vmatpush1.msra.mxu0 %v1708
    %1866 = vmatprep.subr.mxu0 0.0
    %1867 = vmatpush1.msra.mxu0 %v1703
    %1868 = vmatprep.subr.mxu0 0.0
    %1869 = vmatpush2.msra.mxu0 0.0
    %1870 = vmatprep.subr.mxu0 0.0
    %1871 = vmatpush2.msra.mxu0 0.0
    %1872 = vmatprep.subr.mxu0 0.0
    %1873 = vmatpush2.msra.mxu0 0.0
    %1874 = vmatprep.subr.mxu0 0.0
    %1875 = vmatpush2.msra.mxu0 0.0
    %1876 = vmatprep.subr.mxu0 0.0
    %1877 = vmatpush2.msra.mxu0 0.0
    %1878 = vmatprep.subr.mxu0 0.0
    %1879 = vmatpush2.msra.mxu0 0.0
    %1880 = vmatprep.subr.mxu0 0.0
    %1881 = vmatpush2.msra.mxu0 0.0
    %1882 = vmatprep.subr.mxu0 0.0
    %1883 = vmatpush2.msra.mxu0 0.0
    %1884 = vmatprep.subr.mxu0 0.0
    %1885 = vmatpush2.msra.mxu0 0.0
    %1886 = vmatprep.subr.mxu0 0.0
    %1887 = vmatpush2.msra.mxu0 0.0
    %1888 = vmatprep.subr.mxu0 0.0
    %1889 = vmatpush2.msra.mxu0 0.0
    %1890 = vmatprep.subr.mxu0 0.0
    %1891 = vmatpush2.msra.mxu0 0.0
    %1892 = vmatprep.subr.mxu0 0.0
    %1893 = vmatpush2.msra.mxu0 0.0
    %1894 = vmatprep.subr.mxu0 0.0
    %1895 = vmatpush2.msra.mxu0 0.0
    %1896 = vmatprep.subr.mxu0 0.0
    %1897 = vmatpush2.msra.mxu0 0.0
    %1898 = vmatprep.subr.mxu0 0.0
    %1899 = vmatpush2.msra.mxu0 0.0
    %1900 = vmatprep.mubr.f32.mxu0 0.0
    %1901 = vmatmul.mubr.f32.gmra.mxu0 %v1831
    %v1902 = vpop.f32.mrf.mxu0
    %v1903 = vadd.f32 %v1828, %v1902
    %v1904 = vpop.f32.mrf.mxu0
    %1905 = vmatprep.mubr.f32.mxu0 0.0
    %1906 = vmatmul.mubr.f32.gmra.mxu0 %v1834
    %v1907 = vpop.f32.mrf.mxu0
    %v1908 = vadd.f32 %v1828, %v1907
    %v1909 = vpop.f32.mrf.mxu0
    %1910 = vdwg.mxu0
    %v1911 = vsel %vm953, %v1903, 0.0
    %v1912 = vsel %vm953, %v1908, 0.0
    %v1913 = vadd.f32 %v1911, %v1912
    %v1914 = vrot.slane %v1913, 4
    %v1915 = vadd.f32 %v1913, %v1914
    %v1916 = vrot.slane %v1915, 2
    %v1917 = vadd.f32 %v1915, %v1916
    %v1918 = vrot.slane %v1917, 1
    %v1919 = vadd.f32 %v1917, %v1918
    %v1920 = vmul.f32 %v1919, %v963
    %v1921 = vsub.f32 %v1903, %v1920
    %v1922 = vsub.f32 %v1908, %v1920
    %v1923 = vmul.f32 %v1921, %v1921
    %v1924 = vmul.f32 %v1922, %v1922
    %v1925 = vsel %vm953, %v1923, 0.0
    %v1926 = vsel %vm953, %v1924, 0.0
    %v1927 = vadd.f32 %v1925, %v1926
    %v1928 = vrot.slane %v1927, 4
    %v1929 = vadd.f32 %v1927, %v1928
    %v1930 = vrot.slane %v1929, 2
    %v1931 = vadd.f32 %v1929, %v1930
    %v1932 = vrot.slane %v1931, 1
    %v1933 = vadd.f32 %v1931, %v1932
    %v1934 = vmul.f32 %v1933, %v963
    %v1935 = vadd.f32 %v1934, 1e-05
    %v1936 = vrsqrt.pop %v1935
    %v1937 = vmul.f32 %v1921, %v1936
    %v1938 = vmul.f32 %v1922, %v1936
    %v1939 = vmax.f32 %v1937, 0.0
    %v1940 = vmax.f32 %v1938, 0.0
    %s1941 = scalar_lea.vmem %s13, 96
    %v1942 = vld [vmem:[%s1941] sm:$0xff]
    %v1943 = vld [vmem:[%s1941 + $0x8] sm:$0xff]
    %v1944 = vld [vmem:[%s1941 + $0x10] sm:$0xff]
    %v1945 = vld [vmem:[%s1941 + $0x18] sm:$0xff]
    %s1946 = scalar_lea.vmem %s14, 3
    %v1947 = vld [vmem:[%s1946] sm:$0x1]
    %v1949 = vsel %vm953, %v1939, 0
    %v1952 = vsel %vm953, %v1940, 0
    %1954 = vmatprep.subr.mxu0 0.0
    %1955 = vmatpush1.msra.mxu0 0.0
    %1956 = vmatprep.subr.mxu0 0.0
    %1957 = vmatpush1.msra.mxu0 0.0
    %1958 = vmatprep.subr.mxu0 0.0
    %1959 = vmatpush1.msra.mxu0 0.0
    %1960 = vmatprep.subr.mxu0 0.0
    %1961 = vmatpush1.msra.mxu0 0.0
    %1962 = vmatprep.subr.mxu0 0.0
    %1963 = vmatpush1.msra.mxu0 0.0
    %1964 = vmatprep.subr.mxu0 0.0
    %1965 = vmatpush1.msra.mxu0 0.0
    %1966 = vmatprep.subr.mxu0 0.0
    %1967 = vmatpush1.msra.mxu0 0.0
    %1968 = vmatprep.subr.mxu0 0.0
    %1969 = vmatpush1.msra.mxu0 0.0
    %1970 = vmatprep.subr.mxu0 0.0
    %1971 = vmatpush1.msra.mxu0 0.0
    %1972 = vmatprep.subr.mxu0 0.0
    %1973 = vmatpush1.msra.mxu0 0.0
    %1974 = vmatprep.subr.mxu0 0.0
    %1975 = vmatpush1.msra.mxu0 0.0
    %1976 = vmatprep.subr.mxu0 0.0
    %1977 = vmatpush1.msra.mxu0 0.0
    %1978 = vmatprep.subr.mxu0 0.0
    %1979 = vmatpush1.msra.mxu0 %v1945
    %1980 = vmatprep.subr.mxu0 0.0
    %1981 = vmatpush1.msra.mxu0 %v1944
    %1982 = vmatprep.subr.mxu0 0.0
    %1983 = vmatpush1.msra.mxu0 %v1943
    %1984 = vmatprep.subr.mxu0 0.0
    %1985 = vmatpush1.msra.mxu0 %v1942
    %1986 = vmatprep.subr.mxu0 0.0
    %1987 = vmatpush2.msra.mxu0 0.0
    %1988 = vmatprep.subr.mxu0 0.0
    %1989 = vmatpush2.msra.mxu0 0.0
    %1990 = vmatprep.subr.mxu0 0.0
    %1991 = vmatpush2.msra.mxu0 0.0
    %1992 = vmatprep.subr.mxu0 0.0
    %1993 = vmatpush2.msra.mxu0 0.0
    %1994 = vmatprep.subr.mxu0 0.0
    %1995 = vmatpush2.msra.mxu0 0.0
    %1996 = vmatprep.subr.mxu0 0.0
    %1997 = vmatpush2.msra.mxu0 0.0
    %1998 = vmatprep.subr.mxu0 0.0
    %1999 = vmatpush2.msra.mxu0 0.0
    %2000 = vmatprep.subr.mxu0 0.0
    %2001 = vmatpush2.msra.mxu0 0.0
    %2002 = vmatprep.subr.mxu0 0.0
    %2003 = vmatpush2.msra.mxu0 0.0
    %2004 = vmatprep.subr.mxu0 0.0
    %2005 = vmatpush2.msra.mxu0 0.0
    %2006 = vmatprep.subr.mxu0 0.0
    %2007 = vmatpush2.msra.mxu0 0.0
    %2008 = vmatprep.subr.mxu0 0.0
    %2009 = vmatpush2.msra.mxu0 0.0
    %2010 = vmatprep.subr.mxu0 0.0
    %2011 = vmatpush2.msra.mxu0 0.0
    %2012 = vmatprep.subr.mxu0 0.0
    %2013 = vmatpush2.msra.mxu0 0.0
    %2014 = vmatprep.subr.mxu0 0.0
    %2015 = vmatpush2.msra.mxu0 0.0
    %2016 = vmatprep.subr.mxu0 0.0
    %2017 = vmatpush2.msra.mxu0 0.0
    %2018 = vmatprep.mubr.f32.mxu0 0.0
    %2019 = vmatmul.mubr.f32.gmra.mxu0 %v1949
    %v2020 = vpop.f32.mrf.mxu0
    %v2021 = vadd.f32 0.0, %v2020
    %v2022 = vpop.f32.mrf.mxu0
    %2023 = vmatprep.mubr.f32.mxu0 0.0
    %2024 = vmatmul.mubr.f32.gmra.mxu0 %v1952
    %v2025 = vpop.f32.mrf.mxu0
    %v2026 = vadd.f32 0.0, %v2025
    %v2027 = vpop.f32.mrf.mxu0
    %2028 = vdwg.mxu0
    %vm2029 = vcmp.eq.s32.totalorder %v665, 4
    %v2030 = vsel %vm2029, 1, 0
    %vm2031 = vcmp.eq.s32.totalorder %v2030, 1
    %v2032 = vsel %vm2031, %v655, 0.0
    %v2033 = vsel %vm2031, %v656, 0.0
    %v2034 = vsel %vm2031, %v657, 0.0
    %v2035 = vsel %vm2031, %v658, 0.0
    %v2036 = vsel %vm2031, %v659, 0.0
    %v2037 = vsel %vm760, %v2032, 0.0
    %2038 = vadd.xlane.f32.xlu0 %v2037
    %v2039 = vpop.xlane.xlu0 %2038
    %v2040 = vsel %vm760, %v2033, 0.0
    %2041 = vadd.xlane.f32.xlu0 %v2040
    %v2042 = vpop.xlane.xlu0 %2041
    %v2043 = vsel %vm760, %v2034, 0.0
    %2044 = vadd.xlane.f32.xlu0 %v2043
    %v2045 = vpop.xlane.xlu0 %2044
    %v2046 = vsel %vm760, %v2035, 0.0
    %2047 = vadd.xlane.f32.xlu0 %v2046
    %v2048 = vpop.xlane.xlu0 %2047
    %v2049 = vsel %vm760, %v2036, 0.0
    %2050 = vadd.xlane.f32.xlu0 %v2049
    %v2051 = vpop.xlane.xlu0 %2050
    %v2052 = vmul.f32 %v2039, %v57
    %v2053 = vmul.f32 %v2042, %v58
    %v2054 = vmul.f32 %v2045, %v59
    %v2055 = vmul.f32 %v2048, %v60
    %v2056 = vmul.f32 %v2051, %v61
    %v2057 = vsel %vm2031, %v661, 0.0
    %v2058 = vsel %vm2031, %v663, 0.0
    %v2059 = vsel %vm760, %v2057, 0.0
    %2060 = vadd.xlane.f32.xlu0 %v2059
    %v2061 = vpop.xlane.xlu0 %2060
    %v2062 = vsel %vm760, %v2058, 0.0
    %2063 = vadd.xlane.f32.xlu0 %v2062
    %v2064 = vpop.xlane.xlu0 %2063
    %v2065 = vmul.f32 %v69, %v2061
    %v2066 = vmul.f32 %v70, %v2064
    %2067 = vmatprep.subr.mxu0 0.0
    %2068 = vmatpush1.msra.mxu0 0.0
    %2069 = vmatprep.subr.mxu0 0.0
    %2070 = vmatpush1.msra.mxu0 0.0
    %2071 = vmatprep.subr.mxu0 0.0
    %2072 = vmatpush1.msra.mxu0 0.0
    %2073 = vmatprep.subr.mxu0 0.0
    %2074 = vmatpush1.msra.mxu0 0.0
    %2075 = vmatprep.subr.mxu0 0.0
    %2076 = vmatpush1.msra.mxu0 0.0
    %2077 = vmatprep.subr.mxu0 0.0
    %2078 = vmatpush1.msra.mxu0 0.0
    %2079 = vmatprep.subr.mxu0 0.0
    %2080 = vmatpush1.msra.mxu0 0.0
    %2081 = vmatprep.subr.mxu0 0.0
    %2082 = vmatpush1.msra.mxu0 0.0
    %2083 = vmatprep.subr.mxu0 0.0
    %2084 = vmatpush1.msra.mxu0 0.0
    %2085 = vmatprep.subr.mxu0 0.0
    %2086 = vmatpush1.msra.mxu0 0.0
    %2087 = vmatprep.subr.mxu0 0.0
    %2088 = vmatpush1.msra.mxu0 0.0
    %2089 = vmatprep.subr.mxu0 0.0
    %2090 = vmatpush1.msra.mxu0 %v2056
    %2091 = vmatprep.subr.mxu0 0.0
    %2092 = vmatpush1.msra.mxu0 %v2055
    %2093 = vmatprep.subr.mxu0 0.0
    %2094 = vmatpush1.msra.mxu0 %v2054
    %2095 = vmatprep.subr.mxu0 0.0
    %2096 = vmatpush1.msra.mxu0 %v2053
    %2097 = vmatprep.subr.mxu0 0.0
    %2098 = vmatpush1.msra.mxu0 %v2052
    %2099 = vmatprep.subr.mxu0 0.0
    %2100 = vmatpush2.msra.mxu0 0.0
    %2101 = vmatprep.subr.mxu0 0.0
    %2102 = vmatpush2.msra.mxu0 0.0
    %2103 = vmatprep.subr.mxu0 0.0
    %2104 = vmatpush2.msra.mxu0 0.0
    %2105 = vmatprep.subr.mxu0 0.0
    %2106 = vmatpush2.msra.mxu0 0.0
    %2107 = vmatprep.subr.mxu0 0.0
    %2108 = vmatpush2.msra.mxu0 0.0
    %2109 = vmatprep.subr.mxu0 0.0
    %2110 = vmatpush2.msra.mxu0 0.0
    %2111 = vmatprep.subr.mxu0 0.0
    %2112 = vmatpush2.msra.mxu0 0.0
    %2113 = vmatprep.subr.mxu0 0.0
    %2114 = vmatpush2.msra.mxu0 0.0
    %2115 = vmatprep.subr.mxu0 0.0
    %2116 = vmatpush2.msra.mxu0 0.0
    %2117 = vmatprep.subr.mxu0 0.0
    %2118 = vmatpush2.msra.mxu0 0.0
    %2119 = vmatprep.subr.mxu0 0.0
    %2120 = vmatpush2.msra.mxu0 0.0
    %2121 = vmatprep.subr.mxu0 0.0
    %2122 = vmatpush2.msra.mxu0 0.0
    %2123 = vmatprep.subr.mxu0 0.0
    %2124 = vmatpush2.msra.mxu0 0.0
    %2125 = vmatprep.subr.mxu0 0.0
    %2126 = vmatpush2.msra.mxu0 0.0
    %2127 = vmatprep.subr.mxu0 0.0
    %2128 = vmatpush2.msra.mxu0 0.0
    %2129 = vmatprep.subr.mxu0 0.0
    %2130 = vmatpush2.msra.mxu0 0.0
    %2131 = vmatprep.mubr.f32.mxu0 0.0
    %2132 = vmatmul.mubr.f32.gmra.mxu0 %v357
    %v2133 = vpop.f32.mrf.mxu0
    %v2134 = vadd.f32 %v2065, %v2133
    %v2135 = vpop.f32.mrf.mxu0
    %2136 = vmatprep.mubr.f32.mxu0 0.0
    %2137 = vmatmul.mubr.f32.gmra.mxu0 %v360
    %v2138 = vpop.f32.mrf.mxu0
    %v2139 = vadd.f32 %v2066, %v2138
    %v2140 = vpop.f32.mrf.mxu0
    %2141 = vdwg.mxu0
    %v2143 = vlaneseq
    %v2144 = vshrl.u32 %v2143, 7
    %v2145 = vsub.s32 0, %v2144
    %v2146 = vrot.slane %v1947, %v2145
    %v2149 = vsel %vm439, %v2134, 0
    %v2152 = vsel %vm439, %v2139, 0
    %2154 = vmatprep.subr.mxu0 0.0
    %2155 = vmatpush1.msra.mxu0 0.0
    %2156 = vmatprep.subr.mxu0 0.0
    %2157 = vmatpush1.msra.mxu0 0.0
    %2158 = vmatprep.subr.mxu0 0.0
    %2159 = vmatpush1.msra.mxu0 0.0
    %2160 = vmatprep.subr.mxu0 0.0
    %2161 = vmatpush1.msra.mxu0 0.0
    %2162 = vmatprep.subr.mxu0 0.0
    %2163 = vmatpush1.msra.mxu0 0.0
    %2164 = vmatprep.subr.mxu0 0.0
    %2165 = vmatpush1.msra.mxu0 0.0
    %2166 = vmatprep.subr.mxu0 0.0
    %2167 = vmatpush1.msra.mxu0 0.0
    %2168 = vmatprep.subr.mxu0 0.0
    %2169 = vmatpush1.msra.mxu0 0.0
    %2170 = vmatprep.subr.mxu0 0.0
    %2171 = vmatpush1.msra.mxu0 0.0
    %2172 = vmatprep.subr.mxu0 0.0
    %2173 = vmatpush1.msra.mxu0 0.0
    %2174 = vmatprep.subr.mxu0 0.0
    %2175 = vmatpush1.msra.mxu0 0.0
    %2176 = vmatprep.subr.mxu0 0.0
    %2177 = vmatpush1.msra.mxu0 0.0
    %2178 = vmatprep.subr.mxu0 0.0
    %2179 = vmatpush1.msra.mxu0 0.0
    %2180 = vmatprep.subr.mxu0 0.0
    %2181 = vmatpush1.msra.mxu0 0.0
    %2182 = vmatprep.subr.mxu0 0.0
    %2183 = vmatpush1.msra.mxu0 %v2026
    %2184 = vmatprep.subr.mxu0 0.0
    %2185 = vmatpush1.msra.mxu0 %v2021
    %2186 = vmatprep.subr.mxu0 0.0
    %2187 = vmatpush2.msra.mxu0 0.0
    %2188 = vmatprep.subr.mxu0 0.0
    %2189 = vmatpush2.msra.mxu0 0.0
    %2190 = vmatprep.subr.mxu0 0.0
    %2191 = vmatpush2.msra.mxu0 0.0
    %2192 = vmatprep.subr.mxu0 0.0
    %2193 = vmatpush2.msra.mxu0 0.0
    %2194 = vmatprep.subr.mxu0 0.0
    %2195 = vmatpush2.msra.mxu0 0.0
    %2196 = vmatprep.subr.mxu0 0.0
    %2197 = vmatpush2.msra.mxu0 0.0
    %2198 = vmatprep.subr.mxu0 0.0
    %2199 = vmatpush2.msra.mxu0 0.0
    %2200 = vmatprep.subr.mxu0 0.0
    %2201 = vmatpush2.msra.mxu0 0.0
    %2202 = vmatprep.subr.mxu0 0.0
    %2203 = vmatpush2.msra.mxu0 0.0
    %2204 = vmatprep.subr.mxu0 0.0
    %2205 = vmatpush2.msra.mxu0 0.0
    %2206 = vmatprep.subr.mxu0 0.0
    %2207 = vmatpush2.msra.mxu0 0.0
    %2208 = vmatprep.subr.mxu0 0.0
    %2209 = vmatpush2.msra.mxu0 0.0
    %2210 = vmatprep.subr.mxu0 0.0
    %2211 = vmatpush2.msra.mxu0 0.0
    %2212 = vmatprep.subr.mxu0 0.0
    %2213 = vmatpush2.msra.mxu0 0.0
    %2214 = vmatprep.subr.mxu0 0.0
    %2215 = vmatpush2.msra.mxu0 0.0
    %2216 = vmatprep.subr.mxu0 0.0
    %2217 = vmatpush2.msra.mxu0 0.0
    %2218 = vmatprep.mubr.f32.mxu0 0.0
    %2219 = vmatmul.mubr.f32.gmra.mxu0 %v2149
    %v2220 = vpop.f32.mrf.mxu0
    %v2221 = vadd.f32 %v2146, %v2220
    %v2222 = vpop.f32.mrf.mxu0
    %2223 = vmatprep.mubr.f32.mxu0 0.0
    %2224 = vmatmul.mubr.f32.gmra.mxu0 %v2152
    %v2225 = vpop.f32.mrf.mxu0
    %v2226 = vadd.f32 %v2146, %v2225
    %v2227 = vpop.f32.mrf.mxu0
    %2228 = vdwg.mxu0
    %v2229 = vadd.f32 %v2221, %v1591
    %v2230 = vadd.f32 %v2226, %v1592
    %v2231 = vadd.f32 %v1591, %v2229
    %v2232 = vadd.f32 %v1592, %v2230
    %v2233 = vsel %vm953, %v2229, 0.0
    %v2234 = vsel %vm953, %v2230, 0.0
    %v2235 = vadd.f32 %v2233, %v2234
    %v2236 = vrot.slane %v2235, 4
    %v2237 = vadd.f32 %v2235, %v2236
    %v2238 = vrot.slane %v2237, 2
    %v2239 = vadd.f32 %v2237, %v2238
    %v2240 = vrot.slane %v2239, 1
    %v2241 = vadd.f32 %v2239, %v2240
    %v2242 = vmul.f32 %v2241, %v963
    %v2243 = vsub.f32 %v2229, %v2242
    %v2244 = vsub.f32 %v2230, %v2242
    %v2245 = vmul.f32 %v2243, %v2243
    %v2246 = vmul.f32 %v2244, %v2244
    %v2247 = vsel %vm953, %v2245, 0.0
    %v2248 = vsel %vm953, %v2246, 0.0
    %v2249 = vadd.f32 %v2247, %v2248
    %v2250 = vrot.slane %v2249, 4
    %v2251 = vadd.f32 %v2249, %v2250
    %v2252 = vrot.slane %v2251, 2
    %v2253 = vadd.f32 %v2251, %v2252
    %v2254 = vrot.slane %v2253, 1
    %v2255 = vadd.f32 %v2253, %v2254
    %v2256 = vmul.f32 %v2255, %v963
    %v2257 = vadd.f32 %v2256, 1e-05
    %v2258 = vrsqrt.pop %v2257
    %v2259 = vmul.f32 %v2243, %v2258
    %v2260 = vmul.f32 %v2244, %v2258
    %v2261 = vmax.f32 %v2259, 0.0
    %v2262 = vmax.f32 %v2260, 0.0
    %s2263 = scalar_lea.vmem %s13, 128
    %v2264 = vld [vmem:[%s2263] sm:$0xff]
    %v2265 = vld [vmem:[%s2263 + $0x8] sm:$0xff]
    %v2266 = vld [vmem:[%s2263 + $0x10] sm:$0xff]
    %v2267 = vld [vmem:[%s2263 + $0x18] sm:$0xff]
    %s2268 = scalar_lea.vmem %s14, 4
    %v2269 = vld [vmem:[%s2268] sm:$0x1]
    %v2271 = vsel %vm953, %v2261, 0
    %v2274 = vsel %vm953, %v2262, 0
    %2276 = vmatprep.subr.mxu0 0.0
    %2277 = vmatpush1.msra.mxu0 0.0
    %2278 = vmatprep.subr.mxu0 0.0
    %2279 = vmatpush1.msra.mxu0 0.0
    %2280 = vmatprep.subr.mxu0 0.0
    %2281 = vmatpush1.msra.mxu0 0.0
    %2282 = vmatprep.subr.mxu0 0.0
    %2283 = vmatpush1.msra.mxu0 0.0
    %2284 = vmatprep.subr.mxu0 0.0
    %2285 = vmatpush1.msra.mxu0 0.0
    %2286 = vmatprep.subr.mxu0 0.0
    %2287 = vmatpush1.msra.mxu0 0.0
    %2288 = vmatprep.subr.mxu0 0.0
    %2289 = vmatpush1.msra.mxu0 0.0
    %2290 = vmatprep.subr.mxu0 0.0
    %2291 = vmatpush1.msra.mxu0 0.0
    %2292 = vmatprep.subr.mxu0 0.0
    %2293 = vmatpush1.msra.mxu0 0.0
    %2294 = vmatprep.subr.mxu0 0.0
    %2295 = vmatpush1.msra.mxu0 0.0
    %2296 = vmatprep.subr.mxu0 0.0
    %2297 = vmatpush1.msra.mxu0 0.0
    %2298 = vmatprep.subr.mxu0 0.0
    %2299 = vmatpush1.msra.mxu0 0.0
    %2300 = vmatprep.subr.mxu0 0.0
    %2301 = vmatpush1.msra.mxu0 %v2267
    %2302 = vmatprep.subr.mxu0 0.0
    %2303 = vmatpush1.msra.mxu0 %v2266
    %2304 = vmatprep.subr.mxu0 0.0
    %2305 = vmatpush1.msra.mxu0 %v2265
    %2306 = vmatprep.subr.mxu0 0.0
    %2307 = vmatpush1.msra.mxu0 %v2264
    %2308 = vmatprep.subr.mxu0 0.0
    %2309 = vmatpush2.msra.mxu0 0.0
    %2310 = vmatprep.subr.mxu0 0.0
    %2311 = vmatpush2.msra.mxu0 0.0
    %2312 = vmatprep.subr.mxu0 0.0
    %2313 = vmatpush2.msra.mxu0 0.0
    %2314 = vmatprep.subr.mxu0 0.0
    %2315 = vmatpush2.msra.mxu0 0.0
    %2316 = vmatprep.subr.mxu0 0.0
    %2317 = vmatpush2.msra.mxu0 0.0
    %2318 = vmatprep.subr.mxu0 0.0
    %2319 = vmatpush2.msra.mxu0 0.0
    %2320 = vmatprep.subr.mxu0 0.0
    %2321 = vmatpush2.msra.mxu0 0.0
    %2322 = vmatprep.subr.mxu0 0.0
    %2323 = vmatpush2.msra.mxu0 0.0
    %2324 = vmatprep.subr.mxu0 0.0
    %2325 = vmatpush2.msra.mxu0 0.0
    %2326 = vmatprep.subr.mxu0 0.0
    %2327 = vmatpush2.msra.mxu0 0.0
    %2328 = vmatprep.subr.mxu0 0.0
    %2329 = vmatpush2.msra.mxu0 0.0
    %2330 = vmatprep.subr.mxu0 0.0
    %2331 = vmatpush2.msra.mxu0 0.0
    %2332 = vmatprep.subr.mxu0 0.0
    %2333 = vmatpush2.msra.mxu0 0.0
    %2334 = vmatprep.subr.mxu0 0.0
    %2335 = vmatpush2.msra.mxu0 0.0
    %2336 = vmatprep.subr.mxu0 0.0
    %2337 = vmatpush2.msra.mxu0 0.0
    %2338 = vmatprep.subr.mxu0 0.0
    %2339 = vmatpush2.msra.mxu0 0.0
    %2340 = vmatprep.mubr.f32.mxu0 0.0
    %2341 = vmatmul.mubr.f32.gmra.mxu0 %v2271
    %v2342 = vpop.f32.mrf.mxu0
    %v2343 = vadd.f32 0.0, %v2342
    %v2344 = vpop.f32.mrf.mxu0
    %2345 = vmatprep.mubr.f32.mxu0 0.0
    %2346 = vmatmul.mubr.f32.gmra.mxu0 %v2274
    %v2347 = vpop.f32.mrf.mxu0
    %v2348 = vadd.f32 0.0, %v2347
    %v2349 = vpop.f32.mrf.mxu0
    %2350 = vdwg.mxu0
    %vm2351 = vcmp.eq.s32.totalorder %v665, 5
    %v2352 = vsel %vm2351, 1, 0
    %vm2353 = vcmp.eq.s32.totalorder %v2352, 1
    %v2354 = vsel %vm2353, %v655, 0.0
    %v2355 = vsel %vm2353, %v656, 0.0
    %v2356 = vsel %vm2353, %v657, 0.0
    %v2357 = vsel %vm2353, %v658, 0.0
    %v2358 = vsel %vm2353, %v659, 0.0
    %v2359 = vsel %vm760, %v2354, 0.0
    %2360 = vadd.xlane.f32.xlu0 %v2359
    %v2361 = vpop.xlane.xlu0 %2360
    %v2362 = vsel %vm760, %v2355, 0.0
    %2363 = vadd.xlane.f32.xlu0 %v2362
    %v2364 = vpop.xlane.xlu0 %2363
    %v2365 = vsel %vm760, %v2356, 0.0
    %2366 = vadd.xlane.f32.xlu0 %v2365
    %v2367 = vpop.xlane.xlu0 %2366
    %v2368 = vsel %vm760, %v2357, 0.0
    %2369 = vadd.xlane.f32.xlu0 %v2368
    %v2370 = vpop.xlane.xlu0 %2369
    %v2371 = vsel %vm760, %v2358, 0.0
    %2372 = vadd.xlane.f32.xlu0 %v2371
    %v2373 = vpop.xlane.xlu0 %2372
    %v2374 = vmul.f32 %v2361, %v57
    %v2375 = vmul.f32 %v2364, %v58
    %v2376 = vmul.f32 %v2367, %v59
    %v2377 = vmul.f32 %v2370, %v60
    %v2378 = vmul.f32 %v2373, %v61
    %v2379 = vsel %vm2353, %v661, 0.0
    %v2380 = vsel %vm2353, %v663, 0.0
    %v2381 = vsel %vm760, %v2379, 0.0
    %2382 = vadd.xlane.f32.xlu0 %v2381
    %v2383 = vpop.xlane.xlu0 %2382
    %v2384 = vsel %vm760, %v2380, 0.0
    %2385 = vadd.xlane.f32.xlu0 %v2384
    %v2386 = vpop.xlane.xlu0 %2385
    %v2387 = vmul.f32 %v69, %v2383
    %v2388 = vmul.f32 %v70, %v2386
    %2389 = vmatprep.subr.mxu0 0.0
    %2390 = vmatpush1.msra.mxu0 0.0
    %2391 = vmatprep.subr.mxu0 0.0
    %2392 = vmatpush1.msra.mxu0 0.0
    %2393 = vmatprep.subr.mxu0 0.0
    %2394 = vmatpush1.msra.mxu0 0.0
    %2395 = vmatprep.subr.mxu0 0.0
    %2396 = vmatpush1.msra.mxu0 0.0
    %2397 = vmatprep.subr.mxu0 0.0
    %2398 = vmatpush1.msra.mxu0 0.0
    %2399 = vmatprep.subr.mxu0 0.0
    %2400 = vmatpush1.msra.mxu0 0.0
    %2401 = vmatprep.subr.mxu0 0.0
    %2402 = vmatpush1.msra.mxu0 0.0
    %2403 = vmatprep.subr.mxu0 0.0
    %2404 = vmatpush1.msra.mxu0 0.0
    %2405 = vmatprep.subr.mxu0 0.0
    %2406 = vmatpush1.msra.mxu0 0.0
    %2407 = vmatprep.subr.mxu0 0.0
    %2408 = vmatpush1.msra.mxu0 0.0
    %2409 = vmatprep.subr.mxu0 0.0
    %2410 = vmatpush1.msra.mxu0 0.0
    %2411 = vmatprep.subr.mxu0 0.0
    %2412 = vmatpush1.msra.mxu0 %v2378
    %2413 = vmatprep.subr.mxu0 0.0
    %2414 = vmatpush1.msra.mxu0 %v2377
    %2415 = vmatprep.subr.mxu0 0.0
    %2416 = vmatpush1.msra.mxu0 %v2376
    %2417 = vmatprep.subr.mxu0 0.0
    %2418 = vmatpush1.msra.mxu0 %v2375
    %2419 = vmatprep.subr.mxu0 0.0
    %2420 = vmatpush1.msra.mxu0 %v2374
    %2421 = vmatprep.subr.mxu0 0.0
    %2422 = vmatpush2.msra.mxu0 0.0
    %2423 = vmatprep.subr.mxu0 0.0
    %2424 = vmatpush2.msra.mxu0 0.0
    %2425 = vmatprep.subr.mxu0 0.0
    %2426 = vmatpush2.msra.mxu0 0.0
    %2427 = vmatprep.subr.mxu0 0.0
    %2428 = vmatpush2.msra.mxu0 0.0
    %2429 = vmatprep.subr.mxu0 0.0
    %2430 = vmatpush2.msra.mxu0 0.0
    %2431 = vmatprep.subr.mxu0 0.0
    %2432 = vmatpush2.msra.mxu0 0.0
    %2433 = vmatprep.subr.mxu0 0.0
    %2434 = vmatpush2.msra.mxu0 0.0
    %2435 = vmatprep.subr.mxu0 0.0
    %2436 = vmatpush2.msra.mxu0 0.0
    %2437 = vmatprep.subr.mxu0 0.0
    %2438 = vmatpush2.msra.mxu0 0.0
    %2439 = vmatprep.subr.mxu0 0.0
    %2440 = vmatpush2.msra.mxu0 0.0
    %2441 = vmatprep.subr.mxu0 0.0
    %2442 = vmatpush2.msra.mxu0 0.0
    %2443 = vmatprep.subr.mxu0 0.0
    %2444 = vmatpush2.msra.mxu0 0.0
    %2445 = vmatprep.subr.mxu0 0.0
    %2446 = vmatpush2.msra.mxu0 0.0
    %2447 = vmatprep.subr.mxu0 0.0
    %2448 = vmatpush2.msra.mxu0 0.0
    %2449 = vmatprep.subr.mxu0 0.0
    %2450 = vmatpush2.msra.mxu0 0.0
    %2451 = vmatprep.subr.mxu0 0.0
    %2452 = vmatpush2.msra.mxu0 0.0
    %2453 = vmatprep.mubr.f32.mxu0 0.0
    %2454 = vmatmul.mubr.f32.gmra.mxu0 %v357
    %v2455 = vpop.f32.mrf.mxu0
    %v2456 = vadd.f32 %v2387, %v2455
    %v2457 = vpop.f32.mrf.mxu0
    %2458 = vmatprep.mubr.f32.mxu0 0.0
    %2459 = vmatmul.mubr.f32.gmra.mxu0 %v360
    %v2460 = vpop.f32.mrf.mxu0
    %v2461 = vadd.f32 %v2388, %v2460
    %v2462 = vpop.f32.mrf.mxu0
    %2463 = vdwg.mxu0
    %v2465 = vlaneseq
    %v2466 = vshrl.u32 %v2465, 7
    %v2467 = vsub.s32 0, %v2466
    %v2468 = vrot.slane %v2269, %v2467
    %v2471 = vsel %vm439, %v2456, 0
    %v2474 = vsel %vm439, %v2461, 0
    %2476 = vmatprep.subr.mxu0 0.0
    %2477 = vmatpush1.msra.mxu0 0.0
    %2478 = vmatprep.subr.mxu0 0.0
    %2479 = vmatpush1.msra.mxu0 0.0
    %2480 = vmatprep.subr.mxu0 0.0
    %2481 = vmatpush1.msra.mxu0 0.0
    %2482 = vmatprep.subr.mxu0 0.0
    %2483 = vmatpush1.msra.mxu0 0.0
    %2484 = vmatprep.subr.mxu0 0.0
    %2485 = vmatpush1.msra.mxu0 0.0
    %2486 = vmatprep.subr.mxu0 0.0
    %2487 = vmatpush1.msra.mxu0 0.0
    %2488 = vmatprep.subr.mxu0 0.0
    %2489 = vmatpush1.msra.mxu0 0.0
    %2490 = vmatprep.subr.mxu0 0.0
    %2491 = vmatpush1.msra.mxu0 0.0
    %2492 = vmatprep.subr.mxu0 0.0
    %2493 = vmatpush1.msra.mxu0 0.0
    %2494 = vmatprep.subr.mxu0 0.0
    %2495 = vmatpush1.msra.mxu0 0.0
    %2496 = vmatprep.subr.mxu0 0.0
    %2497 = vmatpush1.msra.mxu0 0.0
    %2498 = vmatprep.subr.mxu0 0.0
    %2499 = vmatpush1.msra.mxu0 0.0
    %2500 = vmatprep.subr.mxu0 0.0
    %2501 = vmatpush1.msra.mxu0 0.0
    %2502 = vmatprep.subr.mxu0 0.0
    %2503 = vmatpush1.msra.mxu0 0.0
    %2504 = vmatprep.subr.mxu0 0.0
    %2505 = vmatpush1.msra.mxu0 %v2348
    %2506 = vmatprep.subr.mxu0 0.0
    %2507 = vmatpush1.msra.mxu0 %v2343
    %2508 = vmatprep.subr.mxu0 0.0
    %2509 = vmatpush2.msra.mxu0 0.0
    %2510 = vmatprep.subr.mxu0 0.0
    %2511 = vmatpush2.msra.mxu0 0.0
    %2512 = vmatprep.subr.mxu0 0.0
    %2513 = vmatpush2.msra.mxu0 0.0
    %2514 = vmatprep.subr.mxu0 0.0
    %2515 = vmatpush2.msra.mxu0 0.0
    %2516 = vmatprep.subr.mxu0 0.0
    %2517 = vmatpush2.msra.mxu0 0.0
    %2518 = vmatprep.subr.mxu0 0.0
    %2519 = vmatpush2.msra.mxu0 0.0
    %2520 = vmatprep.subr.mxu0 0.0
    %2521 = vmatpush2.msra.mxu0 0.0
    %2522 = vmatprep.subr.mxu0 0.0
    %2523 = vmatpush2.msra.mxu0 0.0
    %2524 = vmatprep.subr.mxu0 0.0
    %2525 = vmatpush2.msra.mxu0 0.0
    %2526 = vmatprep.subr.mxu0 0.0
    %2527 = vmatpush2.msra.mxu0 0.0
    %2528 = vmatprep.subr.mxu0 0.0
    %2529 = vmatpush2.msra.mxu0 0.0
    %2530 = vmatprep.subr.mxu0 0.0
    %2531 = vmatpush2.msra.mxu0 0.0
    %2532 = vmatprep.subr.mxu0 0.0
    %2533 = vmatpush2.msra.mxu0 0.0
    %2534 = vmatprep.subr.mxu0 0.0
    %2535 = vmatpush2.msra.mxu0 0.0
    %2536 = vmatprep.subr.mxu0 0.0
    %2537 = vmatpush2.msra.mxu0 0.0
    %2538 = vmatprep.subr.mxu0 0.0
    %2539 = vmatpush2.msra.mxu0 0.0
    %2540 = vmatprep.mubr.f32.mxu0 0.0
    %2541 = vmatmul.mubr.f32.gmra.mxu0 %v2471
    %v2542 = vpop.f32.mrf.mxu0
    %v2543 = vadd.f32 %v2468, %v2542
    %v2544 = vpop.f32.mrf.mxu0
    %2545 = vmatprep.mubr.f32.mxu0 0.0
    %2546 = vmatmul.mubr.f32.gmra.mxu0 %v2474
    %v2547 = vpop.f32.mrf.mxu0
    %v2548 = vadd.f32 %v2468, %v2547
    %v2549 = vpop.f32.mrf.mxu0
    %2550 = vdwg.mxu0
    %v2551 = vsel %vm953, %v2543, 0.0
    %v2552 = vsel %vm953, %v2548, 0.0
    %v2553 = vadd.f32 %v2551, %v2552
    %v2554 = vrot.slane %v2553, 4
    %v2555 = vadd.f32 %v2553, %v2554
    %v2556 = vrot.slane %v2555, 2
    %v2557 = vadd.f32 %v2555, %v2556
    %v2558 = vrot.slane %v2557, 1
    %v2559 = vadd.f32 %v2557, %v2558
    %v2560 = vmul.f32 %v2559, %v963
    %v2561 = vsub.f32 %v2543, %v2560
    %v2562 = vsub.f32 %v2548, %v2560
    %v2563 = vmul.f32 %v2561, %v2561
    %v2564 = vmul.f32 %v2562, %v2562
    %v2565 = vsel %vm953, %v2563, 0.0
    %v2566 = vsel %vm953, %v2564, 0.0
    %v2567 = vadd.f32 %v2565, %v2566
    %v2568 = vrot.slane %v2567, 4
    %v2569 = vadd.f32 %v2567, %v2568
    %v2570 = vrot.slane %v2569, 2
    %v2571 = vadd.f32 %v2569, %v2570
    %v2572 = vrot.slane %v2571, 1
    %v2573 = vadd.f32 %v2571, %v2572
    %v2574 = vmul.f32 %v2573, %v963
    %v2575 = vadd.f32 %v2574, 1e-05
    %v2576 = vrsqrt.pop %v2575
    %v2577 = vmul.f32 %v2561, %v2576
    %v2578 = vmul.f32 %v2562, %v2576
    %v2579 = vmax.f32 %v2577, 0.0
    %v2580 = vmax.f32 %v2578, 0.0
    %s2581 = scalar_lea.vmem %s13, 160
    %v2582 = vld [vmem:[%s2581] sm:$0xff]
    %v2583 = vld [vmem:[%s2581 + $0x8] sm:$0xff]
    %v2584 = vld [vmem:[%s2581 + $0x10] sm:$0xff]
    %v2585 = vld [vmem:[%s2581 + $0x18] sm:$0xff]
    %s2586 = scalar_lea.vmem %s14, 5
    %v2587 = vld [vmem:[%s2586] sm:$0x1]
    %v2589 = vsel %vm953, %v2579, 0
    %v2592 = vsel %vm953, %v2580, 0
    %2594 = vmatprep.subr.mxu0 0.0
    %2595 = vmatpush1.msra.mxu0 0.0
    %2596 = vmatprep.subr.mxu0 0.0
    %2597 = vmatpush1.msra.mxu0 0.0
    %2598 = vmatprep.subr.mxu0 0.0
    %2599 = vmatpush1.msra.mxu0 0.0
    %2600 = vmatprep.subr.mxu0 0.0
    %2601 = vmatpush1.msra.mxu0 0.0
    %2602 = vmatprep.subr.mxu0 0.0
    %2603 = vmatpush1.msra.mxu0 0.0
    %2604 = vmatprep.subr.mxu0 0.0
    %2605 = vmatpush1.msra.mxu0 0.0
    %2606 = vmatprep.subr.mxu0 0.0
    %2607 = vmatpush1.msra.mxu0 0.0
    %2608 = vmatprep.subr.mxu0 0.0
    %2609 = vmatpush1.msra.mxu0 0.0
    %2610 = vmatprep.subr.mxu0 0.0
    %2611 = vmatpush1.msra.mxu0 0.0
    %2612 = vmatprep.subr.mxu0 0.0
    %2613 = vmatpush1.msra.mxu0 0.0
    %2614 = vmatprep.subr.mxu0 0.0
    %2615 = vmatpush1.msra.mxu0 0.0
    %2616 = vmatprep.subr.mxu0 0.0
    %2617 = vmatpush1.msra.mxu0 0.0
    %2618 = vmatprep.subr.mxu0 0.0
    %2619 = vmatpush1.msra.mxu0 %v2585
    %2620 = vmatprep.subr.mxu0 0.0
    %2621 = vmatpush1.msra.mxu0 %v2584
    %2622 = vmatprep.subr.mxu0 0.0
    %2623 = vmatpush1.msra.mxu0 %v2583
    %2624 = vmatprep.subr.mxu0 0.0
    %2625 = vmatpush1.msra.mxu0 %v2582
    %2626 = vmatprep.subr.mxu0 0.0
    %2627 = vmatpush2.msra.mxu0 0.0
    %2628 = vmatprep.subr.mxu0 0.0
    %2629 = vmatpush2.msra.mxu0 0.0
    %2630 = vmatprep.subr.mxu0 0.0
    %2631 = vmatpush2.msra.mxu0 0.0
    %2632 = vmatprep.subr.mxu0 0.0
    %2633 = vmatpush2.msra.mxu0 0.0
    %2634 = vmatprep.subr.mxu0 0.0
    %2635 = vmatpush2.msra.mxu0 0.0
    %2636 = vmatprep.subr.mxu0 0.0
    %2637 = vmatpush2.msra.mxu0 0.0
    %2638 = vmatprep.subr.mxu0 0.0
    %2639 = vmatpush2.msra.mxu0 0.0
    %2640 = vmatprep.subr.mxu0 0.0
    %2641 = vmatpush2.msra.mxu0 0.0
    %2642 = vmatprep.subr.mxu0 0.0
    %2643 = vmatpush2.msra.mxu0 0.0
    %2644 = vmatprep.subr.mxu0 0.0
    %2645 = vmatpush2.msra.mxu0 0.0
    %2646 = vmatprep.subr.mxu0 0.0
    %2647 = vmatpush2.msra.mxu0 0.0
    %2648 = vmatprep.subr.mxu0 0.0
    %2649 = vmatpush2.msra.mxu0 0.0
    %2650 = vmatprep.subr.mxu0 0.0
    %2651 = vmatpush2.msra.mxu0 0.0
    %2652 = vmatprep.subr.mxu0 0.0
    %2653 = vmatpush2.msra.mxu0 0.0
    %2654 = vmatprep.subr.mxu0 0.0
    %2655 = vmatpush2.msra.mxu0 0.0
    %2656 = vmatprep.subr.mxu0 0.0
    %2657 = vmatpush2.msra.mxu0 0.0
    %2658 = vmatprep.mubr.f32.mxu0 0.0
    %2659 = vmatmul.mubr.f32.gmra.mxu0 %v2589
    %v2660 = vpop.f32.mrf.mxu0
    %v2661 = vadd.f32 0.0, %v2660
    %v2662 = vpop.f32.mrf.mxu0
    %2663 = vmatprep.mubr.f32.mxu0 0.0
    %2664 = vmatmul.mubr.f32.gmra.mxu0 %v2592
    %v2665 = vpop.f32.mrf.mxu0
    %v2666 = vadd.f32 0.0, %v2665
    %v2667 = vpop.f32.mrf.mxu0
    %2668 = vdwg.mxu0
    %vm2669 = vcmp.eq.s32.totalorder %v665, 6
    %v2670 = vsel %vm2669, 1, 0
    %vm2671 = vcmp.eq.s32.totalorder %v2670, 1
    %v2672 = vsel %vm2671, %v655, 0.0
    %v2673 = vsel %vm2671, %v656, 0.0
    %v2674 = vsel %vm2671, %v657, 0.0
    %v2675 = vsel %vm2671, %v658, 0.0
    %v2676 = vsel %vm2671, %v659, 0.0
    %v2677 = vsel %vm760, %v2672, 0.0
    %2678 = vadd.xlane.f32.xlu0 %v2677
    %v2679 = vpop.xlane.xlu0 %2678
    %v2680 = vsel %vm760, %v2673, 0.0
    %2681 = vadd.xlane.f32.xlu0 %v2680
    %v2682 = vpop.xlane.xlu0 %2681
    %v2683 = vsel %vm760, %v2674, 0.0
    %2684 = vadd.xlane.f32.xlu0 %v2683
    %v2685 = vpop.xlane.xlu0 %2684
    %v2686 = vsel %vm760, %v2675, 0.0
    %2687 = vadd.xlane.f32.xlu0 %v2686
    %v2688 = vpop.xlane.xlu0 %2687
    %v2689 = vsel %vm760, %v2676, 0.0
    %2690 = vadd.xlane.f32.xlu0 %v2689
    %v2691 = vpop.xlane.xlu0 %2690
    %v2692 = vmul.f32 %v2679, %v57
    %v2693 = vmul.f32 %v2682, %v58
    %v2694 = vmul.f32 %v2685, %v59
    %v2695 = vmul.f32 %v2688, %v60
    %v2696 = vmul.f32 %v2691, %v61
    %v2697 = vsel %vm2671, %v661, 0.0
    %v2698 = vsel %vm2671, %v663, 0.0
    %v2699 = vsel %vm760, %v2697, 0.0
    %2700 = vadd.xlane.f32.xlu0 %v2699
    %v2701 = vpop.xlane.xlu0 %2700
    %v2702 = vsel %vm760, %v2698, 0.0
    %2703 = vadd.xlane.f32.xlu0 %v2702
    %v2704 = vpop.xlane.xlu0 %2703
    %v2705 = vmul.f32 %v69, %v2701
    %v2706 = vmul.f32 %v70, %v2704
    %2707 = vmatprep.subr.mxu0 0.0
    %2708 = vmatpush1.msra.mxu0 0.0
    %2709 = vmatprep.subr.mxu0 0.0
    %2710 = vmatpush1.msra.mxu0 0.0
    %2711 = vmatprep.subr.mxu0 0.0
    %2712 = vmatpush1.msra.mxu0 0.0
    %2713 = vmatprep.subr.mxu0 0.0
    %2714 = vmatpush1.msra.mxu0 0.0
    %2715 = vmatprep.subr.mxu0 0.0
    %2716 = vmatpush1.msra.mxu0 0.0
    %2717 = vmatprep.subr.mxu0 0.0
    %2718 = vmatpush1.msra.mxu0 0.0
    %2719 = vmatprep.subr.mxu0 0.0
    %2720 = vmatpush1.msra.mxu0 0.0
    %2721 = vmatprep.subr.mxu0 0.0
    %2722 = vmatpush1.msra.mxu0 0.0
    %2723 = vmatprep.subr.mxu0 0.0
    %2724 = vmatpush1.msra.mxu0 0.0
    %2725 = vmatprep.subr.mxu0 0.0
    %2726 = vmatpush1.msra.mxu0 0.0
    %2727 = vmatprep.subr.mxu0 0.0
    %2728 = vmatpush1.msra.mxu0 0.0
    %2729 = vmatprep.subr.mxu0 0.0
    %2730 = vmatpush1.msra.mxu0 %v2696
    %2731 = vmatprep.subr.mxu0 0.0
    %2732 = vmatpush1.msra.mxu0 %v2695
    %2733 = vmatprep.subr.mxu0 0.0
    %2734 = vmatpush1.msra.mxu0 %v2694
    %2735 = vmatprep.subr.mxu0 0.0
    %2736 = vmatpush1.msra.mxu0 %v2693
    %2737 = vmatprep.subr.mxu0 0.0
    %2738 = vmatpush1.msra.mxu0 %v2692
    %2739 = vmatprep.subr.mxu0 0.0
    %2740 = vmatpush2.msra.mxu0 0.0
    %2741 = vmatprep.subr.mxu0 0.0
    %2742 = vmatpush2.msra.mxu0 0.0
    %2743 = vmatprep.subr.mxu0 0.0
    %2744 = vmatpush2.msra.mxu0 0.0
    %2745 = vmatprep.subr.mxu0 0.0
    %2746 = vmatpush2.msra.mxu0 0.0
    %2747 = vmatprep.subr.mxu0 0.0
    %2748 = vmatpush2.msra.mxu0 0.0
    %2749 = vmatprep.subr.mxu0 0.0
    %2750 = vmatpush2.msra.mxu0 0.0
    %2751 = vmatprep.subr.mxu0 0.0
    %2752 = vmatpush2.msra.mxu0 0.0
    %2753 = vmatprep.subr.mxu0 0.0
    %2754 = vmatpush2.msra.mxu0 0.0
    %2755 = vmatprep.subr.mxu0 0.0
    %2756 = vmatpush2.msra.mxu0 0.0
    %2757 = vmatprep.subr.mxu0 0.0
    %2758 = vmatpush2.msra.mxu0 0.0
    %2759 = vmatprep.subr.mxu0 0.0
    %2760 = vmatpush2.msra.mxu0 0.0
    %2761 = vmatprep.subr.mxu0 0.0
    %2762 = vmatpush2.msra.mxu0 0.0
    %2763 = vmatprep.subr.mxu0 0.0
    %2764 = vmatpush2.msra.mxu0 0.0
    %2765 = vmatprep.subr.mxu0 0.0
    %2766 = vmatpush2.msra.mxu0 0.0
    %2767 = vmatprep.subr.mxu0 0.0
    %2768 = vmatpush2.msra.mxu0 0.0
    %2769 = vmatprep.subr.mxu0 0.0
    %2770 = vmatpush2.msra.mxu0 0.0
    %2771 = vmatprep.mubr.f32.mxu0 0.0
    %2772 = vmatmul.mubr.f32.gmra.mxu0 %v357
    %v2773 = vpop.f32.mrf.mxu0
    %v2774 = vadd.f32 %v2705, %v2773
    %v2775 = vpop.f32.mrf.mxu0
    %2776 = vmatprep.mubr.f32.mxu0 0.0
    %2777 = vmatmul.mubr.f32.gmra.mxu0 %v360
    %v2778 = vpop.f32.mrf.mxu0
    %v2779 = vadd.f32 %v2706, %v2778
    %v2780 = vpop.f32.mrf.mxu0
    %2781 = vdwg.mxu0
    %v2783 = vlaneseq
    %v2784 = vshrl.u32 %v2783, 7
    %v2785 = vsub.s32 0, %v2784
    %v2786 = vrot.slane %v2587, %v2785
    %v2789 = vsel %vm439, %v2774, 0
    %v2792 = vsel %vm439, %v2779, 0
    %2794 = vmatprep.subr.mxu0 0.0
    %2795 = vmatpush1.msra.mxu0 0.0
    %2796 = vmatprep.subr.mxu0 0.0
    %2797 = vmatpush1.msra.mxu0 0.0
    %2798 = vmatprep.subr.mxu0 0.0
    %2799 = vmatpush1.msra.mxu0 0.0
    %2800 = vmatprep.subr.mxu0 0.0
    %2801 = vmatpush1.msra.mxu0 0.0
    %2802 = vmatprep.subr.mxu0 0.0
    %2803 = vmatpush1.msra.mxu0 0.0
    %2804 = vmatprep.subr.mxu0 0.0
    %2805 = vmatpush1.msra.mxu0 0.0
    %2806 = vmatprep.subr.mxu0 0.0
    %2807 = vmatpush1.msra.mxu0 0.0
    %2808 = vmatprep.subr.mxu0 0.0
    %2809 = vmatpush1.msra.mxu0 0.0
    %2810 = vmatprep.subr.mxu0 0.0
    %2811 = vmatpush1.msra.mxu0 0.0
    %2812 = vmatprep.subr.mxu0 0.0
    %2813 = vmatpush1.msra.mxu0 0.0
    %2814 = vmatprep.subr.mxu0 0.0
    %2815 = vmatpush1.msra.mxu0 0.0
    %2816 = vmatprep.subr.mxu0 0.0
    %2817 = vmatpush1.msra.mxu0 0.0
    %2818 = vmatprep.subr.mxu0 0.0
    %2819 = vmatpush1.msra.mxu0 0.0
    %2820 = vmatprep.subr.mxu0 0.0
    %2821 = vmatpush1.msra.mxu0 0.0
    %2822 = vmatprep.subr.mxu0 0.0
    %2823 = vmatpush1.msra.mxu0 %v2666
    %2824 = vmatprep.subr.mxu0 0.0
    %2825 = vmatpush1.msra.mxu0 %v2661
    %2826 = vmatprep.subr.mxu0 0.0
    %2827 = vmatpush2.msra.mxu0 0.0
    %2828 = vmatprep.subr.mxu0 0.0
    %2829 = vmatpush2.msra.mxu0 0.0
    %2830 = vmatprep.subr.mxu0 0.0
    %2831 = vmatpush2.msra.mxu0 0.0
    %2832 = vmatprep.subr.mxu0 0.0
    %2833 = vmatpush2.msra.mxu0 0.0
    %2834 = vmatprep.subr.mxu0 0.0
    %2835 = vmatpush2.msra.mxu0 0.0
    %2836 = vmatprep.subr.mxu0 0.0
    %2837 = vmatpush2.msra.mxu0 0.0
    %2838 = vmatprep.subr.mxu0 0.0
    %2839 = vmatpush2.msra.mxu0 0.0
    %2840 = vmatprep.subr.mxu0 0.0
    %2841 = vmatpush2.msra.mxu0 0.0
    %2842 = vmatprep.subr.mxu0 0.0
    %2843 = vmatpush2.msra.mxu0 0.0
    %2844 = vmatprep.subr.mxu0 0.0
    %2845 = vmatpush2.msra.mxu0 0.0
    %2846 = vmatprep.subr.mxu0 0.0
    %2847 = vmatpush2.msra.mxu0 0.0
    %2848 = vmatprep.subr.mxu0 0.0
    %2849 = vmatpush2.msra.mxu0 0.0
    %2850 = vmatprep.subr.mxu0 0.0
    %2851 = vmatpush2.msra.mxu0 0.0
    %2852 = vmatprep.subr.mxu0 0.0
    %2853 = vmatpush2.msra.mxu0 0.0
    %2854 = vmatprep.subr.mxu0 0.0
    %2855 = vmatpush2.msra.mxu0 0.0
    %2856 = vmatprep.subr.mxu0 0.0
    %2857 = vmatpush2.msra.mxu0 0.0
    %2858 = vmatprep.mubr.f32.mxu0 0.0
    %2859 = vmatmul.mubr.f32.gmra.mxu0 %v2789
    %v2860 = vpop.f32.mrf.mxu0
    %v2861 = vadd.f32 %v2786, %v2860
    %v2862 = vpop.f32.mrf.mxu0
    %2863 = vmatprep.mubr.f32.mxu0 0.0
    %2864 = vmatmul.mubr.f32.gmra.mxu0 %v2792
    %v2865 = vpop.f32.mrf.mxu0
    %v2866 = vadd.f32 %v2786, %v2865
    %v2867 = vpop.f32.mrf.mxu0
    %2868 = vdwg.mxu0
    %v2869 = vadd.f32 %v2861, %v2231
    %v2870 = vadd.f32 %v2866, %v2232
    %v2871 = vadd.f32 %v2231, %v2869
    %v2872 = vadd.f32 %v2232, %v2870
    %v2873 = vsel %vm953, %v2869, 0.0
    %v2874 = vsel %vm953, %v2870, 0.0
    %v2875 = vadd.f32 %v2873, %v2874
    %v2876 = vrot.slane %v2875, 4
    %v2877 = vadd.f32 %v2875, %v2876
    %v2878 = vrot.slane %v2877, 2
    %v2879 = vadd.f32 %v2877, %v2878
    %v2880 = vrot.slane %v2879, 1
    %v2881 = vadd.f32 %v2879, %v2880
    %v2882 = vmul.f32 %v2881, %v963
    %v2883 = vsub.f32 %v2869, %v2882
    %v2884 = vsub.f32 %v2870, %v2882
    %v2885 = vmul.f32 %v2883, %v2883
    %v2886 = vmul.f32 %v2884, %v2884
    %v2887 = vsel %vm953, %v2885, 0.0
    %v2888 = vsel %vm953, %v2886, 0.0
    %v2889 = vadd.f32 %v2887, %v2888
    %v2890 = vrot.slane %v2889, 4
    %v2891 = vadd.f32 %v2889, %v2890
    %v2892 = vrot.slane %v2891, 2
    %v2893 = vadd.f32 %v2891, %v2892
    %v2894 = vrot.slane %v2893, 1
    %v2895 = vadd.f32 %v2893, %v2894
    %v2896 = vmul.f32 %v2895, %v963
    %v2897 = vadd.f32 %v2896, 1e-05
    %v2898 = vrsqrt.pop %v2897
    %v2899 = vmul.f32 %v2883, %v2898
    %v2900 = vmul.f32 %v2884, %v2898
    %v2901 = vmax.f32 %v2899, 0.0
    %v2902 = vmax.f32 %v2900, 0.0
    %s2903 = scalar_lea.vmem %s13, 192
    %v2904 = vld [vmem:[%s2903] sm:$0xff]
    %v2905 = vld [vmem:[%s2903 + $0x8] sm:$0xff]
    %v2906 = vld [vmem:[%s2903 + $0x10] sm:$0xff]
    %v2907 = vld [vmem:[%s2903 + $0x18] sm:$0xff]
    %s2908 = scalar_lea.vmem %s14, 6
    %v2909 = vld [vmem:[%s2908] sm:$0x1]
    %v2911 = vsel %vm953, %v2901, 0
    %v2914 = vsel %vm953, %v2902, 0
    %2916 = vmatprep.subr.mxu0 0.0
    %2917 = vmatpush1.msra.mxu0 0.0
    %2918 = vmatprep.subr.mxu0 0.0
    %2919 = vmatpush1.msra.mxu0 0.0
    %2920 = vmatprep.subr.mxu0 0.0
    %2921 = vmatpush1.msra.mxu0 0.0
    %2922 = vmatprep.subr.mxu0 0.0
    %2923 = vmatpush1.msra.mxu0 0.0
    %2924 = vmatprep.subr.mxu0 0.0
    %2925 = vmatpush1.msra.mxu0 0.0
    %2926 = vmatprep.subr.mxu0 0.0
    %2927 = vmatpush1.msra.mxu0 0.0
    %2928 = vmatprep.subr.mxu0 0.0
    %2929 = vmatpush1.msra.mxu0 0.0
    %2930 = vmatprep.subr.mxu0 0.0
    %2931 = vmatpush1.msra.mxu0 0.0
    %2932 = vmatprep.subr.mxu0 0.0
    %2933 = vmatpush1.msra.mxu0 0.0
    %2934 = vmatprep.subr.mxu0 0.0
    %2935 = vmatpush1.msra.mxu0 0.0
    %2936 = vmatprep.subr.mxu0 0.0
    %2937 = vmatpush1.msra.mxu0 0.0
    %2938 = vmatprep.subr.mxu0 0.0
    %2939 = vmatpush1.msra.mxu0 0.0
    %2940 = vmatprep.subr.mxu0 0.0
    %2941 = vmatpush1.msra.mxu0 %v2907
    %2942 = vmatprep.subr.mxu0 0.0
    %2943 = vmatpush1.msra.mxu0 %v2906
    %2944 = vmatprep.subr.mxu0 0.0
    %2945 = vmatpush1.msra.mxu0 %v2905
    %2946 = vmatprep.subr.mxu0 0.0
    %2947 = vmatpush1.msra.mxu0 %v2904
    %2948 = vmatprep.subr.mxu0 0.0
    %2949 = vmatpush2.msra.mxu0 0.0
    %2950 = vmatprep.subr.mxu0 0.0
    %2951 = vmatpush2.msra.mxu0 0.0
    %2952 = vmatprep.subr.mxu0 0.0
    %2953 = vmatpush2.msra.mxu0 0.0
    %2954 = vmatprep.subr.mxu0 0.0
    %2955 = vmatpush2.msra.mxu0 0.0
    %2956 = vmatprep.subr.mxu0 0.0
    %2957 = vmatpush2.msra.mxu0 0.0
    %2958 = vmatprep.subr.mxu0 0.0
    %2959 = vmatpush2.msra.mxu0 0.0
    %2960 = vmatprep.subr.mxu0 0.0
    %2961 = vmatpush2.msra.mxu0 0.0
    %2962 = vmatprep.subr.mxu0 0.0
    %2963 = vmatpush2.msra.mxu0 0.0
    %2964 = vmatprep.subr.mxu0 0.0
    %2965 = vmatpush2.msra.mxu0 0.0
    %2966 = vmatprep.subr.mxu0 0.0
    %2967 = vmatpush2.msra.mxu0 0.0
    %2968 = vmatprep.subr.mxu0 0.0
    %2969 = vmatpush2.msra.mxu0 0.0
    %2970 = vmatprep.subr.mxu0 0.0
    %2971 = vmatpush2.msra.mxu0 0.0
    %2972 = vmatprep.subr.mxu0 0.0
    %2973 = vmatpush2.msra.mxu0 0.0
    %2974 = vmatprep.subr.mxu0 0.0
    %2975 = vmatpush2.msra.mxu0 0.0
    %2976 = vmatprep.subr.mxu0 0.0
    %2977 = vmatpush2.msra.mxu0 0.0
    %2978 = vmatprep.subr.mxu0 0.0
    %2979 = vmatpush2.msra.mxu0 0.0
    %2980 = vmatprep.mubr.f32.mxu0 0.0
    %2981 = vmatmul.mubr.f32.gmra.mxu0 %v2911
    %v2982 = vpop.f32.mrf.mxu0
    %v2983 = vadd.f32 0.0, %v2982
    %v2984 = vpop.f32.mrf.mxu0
    %2985 = vmatprep.mubr.f32.mxu0 0.0
    %2986 = vmatmul.mubr.f32.gmra.mxu0 %v2914
    %v2987 = vpop.f32.mrf.mxu0
    %v2988 = vadd.f32 0.0, %v2987
    %v2989 = vpop.f32.mrf.mxu0
    %2990 = vdwg.mxu0
    %vm2991 = vcmp.eq.s32.totalorder %v665, 7
    %v2992 = vsel %vm2991, 1, 0
    %vm2993 = vcmp.eq.s32.totalorder %v2992, 1
    %v2994 = vsel %vm2993, %v655, 0.0
    %v2995 = vsel %vm2993, %v656, 0.0
    %v2996 = vsel %vm2993, %v657, 0.0
    %v2997 = vsel %vm2993, %v658, 0.0
    %v2998 = vsel %vm2993, %v659, 0.0
    %v2999 = vsel %vm760, %v2994, 0.0
    %3000 = vadd.xlane.f32.xlu0 %v2999
    %v3001 = vpop.xlane.xlu0 %3000
    %v3002 = vsel %vm760, %v2995, 0.0
    %3003 = vadd.xlane.f32.xlu0 %v3002
    %v3004 = vpop.xlane.xlu0 %3003
    %v3005 = vsel %vm760, %v2996, 0.0
    %3006 = vadd.xlane.f32.xlu0 %v3005
    %v3007 = vpop.xlane.xlu0 %3006
    %v3008 = vsel %vm760, %v2997, 0.0
    %3009 = vadd.xlane.f32.xlu0 %v3008
    %v3010 = vpop.xlane.xlu0 %3009
    %v3011 = vsel %vm760, %v2998, 0.0
    %3012 = vadd.xlane.f32.xlu0 %v3011
    %v3013 = vpop.xlane.xlu0 %3012
    %v3014 = vmul.f32 %v3001, %v57
    %v3015 = vmul.f32 %v3004, %v58
    %v3016 = vmul.f32 %v3007, %v59
    %v3017 = vmul.f32 %v3010, %v60
    %v3018 = vmul.f32 %v3013, %v61
    %v3019 = vsel %vm2993, %v661, 0.0
    %v3020 = vsel %vm2993, %v663, 0.0
    %v3021 = vsel %vm760, %v3019, 0.0
    %3022 = vadd.xlane.f32.xlu0 %v3021
    %v3023 = vpop.xlane.xlu0 %3022
    %v3024 = vsel %vm760, %v3020, 0.0
    %3025 = vadd.xlane.f32.xlu0 %v3024
    %v3026 = vpop.xlane.xlu0 %3025
    %v3027 = vmul.f32 %v69, %v3023
    %v3028 = vmul.f32 %v70, %v3026
    %3029 = vmatprep.subr.mxu0 0.0
    %3030 = vmatpush1.msra.mxu0 0.0
    %3031 = vmatprep.subr.mxu0 0.0
    %3032 = vmatpush1.msra.mxu0 0.0
    %3033 = vmatprep.subr.mxu0 0.0
    %3034 = vmatpush1.msra.mxu0 0.0
    %3035 = vmatprep.subr.mxu0 0.0
    %3036 = vmatpush1.msra.mxu0 0.0
    %3037 = vmatprep.subr.mxu0 0.0
    %3038 = vmatpush1.msra.mxu0 0.0
    %3039 = vmatprep.subr.mxu0 0.0
    %3040 = vmatpush1.msra.mxu0 0.0
    %3041 = vmatprep.subr.mxu0 0.0
    %3042 = vmatpush1.msra.mxu0 0.0
    %3043 = vmatprep.subr.mxu0 0.0
    %3044 = vmatpush1.msra.mxu0 0.0
    %3045 = vmatprep.subr.mxu0 0.0
    %3046 = vmatpush1.msra.mxu0 0.0
    %3047 = vmatprep.subr.mxu0 0.0
    %3048 = vmatpush1.msra.mxu0 0.0
    %3049 = vmatprep.subr.mxu0 0.0
    %3050 = vmatpush1.msra.mxu0 0.0
    %3051 = vmatprep.subr.mxu0 0.0
    %3052 = vmatpush1.msra.mxu0 %v3018
    %3053 = vmatprep.subr.mxu0 0.0
    %3054 = vmatpush1.msra.mxu0 %v3017
    %3055 = vmatprep.subr.mxu0 0.0
    %3056 = vmatpush1.msra.mxu0 %v3016
    %3057 = vmatprep.subr.mxu0 0.0
    %3058 = vmatpush1.msra.mxu0 %v3015
    %3059 = vmatprep.subr.mxu0 0.0
    %3060 = vmatpush1.msra.mxu0 %v3014
    %3061 = vmatprep.subr.mxu0 0.0
    %3062 = vmatpush2.msra.mxu0 0.0
    %3063 = vmatprep.subr.mxu0 0.0
    %3064 = vmatpush2.msra.mxu0 0.0
    %3065 = vmatprep.subr.mxu0 0.0
    %3066 = vmatpush2.msra.mxu0 0.0
    %3067 = vmatprep.subr.mxu0 0.0
    %3068 = vmatpush2.msra.mxu0 0.0
    %3069 = vmatprep.subr.mxu0 0.0
    %3070 = vmatpush2.msra.mxu0 0.0
    %3071 = vmatprep.subr.mxu0 0.0
    %3072 = vmatpush2.msra.mxu0 0.0
    %3073 = vmatprep.subr.mxu0 0.0
    %3074 = vmatpush2.msra.mxu0 0.0
    %3075 = vmatprep.subr.mxu0 0.0
    %3076 = vmatpush2.msra.mxu0 0.0
    %3077 = vmatprep.subr.mxu0 0.0
    %3078 = vmatpush2.msra.mxu0 0.0
    %3079 = vmatprep.subr.mxu0 0.0
    %3080 = vmatpush2.msra.mxu0 0.0
    %3081 = vmatprep.subr.mxu0 0.0
    %3082 = vmatpush2.msra.mxu0 0.0
    %3083 = vmatprep.subr.mxu0 0.0
    %3084 = vmatpush2.msra.mxu0 0.0
    %3085 = vmatprep.subr.mxu0 0.0
    %3086 = vmatpush2.msra.mxu0 0.0
    %3087 = vmatprep.subr.mxu0 0.0
    %3088 = vmatpush2.msra.mxu0 0.0
    %3089 = vmatprep.subr.mxu0 0.0
    %3090 = vmatpush2.msra.mxu0 0.0
    %3091 = vmatprep.subr.mxu0 0.0
    %3092 = vmatpush2.msra.mxu0 0.0
    %3093 = vmatprep.mubr.f32.mxu0 0.0
    %3094 = vmatmul.mubr.f32.gmra.mxu0 %v357
    %v3095 = vpop.f32.mrf.mxu0
    %v3096 = vadd.f32 %v3027, %v3095
    %v3097 = vpop.f32.mrf.mxu0
    %3098 = vmatprep.mubr.f32.mxu0 0.0
    %3099 = vmatmul.mubr.f32.gmra.mxu0 %v360
    %v3100 = vpop.f32.mrf.mxu0
    %v3101 = vadd.f32 %v3028, %v3100
    %v3102 = vpop.f32.mrf.mxu0
    %3103 = vdwg.mxu0
    %v3105 = vlaneseq
    %v3106 = vshrl.u32 %v3105, 7
    %v3107 = vsub.s32 0, %v3106
    %v3108 = vrot.slane %v2909, %v3107
    %v3111 = vsel %vm439, %v3096, 0
    %v3114 = vsel %vm439, %v3101, 0
    %3116 = vmatprep.subr.mxu0 0.0
    %3117 = vmatpush1.msra.mxu0 0.0
    %3118 = vmatprep.subr.mxu0 0.0
    %3119 = vmatpush1.msra.mxu0 0.0
    %3120 = vmatprep.subr.mxu0 0.0
    %3121 = vmatpush1.msra.mxu0 0.0
    %3122 = vmatprep.subr.mxu0 0.0
    %3123 = vmatpush1.msra.mxu0 0.0
    %3124 = vmatprep.subr.mxu0 0.0
    %3125 = vmatpush1.msra.mxu0 0.0
    %3126 = vmatprep.subr.mxu0 0.0
    %3127 = vmatpush1.msra.mxu0 0.0
    %3128 = vmatprep.subr.mxu0 0.0
    %3129 = vmatpush1.msra.mxu0 0.0
    %3130 = vmatprep.subr.mxu0 0.0
    %3131 = vmatpush1.msra.mxu0 0.0
    %3132 = vmatprep.subr.mxu0 0.0
    %3133 = vmatpush1.msra.mxu0 0.0
    %3134 = vmatprep.subr.mxu0 0.0
    %3135 = vmatpush1.msra.mxu0 0.0
    %3136 = vmatprep.subr.mxu0 0.0
    %3137 = vmatpush1.msra.mxu0 0.0
    %3138 = vmatprep.subr.mxu0 0.0
    %3139 = vmatpush1.msra.mxu0 0.0
    %3140 = vmatprep.subr.mxu0 0.0
    %3141 = vmatpush1.msra.mxu0 0.0
    %3142 = vmatprep.subr.mxu0 0.0
    %3143 = vmatpush1.msra.mxu0 0.0
    %3144 = vmatprep.subr.mxu0 0.0
    %3145 = vmatpush1.msra.mxu0 %v2988
    %3146 = vmatprep.subr.mxu0 0.0
    %3147 = vmatpush1.msra.mxu0 %v2983
    %3148 = vmatprep.subr.mxu0 0.0
    %3149 = vmatpush2.msra.mxu0 0.0
    %3150 = vmatprep.subr.mxu0 0.0
    %3151 = vmatpush2.msra.mxu0 0.0
    %3152 = vmatprep.subr.mxu0 0.0
    %3153 = vmatpush2.msra.mxu0 0.0
    %3154 = vmatprep.subr.mxu0 0.0
    %3155 = vmatpush2.msra.mxu0 0.0
    %3156 = vmatprep.subr.mxu0 0.0
    %3157 = vmatpush2.msra.mxu0 0.0
    %3158 = vmatprep.subr.mxu0 0.0
    %3159 = vmatpush2.msra.mxu0 0.0
    %3160 = vmatprep.subr.mxu0 0.0
    %3161 = vmatpush2.msra.mxu0 0.0
    %3162 = vmatprep.subr.mxu0 0.0
    %3163 = vmatpush2.msra.mxu0 0.0
    %3164 = vmatprep.subr.mxu0 0.0
    %3165 = vmatpush2.msra.mxu0 0.0
    %3166 = vmatprep.subr.mxu0 0.0
    %3167 = vmatpush2.msra.mxu0 0.0
    %3168 = vmatprep.subr.mxu0 0.0
    %3169 = vmatpush2.msra.mxu0 0.0
    %3170 = vmatprep.subr.mxu0 0.0
    %3171 = vmatpush2.msra.mxu0 0.0
    %3172 = vmatprep.subr.mxu0 0.0
    %3173 = vmatpush2.msra.mxu0 0.0
    %3174 = vmatprep.subr.mxu0 0.0
    %3175 = vmatpush2.msra.mxu0 0.0
    %3176 = vmatprep.subr.mxu0 0.0
    %3177 = vmatpush2.msra.mxu0 0.0
    %3178 = vmatprep.subr.mxu0 0.0
    %3179 = vmatpush2.msra.mxu0 0.0
    %3180 = vmatprep.mubr.f32.mxu0 0.0
    %3181 = vmatmul.mubr.f32.gmra.mxu0 %v3111
    %v3182 = vpop.f32.mrf.mxu0
    %v3183 = vadd.f32 %v3108, %v3182
    %v3184 = vpop.f32.mrf.mxu0
    %3185 = vmatprep.mubr.f32.mxu0 0.0
    %3186 = vmatmul.mubr.f32.gmra.mxu0 %v3114
    %v3187 = vpop.f32.mrf.mxu0
    %v3188 = vadd.f32 %v3108, %v3187
    %v3189 = vpop.f32.mrf.mxu0
    %3190 = vdwg.mxu0
    %v3191 = vsel %vm953, %v3183, 0.0
    %v3192 = vsel %vm953, %v3188, 0.0
    %v3193 = vadd.f32 %v3191, %v3192
    %v3194 = vrot.slane %v3193, 4
    %v3195 = vadd.f32 %v3193, %v3194
    %v3196 = vrot.slane %v3195, 2
    %v3197 = vadd.f32 %v3195, %v3196
    %v3198 = vrot.slane %v3197, 1
    %v3199 = vadd.f32 %v3197, %v3198
    %v3200 = vmul.f32 %v3199, %v963
    %v3201 = vsub.f32 %v3183, %v3200
    %v3202 = vsub.f32 %v3188, %v3200
    %v3203 = vmul.f32 %v3201, %v3201
    %v3204 = vmul.f32 %v3202, %v3202
    %v3205 = vsel %vm953, %v3203, 0.0
    %v3206 = vsel %vm953, %v3204, 0.0
    %v3207 = vadd.f32 %v3205, %v3206
    %v3208 = vrot.slane %v3207, 4
    %v3209 = vadd.f32 %v3207, %v3208
    %v3210 = vrot.slane %v3209, 2
    %v3211 = vadd.f32 %v3209, %v3210
    %v3212 = vrot.slane %v3211, 1
    %v3213 = vadd.f32 %v3211, %v3212
    %v3214 = vmul.f32 %v3213, %v963
    %v3215 = vadd.f32 %v3214, 1e-05
    %v3216 = vrsqrt.pop %v3215
    %v3217 = vmul.f32 %v3201, %v3216
    %v3218 = vmul.f32 %v3202, %v3216
    %v3219 = vmax.f32 %v3217, 0.0
    %v3220 = vmax.f32 %v3218, 0.0
    %s3221 = scalar_lea.vmem %s13, 224
    %v3222 = vld [vmem:[%s3221] sm:$0xff]
    %v3223 = vld [vmem:[%s3221 + $0x8] sm:$0xff]
    %v3224 = vld [vmem:[%s3221 + $0x10] sm:$0xff]
    %v3225 = vld [vmem:[%s3221 + $0x18] sm:$0xff]
    %s3226 = scalar_lea.vmem %s14, 7
    %v3227 = vld [vmem:[%s3226] sm:$0x1]
    %v3229 = vsel %vm953, %v3219, 0
    %v3232 = vsel %vm953, %v3220, 0
    %3234 = vmatprep.subr.mxu0 0.0
    %3235 = vmatpush1.msra.mxu0 0.0
    %3236 = vmatprep.subr.mxu0 0.0
    %3237 = vmatpush1.msra.mxu0 0.0
    %3238 = vmatprep.subr.mxu0 0.0
    %3239 = vmatpush1.msra.mxu0 0.0
    %3240 = vmatprep.subr.mxu0 0.0
    %3241 = vmatpush1.msra.mxu0 0.0
    %3242 = vmatprep.subr.mxu0 0.0
    %3243 = vmatpush1.msra.mxu0 0.0
    %3244 = vmatprep.subr.mxu0 0.0
    %3245 = vmatpush1.msra.mxu0 0.0
    %3246 = vmatprep.subr.mxu0 0.0
    %3247 = vmatpush1.msra.mxu0 0.0
    %3248 = vmatprep.subr.mxu0 0.0
    %3249 = vmatpush1.msra.mxu0 0.0
    %3250 = vmatprep.subr.mxu0 0.0
    %3251 = vmatpush1.msra.mxu0 0.0
    %3252 = vmatprep.subr.mxu0 0.0
    %3253 = vmatpush1.msra.mxu0 0.0
    %3254 = vmatprep.subr.mxu0 0.0
    %3255 = vmatpush1.msra.mxu0 0.0
    %3256 = vmatprep.subr.mxu0 0.0
    %3257 = vmatpush1.msra.mxu0 0.0
    %3258 = vmatprep.subr.mxu0 0.0
    %3259 = vmatpush1.msra.mxu0 %v3225
    %3260 = vmatprep.subr.mxu0 0.0
    %3261 = vmatpush1.msra.mxu0 %v3224
    %3262 = vmatprep.subr.mxu0 0.0
    %3263 = vmatpush1.msra.mxu0 %v3223
    %3264 = vmatprep.subr.mxu0 0.0
    %3265 = vmatpush1.msra.mxu0 %v3222
    %3266 = vmatprep.subr.mxu0 0.0
    %3267 = vmatpush2.msra.mxu0 0.0
    %3268 = vmatprep.subr.mxu0 0.0
    %3269 = vmatpush2.msra.mxu0 0.0
    %3270 = vmatprep.subr.mxu0 0.0
    %3271 = vmatpush2.msra.mxu0 0.0
    %3272 = vmatprep.subr.mxu0 0.0
    %3273 = vmatpush2.msra.mxu0 0.0
    %3274 = vmatprep.subr.mxu0 0.0
    %3275 = vmatpush2.msra.mxu0 0.0
    %3276 = vmatprep.subr.mxu0 0.0
    %3277 = vmatpush2.msra.mxu0 0.0
    %3278 = vmatprep.subr.mxu0 0.0
    %3279 = vmatpush2.msra.mxu0 0.0
    %3280 = vmatprep.subr.mxu0 0.0
    %3281 = vmatpush2.msra.mxu0 0.0
    %3282 = vmatprep.subr.mxu0 0.0
    %3283 = vmatpush2.msra.mxu0 0.0
    %3284 = vmatprep.subr.mxu0 0.0
    %3285 = vmatpush2.msra.mxu0 0.0
    %3286 = vmatprep.subr.mxu0 0.0
    %3287 = vmatpush2.msra.mxu0 0.0
    %3288 = vmatprep.subr.mxu0 0.0
    %3289 = vmatpush2.msra.mxu0 0.0
    %3290 = vmatprep.subr.mxu0 0.0
    %3291 = vmatpush2.msra.mxu0 0.0
    %3292 = vmatprep.subr.mxu0 0.0
    %3293 = vmatpush2.msra.mxu0 0.0
    %3294 = vmatprep.subr.mxu0 0.0
    %3295 = vmatpush2.msra.mxu0 0.0
    %3296 = vmatprep.subr.mxu0 0.0
    %3297 = vmatpush2.msra.mxu0 0.0
    %3298 = vmatprep.mubr.f32.mxu0 0.0
    %3299 = vmatmul.mubr.f32.gmra.mxu0 %v3229
    %v3300 = vpop.f32.mrf.mxu0
    %v3301 = vadd.f32 0.0, %v3300
    %v3302 = vpop.f32.mrf.mxu0
    %3303 = vmatprep.mubr.f32.mxu0 0.0
    %3304 = vmatmul.mubr.f32.gmra.mxu0 %v3232
    %v3305 = vpop.f32.mrf.mxu0
    %v3306 = vadd.f32 0.0, %v3305
    %v3307 = vpop.f32.mrf.mxu0
    %3308 = vdwg.mxu0
    %vm3309 = vcmp.eq.s32.totalorder %v665, 8
    %v3310 = vsel %vm3309, 1, 0
    %vm3311 = vcmp.eq.s32.totalorder %v3310, 1
    %v3312 = vsel %vm3311, %v655, 0.0
    %v3313 = vsel %vm3311, %v656, 0.0
    %v3314 = vsel %vm3311, %v657, 0.0
    %v3315 = vsel %vm3311, %v658, 0.0
    %v3316 = vsel %vm3311, %v659, 0.0
    %v3317 = vsel %vm760, %v3312, 0.0
    %3318 = vadd.xlane.f32.xlu0 %v3317
    %v3319 = vpop.xlane.xlu0 %3318
    %v3320 = vsel %vm760, %v3313, 0.0
    %3321 = vadd.xlane.f32.xlu0 %v3320
    %v3322 = vpop.xlane.xlu0 %3321
    %v3323 = vsel %vm760, %v3314, 0.0
    %3324 = vadd.xlane.f32.xlu0 %v3323
    %v3325 = vpop.xlane.xlu0 %3324
    %v3326 = vsel %vm760, %v3315, 0.0
    %3327 = vadd.xlane.f32.xlu0 %v3326
    %v3328 = vpop.xlane.xlu0 %3327
    %v3329 = vsel %vm760, %v3316, 0.0
    %3330 = vadd.xlane.f32.xlu0 %v3329
    %v3331 = vpop.xlane.xlu0 %3330
    %v3332 = vmul.f32 %v3319, %v57
    %v3333 = vmul.f32 %v3322, %v58
    %v3334 = vmul.f32 %v3325, %v59
    %v3335 = vmul.f32 %v3328, %v60
    %v3336 = vmul.f32 %v3331, %v61
    %v3337 = vsel %vm3311, %v661, 0.0
    %v3338 = vsel %vm3311, %v663, 0.0
    %v3339 = vsel %vm760, %v3337, 0.0
    %3340 = vadd.xlane.f32.xlu0 %v3339
    %v3341 = vpop.xlane.xlu0 %3340
    %v3342 = vsel %vm760, %v3338, 0.0
    %3343 = vadd.xlane.f32.xlu0 %v3342
    %v3344 = vpop.xlane.xlu0 %3343
    %v3345 = vmul.f32 %v69, %v3341
    %v3346 = vmul.f32 %v70, %v3344
    %3347 = vmatprep.subr.mxu0 0.0
    %3348 = vmatpush1.msra.mxu0 0.0
    %3349 = vmatprep.subr.mxu0 0.0
    %3350 = vmatpush1.msra.mxu0 0.0
    %3351 = vmatprep.subr.mxu0 0.0
    %3352 = vmatpush1.msra.mxu0 0.0
    %3353 = vmatprep.subr.mxu0 0.0
    %3354 = vmatpush1.msra.mxu0 0.0
    %3355 = vmatprep.subr.mxu0 0.0
    %3356 = vmatpush1.msra.mxu0 0.0
    %3357 = vmatprep.subr.mxu0 0.0
    %3358 = vmatpush1.msra.mxu0 0.0
    %3359 = vmatprep.subr.mxu0 0.0
    %3360 = vmatpush1.msra.mxu0 0.0
    %3361 = vmatprep.subr.mxu0 0.0
    %3362 = vmatpush1.msra.mxu0 0.0
    %3363 = vmatprep.subr.mxu0 0.0
    %3364 = vmatpush1.msra.mxu0 0.0
    %3365 = vmatprep.subr.mxu0 0.0
    %3366 = vmatpush1.msra.mxu0 0.0
    %3367 = vmatprep.subr.mxu0 0.0
    %3368 = vmatpush1.msra.mxu0 0.0
    %3369 = vmatprep.subr.mxu0 0.0
    %3370 = vmatpush1.msra.mxu0 %v3336
    %3371 = vmatprep.subr.mxu0 0.0
    %3372 = vmatpush1.msra.mxu0 %v3335
    %3373 = vmatprep.subr.mxu0 0.0
    %3374 = vmatpush1.msra.mxu0 %v3334
    %3375 = vmatprep.subr.mxu0 0.0
    %3376 = vmatpush1.msra.mxu0 %v3333
    %3377 = vmatprep.subr.mxu0 0.0
    %3378 = vmatpush1.msra.mxu0 %v3332
    %3379 = vmatprep.subr.mxu0 0.0
    %3380 = vmatpush2.msra.mxu0 0.0
    %3381 = vmatprep.subr.mxu0 0.0
    %3382 = vmatpush2.msra.mxu0 0.0
    %3383 = vmatprep.subr.mxu0 0.0
    %3384 = vmatpush2.msra.mxu0 0.0
    %3385 = vmatprep.subr.mxu0 0.0
    %3386 = vmatpush2.msra.mxu0 0.0
    %3387 = vmatprep.subr.mxu0 0.0
    %3388 = vmatpush2.msra.mxu0 0.0
    %3389 = vmatprep.subr.mxu0 0.0
    %3390 = vmatpush2.msra.mxu0 0.0
    %3391 = vmatprep.subr.mxu0 0.0
    %3392 = vmatpush2.msra.mxu0 0.0
    %3393 = vmatprep.subr.mxu0 0.0
    %3394 = vmatpush2.msra.mxu0 0.0
    %3395 = vmatprep.subr.mxu0 0.0
    %3396 = vmatpush2.msra.mxu0 0.0
    %3397 = vmatprep.subr.mxu0 0.0
    %3398 = vmatpush2.msra.mxu0 0.0
    %3399 = vmatprep.subr.mxu0 0.0
    %3400 = vmatpush2.msra.mxu0 0.0
    %3401 = vmatprep.subr.mxu0 0.0
    %3402 = vmatpush2.msra.mxu0 0.0
    %3403 = vmatprep.subr.mxu0 0.0
    %3404 = vmatpush2.msra.mxu0 0.0
    %3405 = vmatprep.subr.mxu0 0.0
    %3406 = vmatpush2.msra.mxu0 0.0
    %3407 = vmatprep.subr.mxu0 0.0
    %3408 = vmatpush2.msra.mxu0 0.0
    %3409 = vmatprep.subr.mxu0 0.0
    %3410 = vmatpush2.msra.mxu0 0.0
    %3411 = vmatprep.mubr.f32.mxu0 0.0
    %3412 = vmatmul.mubr.f32.gmra.mxu0 %v357
    %v3413 = vpop.f32.mrf.mxu0
    %v3414 = vadd.f32 %v3345, %v3413
    %v3415 = vpop.f32.mrf.mxu0
    %3416 = vmatprep.mubr.f32.mxu0 0.0
    %3417 = vmatmul.mubr.f32.gmra.mxu0 %v360
    %v3418 = vpop.f32.mrf.mxu0
    %v3419 = vadd.f32 %v3346, %v3418
    %v3420 = vpop.f32.mrf.mxu0
    %3421 = vdwg.mxu0
    %v3423 = vlaneseq
    %v3424 = vshrl.u32 %v3423, 7
    %v3425 = vsub.s32 0, %v3424
    %v3426 = vrot.slane %v3227, %v3425
    %v3429 = vsel %vm439, %v3414, 0
    %v3432 = vsel %vm439, %v3419, 0
    %3434 = vmatprep.subr.mxu0 0.0
    %3435 = vmatpush1.msra.mxu0 0.0
    %3436 = vmatprep.subr.mxu0 0.0
    %3437 = vmatpush1.msra.mxu0 0.0
    %3438 = vmatprep.subr.mxu0 0.0
    %3439 = vmatpush1.msra.mxu0 0.0
    %3440 = vmatprep.subr.mxu0 0.0
    %3441 = vmatpush1.msra.mxu0 0.0
    %3442 = vmatprep.subr.mxu0 0.0
    %3443 = vmatpush1.msra.mxu0 0.0
    %3444 = vmatprep.subr.mxu0 0.0
    %3445 = vmatpush1.msra.mxu0 0.0
    %3446 = vmatprep.subr.mxu0 0.0
    %3447 = vmatpush1.msra.mxu0 0.0
    %3448 = vmatprep.subr.mxu0 0.0
    %3449 = vmatpush1.msra.mxu0 0.0
    %3450 = vmatprep.subr.mxu0 0.0
    %3451 = vmatpush1.msra.mxu0 0.0
    %3452 = vmatprep.subr.mxu0 0.0
    %3453 = vmatpush1.msra.mxu0 0.0
    %3454 = vmatprep.subr.mxu0 0.0
    %3455 = vmatpush1.msra.mxu0 0.0
    %3456 = vmatprep.subr.mxu0 0.0
    %3457 = vmatpush1.msra.mxu0 0.0
    %3458 = vmatprep.subr.mxu0 0.0
    %3459 = vmatpush1.msra.mxu0 0.0
    %3460 = vmatprep.subr.mxu0 0.0
    %3461 = vmatpush1.msra.mxu0 0.0
    %3462 = vmatprep.subr.mxu0 0.0
    %3463 = vmatpush1.msra.mxu0 %v3306
    %3464 = vmatprep.subr.mxu0 0.0
    %3465 = vmatpush1.msra.mxu0 %v3301
    %3466 = vmatprep.subr.mxu0 0.0
    %3467 = vmatpush2.msra.mxu0 0.0
    %3468 = vmatprep.subr.mxu0 0.0
    %3469 = vmatpush2.msra.mxu0 0.0
    %3470 = vmatprep.subr.mxu0 0.0
    %3471 = vmatpush2.msra.mxu0 0.0
    %3472 = vmatprep.subr.mxu0 0.0
    %3473 = vmatpush2.msra.mxu0 0.0
    %3474 = vmatprep.subr.mxu0 0.0
    %3475 = vmatpush2.msra.mxu0 0.0
    %3476 = vmatprep.subr.mxu0 0.0
    %3477 = vmatpush2.msra.mxu0 0.0
    %3478 = vmatprep.subr.mxu0 0.0
    %3479 = vmatpush2.msra.mxu0 0.0
    %3480 = vmatprep.subr.mxu0 0.0
    %3481 = vmatpush2.msra.mxu0 0.0
    %3482 = vmatprep.subr.mxu0 0.0
    %3483 = vmatpush2.msra.mxu0 0.0
    %3484 = vmatprep.subr.mxu0 0.0
    %3485 = vmatpush2.msra.mxu0 0.0
    %3486 = vmatprep.subr.mxu0 0.0
    %3487 = vmatpush2.msra.mxu0 0.0
    %3488 = vmatprep.subr.mxu0 0.0
    %3489 = vmatpush2.msra.mxu0 0.0
    %3490 = vmatprep.subr.mxu0 0.0
    %3491 = vmatpush2.msra.mxu0 0.0
    %3492 = vmatprep.subr.mxu0 0.0
    %3493 = vmatpush2.msra.mxu0 0.0
    %3494 = vmatprep.subr.mxu0 0.0
    %3495 = vmatpush2.msra.mxu0 0.0
    %3496 = vmatprep.subr.mxu0 0.0
    %3497 = vmatpush2.msra.mxu0 0.0
    %3498 = vmatprep.mubr.f32.mxu0 0.0
    %3499 = vmatmul.mubr.f32.gmra.mxu0 %v3429
    %v3500 = vpop.f32.mrf.mxu0
    %v3501 = vadd.f32 %v3426, %v3500
    %v3502 = vpop.f32.mrf.mxu0
    %3503 = vmatprep.mubr.f32.mxu0 0.0
    %3504 = vmatmul.mubr.f32.gmra.mxu0 %v3432
    %v3505 = vpop.f32.mrf.mxu0
    %v3506 = vadd.f32 %v3426, %v3505
    %v3507 = vpop.f32.mrf.mxu0
    %3508 = vdwg.mxu0
    %v3509 = vadd.f32 %v3501, %v2871
    %v3510 = vadd.f32 %v3506, %v2872
    %v3511 = vadd.f32 %v2871, %v3509
    %v3512 = vadd.f32 %v2872, %v3510
    %v3513 = vsel %vm953, %v3509, 0.0
    %v3514 = vsel %vm953, %v3510, 0.0
    %v3515 = vadd.f32 %v3513, %v3514
    %v3516 = vrot.slane %v3515, 4
    %v3517 = vadd.f32 %v3515, %v3516
    %v3518 = vrot.slane %v3517, 2
    %v3519 = vadd.f32 %v3517, %v3518
    %v3520 = vrot.slane %v3519, 1
    %v3521 = vadd.f32 %v3519, %v3520
    %v3522 = vmul.f32 %v3521, %v963
    %v3523 = vsub.f32 %v3509, %v3522
    %v3524 = vsub.f32 %v3510, %v3522
    %v3525 = vmul.f32 %v3523, %v3523
    %v3526 = vmul.f32 %v3524, %v3524
    %v3527 = vsel %vm953, %v3525, 0.0
    %v3528 = vsel %vm953, %v3526, 0.0
    %v3529 = vadd.f32 %v3527, %v3528
    %v3530 = vrot.slane %v3529, 4
    %v3531 = vadd.f32 %v3529, %v3530
    %v3532 = vrot.slane %v3531, 2
    %v3533 = vadd.f32 %v3531, %v3532
    %v3534 = vrot.slane %v3533, 1
    %v3535 = vadd.f32 %v3533, %v3534
    %v3536 = vmul.f32 %v3535, %v963
    %v3537 = vadd.f32 %v3536, 1e-05
    %v3538 = vrsqrt.pop %v3537
    %v3539 = vmul.f32 %v3523, %v3538
    %v3540 = vmul.f32 %v3524, %v3538
    %v3541 = vmax.f32 %v3539, 0.0
    %v3542 = vmax.f32 %v3540, 0.0
    %s3543 = scalar_lea.vmem %s13, 256
    %v3544 = vld [vmem:[%s3543] sm:$0xff]
    %v3545 = vld [vmem:[%s3543 + $0x8] sm:$0xff]
    %v3546 = vld [vmem:[%s3543 + $0x10] sm:$0xff]
    %v3547 = vld [vmem:[%s3543 + $0x18] sm:$0xff]
    %s3548 = scalar_lea.vmem %s14, 8
    %v3549 = vld [vmem:[%s3548] sm:$0x1]
    %v3551 = vsel %vm953, %v3541, 0
    %v3554 = vsel %vm953, %v3542, 0
    %3556 = vmatprep.subr.mxu0 0.0
    %3557 = vmatpush1.msra.mxu0 0.0
    %3558 = vmatprep.subr.mxu0 0.0
    %3559 = vmatpush1.msra.mxu0 0.0
    %3560 = vmatprep.subr.mxu0 0.0
    %3561 = vmatpush1.msra.mxu0 0.0
    %3562 = vmatprep.subr.mxu0 0.0
    %3563 = vmatpush1.msra.mxu0 0.0
    %3564 = vmatprep.subr.mxu0 0.0
    %3565 = vmatpush1.msra.mxu0 0.0
    %3566 = vmatprep.subr.mxu0 0.0
    %3567 = vmatpush1.msra.mxu0 0.0
    %3568 = vmatprep.subr.mxu0 0.0
    %3569 = vmatpush1.msra.mxu0 0.0
    %3570 = vmatprep.subr.mxu0 0.0
    %3571 = vmatpush1.msra.mxu0 0.0
    %3572 = vmatprep.subr.mxu0 0.0
    %3573 = vmatpush1.msra.mxu0 0.0
    %3574 = vmatprep.subr.mxu0 0.0
    %3575 = vmatpush1.msra.mxu0 0.0
    %3576 = vmatprep.subr.mxu0 0.0
    %3577 = vmatpush1.msra.mxu0 0.0
    %3578 = vmatprep.subr.mxu0 0.0
    %3579 = vmatpush1.msra.mxu0 0.0
    %3580 = vmatprep.subr.mxu0 0.0
    %3581 = vmatpush1.msra.mxu0 %v3547
    %3582 = vmatprep.subr.mxu0 0.0
    %3583 = vmatpush1.msra.mxu0 %v3546
    %3584 = vmatprep.subr.mxu0 0.0
    %3585 = vmatpush1.msra.mxu0 %v3545
    %3586 = vmatprep.subr.mxu0 0.0
    %3587 = vmatpush1.msra.mxu0 %v3544
    %3588 = vmatprep.subr.mxu0 0.0
    %3589 = vmatpush2.msra.mxu0 0.0
    %3590 = vmatprep.subr.mxu0 0.0
    %3591 = vmatpush2.msra.mxu0 0.0
    %3592 = vmatprep.subr.mxu0 0.0
    %3593 = vmatpush2.msra.mxu0 0.0
    %3594 = vmatprep.subr.mxu0 0.0
    %3595 = vmatpush2.msra.mxu0 0.0
    %3596 = vmatprep.subr.mxu0 0.0
    %3597 = vmatpush2.msra.mxu0 0.0
    %3598 = vmatprep.subr.mxu0 0.0
    %3599 = vmatpush2.msra.mxu0 0.0
    %3600 = vmatprep.subr.mxu0 0.0
    %3601 = vmatpush2.msra.mxu0 0.0
    %3602 = vmatprep.subr.mxu0 0.0
    %3603 = vmatpush2.msra.mxu0 0.0
    %3604 = vmatprep.subr.mxu0 0.0
    %3605 = vmatpush2.msra.mxu0 0.0
    %3606 = vmatprep.subr.mxu0 0.0
    %3607 = vmatpush2.msra.mxu0 0.0
    %3608 = vmatprep.subr.mxu0 0.0
    %3609 = vmatpush2.msra.mxu0 0.0
    %3610 = vmatprep.subr.mxu0 0.0
    %3611 = vmatpush2.msra.mxu0 0.0
    %3612 = vmatprep.subr.mxu0 0.0
    %3613 = vmatpush2.msra.mxu0 0.0
    %3614 = vmatprep.subr.mxu0 0.0
    %3615 = vmatpush2.msra.mxu0 0.0
    %3616 = vmatprep.subr.mxu0 0.0
    %3617 = vmatpush2.msra.mxu0 0.0
    %3618 = vmatprep.subr.mxu0 0.0
    %3619 = vmatpush2.msra.mxu0 0.0
    %3620 = vmatprep.mubr.f32.mxu0 0.0
    %3621 = vmatmul.mubr.f32.gmra.mxu0 %v3551
    %v3622 = vpop.f32.mrf.mxu0
    %v3623 = vadd.f32 0.0, %v3622
    %v3624 = vpop.f32.mrf.mxu0
    %3625 = vmatprep.mubr.f32.mxu0 0.0
    %3626 = vmatmul.mubr.f32.gmra.mxu0 %v3554
    %v3627 = vpop.f32.mrf.mxu0
    %v3628 = vadd.f32 0.0, %v3627
    %v3629 = vpop.f32.mrf.mxu0
    %3630 = vdwg.mxu0
    %vm3631 = vcmp.eq.s32.totalorder %v665, 9
    %v3632 = vsel %vm3631, 1, 0
    %vm3633 = vcmp.eq.s32.totalorder %v3632, 1
    %v3634 = vsel %vm3633, %v655, 0.0
    %v3635 = vsel %vm3633, %v656, 0.0
    %v3636 = vsel %vm3633, %v657, 0.0
    %v3637 = vsel %vm3633, %v658, 0.0
    %v3638 = vsel %vm3633, %v659, 0.0
    %v3639 = vsel %vm760, %v3634, 0.0
    %3640 = vadd.xlane.f32.xlu0 %v3639
    %v3641 = vpop.xlane.xlu0 %3640
    %v3642 = vsel %vm760, %v3635, 0.0
    %3643 = vadd.xlane.f32.xlu0 %v3642
    %v3644 = vpop.xlane.xlu0 %3643
    %v3645 = vsel %vm760, %v3636, 0.0
    %3646 = vadd.xlane.f32.xlu0 %v3645
    %v3647 = vpop.xlane.xlu0 %3646
    %v3648 = vsel %vm760, %v3637, 0.0
    %3649 = vadd.xlane.f32.xlu0 %v3648
    %v3650 = vpop.xlane.xlu0 %3649
    %v3651 = vsel %vm760, %v3638, 0.0
    %3652 = vadd.xlane.f32.xlu0 %v3651
    %v3653 = vpop.xlane.xlu0 %3652
    %v3654 = vmul.f32 %v3641, %v57
    %v3655 = vmul.f32 %v3644, %v58
    %v3656 = vmul.f32 %v3647, %v59
    %v3657 = vmul.f32 %v3650, %v60
    %v3658 = vmul.f32 %v3653, %v61
    %v3659 = vsel %vm3633, %v661, 0.0
    %v3660 = vsel %vm3633, %v663, 0.0
    %v3661 = vsel %vm760, %v3659, 0.0
    %3662 = vadd.xlane.f32.xlu0 %v3661
    %v3663 = vpop.xlane.xlu0 %3662
    %v3664 = vsel %vm760, %v3660, 0.0
    %3665 = vadd.xlane.f32.xlu0 %v3664
    %v3666 = vpop.xlane.xlu0 %3665
    %v3667 = vmul.f32 %v69, %v3663
    %v3668 = vmul.f32 %v70, %v3666
    %3669 = vmatprep.subr.mxu0 0.0
    %3670 = vmatpush1.msra.mxu0 0.0
    %3671 = vmatprep.subr.mxu0 0.0
    %3672 = vmatpush1.msra.mxu0 0.0
    %3673 = vmatprep.subr.mxu0 0.0
    %3674 = vmatpush1.msra.mxu0 0.0
    %3675 = vmatprep.subr.mxu0 0.0
    %3676 = vmatpush1.msra.mxu0 0.0
    %3677 = vmatprep.subr.mxu0 0.0
    %3678 = vmatpush1.msra.mxu0 0.0
    %3679 = vmatprep.subr.mxu0 0.0
    %3680 = vmatpush1.msra.mxu0 0.0
    %3681 = vmatprep.subr.mxu0 0.0
    %3682 = vmatpush1.msra.mxu0 0.0
    %3683 = vmatprep.subr.mxu0 0.0
    %3684 = vmatpush1.msra.mxu0 0.0
    %3685 = vmatprep.subr.mxu0 0.0
    %3686 = vmatpush1.msra.mxu0 0.0
    %3687 = vmatprep.subr.mxu0 0.0
    %3688 = vmatpush1.msra.mxu0 0.0
    %3689 = vmatprep.subr.mxu0 0.0
    %3690 = vmatpush1.msra.mxu0 0.0
    %3691 = vmatprep.subr.mxu0 0.0
    %3692 = vmatpush1.msra.mxu0 %v3658
    %3693 = vmatprep.subr.mxu0 0.0
    %3694 = vmatpush1.msra.mxu0 %v3657
    %3695 = vmatprep.subr.mxu0 0.0
    %3696 = vmatpush1.msra.mxu0 %v3656
    %3697 = vmatprep.subr.mxu0 0.0
    %3698 = vmatpush1.msra.mxu0 %v3655
    %3699 = vmatprep.subr.mxu0 0.0
    %3700 = vmatpush1.msra.mxu0 %v3654
    %3701 = vmatprep.subr.mxu0 0.0
    %3702 = vmatpush2.msra.mxu0 0.0
    %3703 = vmatprep.subr.mxu0 0.0
    %3704 = vmatpush2.msra.mxu0 0.0
    %3705 = vmatprep.subr.mxu0 0.0
    %3706 = vmatpush2.msra.mxu0 0.0
    %3707 = vmatprep.subr.mxu0 0.0
    %3708 = vmatpush2.msra.mxu0 0.0
    %3709 = vmatprep.subr.mxu0 0.0
    %3710 = vmatpush2.msra.mxu0 0.0
    %3711 = vmatprep.subr.mxu0 0.0
    %3712 = vmatpush2.msra.mxu0 0.0
    %3713 = vmatprep.subr.mxu0 0.0
    %3714 = vmatpush2.msra.mxu0 0.0
    %3715 = vmatprep.subr.mxu0 0.0
    %3716 = vmatpush2.msra.mxu0 0.0
    %3717 = vmatprep.subr.mxu0 0.0
    %3718 = vmatpush2.msra.mxu0 0.0
    %3719 = vmatprep.subr.mxu0 0.0
    %3720 = vmatpush2.msra.mxu0 0.0
    %3721 = vmatprep.subr.mxu0 0.0
    %3722 = vmatpush2.msra.mxu0 0.0
    %3723 = vmatprep.subr.mxu0 0.0
    %3724 = vmatpush2.msra.mxu0 0.0
    %3725 = vmatprep.subr.mxu0 0.0
    %3726 = vmatpush2.msra.mxu0 0.0
    %3727 = vmatprep.subr.mxu0 0.0
    %3728 = vmatpush2.msra.mxu0 0.0
    %3729 = vmatprep.subr.mxu0 0.0
    %3730 = vmatpush2.msra.mxu0 0.0
    %3731 = vmatprep.subr.mxu0 0.0
    %3732 = vmatpush2.msra.mxu0 0.0
    %3733 = vmatprep.mubr.f32.mxu0 0.0
    %3734 = vmatmul.mubr.f32.gmra.mxu0 %v357
    %v3735 = vpop.f32.mrf.mxu0
    %v3736 = vadd.f32 %v3667, %v3735
    %v3737 = vpop.f32.mrf.mxu0
    %3738 = vmatprep.mubr.f32.mxu0 0.0
    %3739 = vmatmul.mubr.f32.gmra.mxu0 %v360
    %v3740 = vpop.f32.mrf.mxu0
    %v3741 = vadd.f32 %v3668, %v3740
    %v3742 = vpop.f32.mrf.mxu0
    %3743 = vdwg.mxu0
    %v3745 = vlaneseq
    %v3746 = vshrl.u32 %v3745, 7
    %v3747 = vsub.s32 0, %v3746
    %v3748 = vrot.slane %v3549, %v3747
    %v3751 = vsel %vm439, %v3736, 0
    %v3754 = vsel %vm439, %v3741, 0
    %3756 = vmatprep.subr.mxu0 0.0
    %3757 = vmatpush1.msra.mxu0 0.0
    %3758 = vmatprep.subr.mxu0 0.0
    %3759 = vmatpush1.msra.mxu0 0.0
    %3760 = vmatprep.subr.mxu0 0.0
    %3761 = vmatpush1.msra.mxu0 0.0
    %3762 = vmatprep.subr.mxu0 0.0
    %3763 = vmatpush1.msra.mxu0 0.0
    %3764 = vmatprep.subr.mxu0 0.0
    %3765 = vmatpush1.msra.mxu0 0.0
    %3766 = vmatprep.subr.mxu0 0.0
    %3767 = vmatpush1.msra.mxu0 0.0
    %3768 = vmatprep.subr.mxu0 0.0
    %3769 = vmatpush1.msra.mxu0 0.0
    %3770 = vmatprep.subr.mxu0 0.0
    %3771 = vmatpush1.msra.mxu0 0.0
    %3772 = vmatprep.subr.mxu0 0.0
    %3773 = vmatpush1.msra.mxu0 0.0
    %3774 = vmatprep.subr.mxu0 0.0
    %3775 = vmatpush1.msra.mxu0 0.0
    %3776 = vmatprep.subr.mxu0 0.0
    %3777 = vmatpush1.msra.mxu0 0.0
    %3778 = vmatprep.subr.mxu0 0.0
    %3779 = vmatpush1.msra.mxu0 0.0
    %3780 = vmatprep.subr.mxu0 0.0
    %3781 = vmatpush1.msra.mxu0 0.0
    %3782 = vmatprep.subr.mxu0 0.0
    %3783 = vmatpush1.msra.mxu0 0.0
    %3784 = vmatprep.subr.mxu0 0.0
    %3785 = vmatpush1.msra.mxu0 %v3628
    %3786 = vmatprep.subr.mxu0 0.0
    %3787 = vmatpush1.msra.mxu0 %v3623
    %3788 = vmatprep.subr.mxu0 0.0
    %3789 = vmatpush2.msra.mxu0 0.0
    %3790 = vmatprep.subr.mxu0 0.0
    %3791 = vmatpush2.msra.mxu0 0.0
    %3792 = vmatprep.subr.mxu0 0.0
    %3793 = vmatpush2.msra.mxu0 0.0
    %3794 = vmatprep.subr.mxu0 0.0
    %3795 = vmatpush2.msra.mxu0 0.0
    %3796 = vmatprep.subr.mxu0 0.0
    %3797 = vmatpush2.msra.mxu0 0.0
    %3798 = vmatprep.subr.mxu0 0.0
    %3799 = vmatpush2.msra.mxu0 0.0
    %3800 = vmatprep.subr.mxu0 0.0
    %3801 = vmatpush2.msra.mxu0 0.0
    %3802 = vmatprep.subr.mxu0 0.0
    %3803 = vmatpush2.msra.mxu0 0.0
    %3804 = vmatprep.subr.mxu0 0.0
    %3805 = vmatpush2.msra.mxu0 0.0
    %3806 = vmatprep.subr.mxu0 0.0
    %3807 = vmatpush2.msra.mxu0 0.0
    %3808 = vmatprep.subr.mxu0 0.0
    %3809 = vmatpush2.msra.mxu0 0.0
    %3810 = vmatprep.subr.mxu0 0.0
    %3811 = vmatpush2.msra.mxu0 0.0
    %3812 = vmatprep.subr.mxu0 0.0
    %3813 = vmatpush2.msra.mxu0 0.0
    %3814 = vmatprep.subr.mxu0 0.0
    %3815 = vmatpush2.msra.mxu0 0.0
    %3816 = vmatprep.subr.mxu0 0.0
    %3817 = vmatpush2.msra.mxu0 0.0
    %3818 = vmatprep.subr.mxu0 0.0
    %3819 = vmatpush2.msra.mxu0 0.0
    %3820 = vmatprep.mubr.f32.mxu0 0.0
    %3821 = vmatmul.mubr.f32.gmra.mxu0 %v3751
    %v3822 = vpop.f32.mrf.mxu0
    %v3823 = vadd.f32 %v3748, %v3822
    %v3824 = vpop.f32.mrf.mxu0
    %3825 = vmatprep.mubr.f32.mxu0 0.0
    %3826 = vmatmul.mubr.f32.gmra.mxu0 %v3754
    %v3827 = vpop.f32.mrf.mxu0
    %v3828 = vadd.f32 %v3748, %v3827
    %v3829 = vpop.f32.mrf.mxu0
    %3830 = vdwg.mxu0
    %v3831 = vsel %vm953, %v3823, 0.0
    %v3832 = vsel %vm953, %v3828, 0.0
    %v3833 = vadd.f32 %v3831, %v3832
    %v3834 = vrot.slane %v3833, 4
    %v3835 = vadd.f32 %v3833, %v3834
    %v3836 = vrot.slane %v3835, 2
    %v3837 = vadd.f32 %v3835, %v3836
    %v3838 = vrot.slane %v3837, 1
    %v3839 = vadd.f32 %v3837, %v3838
    %v3840 = vmul.f32 %v3839, %v963
    %v3841 = vsub.f32 %v3823, %v3840
    %v3842 = vsub.f32 %v3828, %v3840
    %v3843 = vmul.f32 %v3841, %v3841
    %v3844 = vmul.f32 %v3842, %v3842
    %v3845 = vsel %vm953, %v3843, 0.0
    %v3846 = vsel %vm953, %v3844, 0.0
    %v3847 = vadd.f32 %v3845, %v3846
    %v3848 = vrot.slane %v3847, 4
    %v3849 = vadd.f32 %v3847, %v3848
    %v3850 = vrot.slane %v3849, 2
    %v3851 = vadd.f32 %v3849, %v3850
    %v3852 = vrot.slane %v3851, 1
    %v3853 = vadd.f32 %v3851, %v3852
    %v3854 = vmul.f32 %v3853, %v963
    %v3855 = vadd.f32 %v3854, 1e-05
    %v3856 = vrsqrt.pop %v3855
    %v3857 = vmul.f32 %v3841, %v3856
    %v3858 = vmul.f32 %v3842, %v3856
    %v3859 = vmax.f32 %v3857, 0.0
    %v3860 = vmax.f32 %v3858, 0.0
    %s3861 = scalar_lea.vmem %s13, 288
    %v3862 = vld [vmem:[%s3861] sm:$0xff]
    %v3863 = vld [vmem:[%s3861 + $0x8] sm:$0xff]
    %v3864 = vld [vmem:[%s3861 + $0x10] sm:$0xff]
    %v3865 = vld [vmem:[%s3861 + $0x18] sm:$0xff]
    %s3866 = scalar_lea.vmem %s14, 9
    %v3867 = vld [vmem:[%s3866] sm:$0x1]
    %v3869 = vsel %vm953, %v3859, 0
    %v3872 = vsel %vm953, %v3860, 0
    %3874 = vmatprep.subr.mxu0 0.0
    %3875 = vmatpush1.msra.mxu0 0.0
    %3876 = vmatprep.subr.mxu0 0.0
    %3877 = vmatpush1.msra.mxu0 0.0
    %3878 = vmatprep.subr.mxu0 0.0
    %3879 = vmatpush1.msra.mxu0 0.0
    %3880 = vmatprep.subr.mxu0 0.0
    %3881 = vmatpush1.msra.mxu0 0.0
    %3882 = vmatprep.subr.mxu0 0.0
    %3883 = vmatpush1.msra.mxu0 0.0
    %3884 = vmatprep.subr.mxu0 0.0
    %3885 = vmatpush1.msra.mxu0 0.0
    %3886 = vmatprep.subr.mxu0 0.0
    %3887 = vmatpush1.msra.mxu0 0.0
    %3888 = vmatprep.subr.mxu0 0.0
    %3889 = vmatpush1.msra.mxu0 0.0
    %3890 = vmatprep.subr.mxu0 0.0
    %3891 = vmatpush1.msra.mxu0 0.0
    %3892 = vmatprep.subr.mxu0 0.0
    %3893 = vmatpush1.msra.mxu0 0.0
    %3894 = vmatprep.subr.mxu0 0.0
    %3895 = vmatpush1.msra.mxu0 0.0
    %3896 = vmatprep.subr.mxu0 0.0
    %3897 = vmatpush1.msra.mxu0 0.0
    %3898 = vmatprep.subr.mxu0 0.0
    %3899 = vmatpush1.msra.mxu0 %v3865
    %3900 = vmatprep.subr.mxu0 0.0
    %3901 = vmatpush1.msra.mxu0 %v3864
    %3902 = vmatprep.subr.mxu0 0.0
    %3903 = vmatpush1.msra.mxu0 %v3863
    %3904 = vmatprep.subr.mxu0 0.0
    %3905 = vmatpush1.msra.mxu0 %v3862
    %3906 = vmatprep.subr.mxu0 0.0
    %3907 = vmatpush2.msra.mxu0 0.0
    %3908 = vmatprep.subr.mxu0 0.0
    %3909 = vmatpush2.msra.mxu0 0.0
    %3910 = vmatprep.subr.mxu0 0.0
    %3911 = vmatpush2.msra.mxu0 0.0
    %3912 = vmatprep.subr.mxu0 0.0
    %3913 = vmatpush2.msra.mxu0 0.0
    %3914 = vmatprep.subr.mxu0 0.0
    %3915 = vmatpush2.msra.mxu0 0.0
    %3916 = vmatprep.subr.mxu0 0.0
    %3917 = vmatpush2.msra.mxu0 0.0
    %3918 = vmatprep.subr.mxu0 0.0
    %3919 = vmatpush2.msra.mxu0 0.0
    %3920 = vmatprep.subr.mxu0 0.0
    %3921 = vmatpush2.msra.mxu0 0.0
    %3922 = vmatprep.subr.mxu0 0.0
    %3923 = vmatpush2.msra.mxu0 0.0
    %3924 = vmatprep.subr.mxu0 0.0
    %3925 = vmatpush2.msra.mxu0 0.0
    %3926 = vmatprep.subr.mxu0 0.0
    %3927 = vmatpush2.msra.mxu0 0.0
    %3928 = vmatprep.subr.mxu0 0.0
    %3929 = vmatpush2.msra.mxu0 0.0
    %3930 = vmatprep.subr.mxu0 0.0
    %3931 = vmatpush2.msra.mxu0 0.0
    %3932 = vmatprep.subr.mxu0 0.0
    %3933 = vmatpush2.msra.mxu0 0.0
    %3934 = vmatprep.subr.mxu0 0.0
    %3935 = vmatpush2.msra.mxu0 0.0
    %3936 = vmatprep.subr.mxu0 0.0
    %3937 = vmatpush2.msra.mxu0 0.0
    %3938 = vmatprep.mubr.f32.mxu0 0.0
    %3939 = vmatmul.mubr.f32.gmra.mxu0 %v3869
    %v3940 = vpop.f32.mrf.mxu0
    %v3941 = vadd.f32 0.0, %v3940
    %v3942 = vpop.f32.mrf.mxu0
    %3943 = vmatprep.mubr.f32.mxu0 0.0
    %3944 = vmatmul.mubr.f32.gmra.mxu0 %v3872
    %v3945 = vpop.f32.mrf.mxu0
    %v3946 = vadd.f32 0.0, %v3945
    %v3947 = vpop.f32.mrf.mxu0
    %3948 = vdwg.mxu0
    %vm3949 = vcmp.eq.s32.totalorder %v665, 10
    %v3950 = vsel %vm3949, 1, 0
    %vm3951 = vcmp.eq.s32.totalorder %v3950, 1
    %v3952 = vsel %vm3951, %v655, 0.0
    %v3953 = vsel %vm3951, %v656, 0.0
    %v3954 = vsel %vm3951, %v657, 0.0
    %v3955 = vsel %vm3951, %v658, 0.0
    %v3956 = vsel %vm3951, %v659, 0.0
    %v3957 = vsel %vm760, %v3952, 0.0
    %3958 = vadd.xlane.f32.xlu0 %v3957
    %v3959 = vpop.xlane.xlu0 %3958
    %v3960 = vsel %vm760, %v3953, 0.0
    %3961 = vadd.xlane.f32.xlu0 %v3960
    %v3962 = vpop.xlane.xlu0 %3961
    %v3963 = vsel %vm760, %v3954, 0.0
    %3964 = vadd.xlane.f32.xlu0 %v3963
    %v3965 = vpop.xlane.xlu0 %3964
    %v3966 = vsel %vm760, %v3955, 0.0
    %3967 = vadd.xlane.f32.xlu0 %v3966
    %v3968 = vpop.xlane.xlu0 %3967
    %v3969 = vsel %vm760, %v3956, 0.0
    %3970 = vadd.xlane.f32.xlu0 %v3969
    %v3971 = vpop.xlane.xlu0 %3970
    %v3972 = vmul.f32 %v3959, %v57
    %v3973 = vmul.f32 %v3962, %v58
    %v3974 = vmul.f32 %v3965, %v59
    %v3975 = vmul.f32 %v3968, %v60
    %v3976 = vmul.f32 %v3971, %v61
    %v3977 = vsel %vm3951, %v661, 0.0
    %v3978 = vsel %vm3951, %v663, 0.0
    %v3979 = vsel %vm760, %v3977, 0.0
    %3980 = vadd.xlane.f32.xlu0 %v3979
    %v3981 = vpop.xlane.xlu0 %3980
    %v3982 = vsel %vm760, %v3978, 0.0
    %3983 = vadd.xlane.f32.xlu0 %v3982
    %v3984 = vpop.xlane.xlu0 %3983
    %v3985 = vmul.f32 %v69, %v3981
    %v3986 = vmul.f32 %v70, %v3984
    %3987 = vmatprep.subr.mxu0 0.0
    %3988 = vmatpush1.msra.mxu0 0.0
    %3989 = vmatprep.subr.mxu0 0.0
    %3990 = vmatpush1.msra.mxu0 0.0
    %3991 = vmatprep.subr.mxu0 0.0
    %3992 = vmatpush1.msra.mxu0 0.0
    %3993 = vmatprep.subr.mxu0 0.0
    %3994 = vmatpush1.msra.mxu0 0.0
    %3995 = vmatprep.subr.mxu0 0.0
    %3996 = vmatpush1.msra.mxu0 0.0
    %3997 = vmatprep.subr.mxu0 0.0
    %3998 = vmatpush1.msra.mxu0 0.0
    %3999 = vmatprep.subr.mxu0 0.0
    %4000 = vmatpush1.msra.mxu0 0.0
    %4001 = vmatprep.subr.mxu0 0.0
    %4002 = vmatpush1.msra.mxu0 0.0
    %4003 = vmatprep.subr.mxu0 0.0
    %4004 = vmatpush1.msra.mxu0 0.0
    %4005 = vmatprep.subr.mxu0 0.0
    %4006 = vmatpush1.msra.mxu0 0.0
    %4007 = vmatprep.subr.mxu0 0.0
    %4008 = vmatpush1.msra.mxu0 0.0
    %4009 = vmatprep.subr.mxu0 0.0
    %4010 = vmatpush1.msra.mxu0 %v3976
    %4011 = vmatprep.subr.mxu0 0.0
    %4012 = vmatpush1.msra.mxu0 %v3975
    %4013 = vmatprep.subr.mxu0 0.0
    %4014 = vmatpush1.msra.mxu0 %v3974
    %4015 = vmatprep.subr.mxu0 0.0
    %4016 = vmatpush1.msra.mxu0 %v3973
    %4017 = vmatprep.subr.mxu0 0.0
    %4018 = vmatpush1.msra.mxu0 %v3972
    %4019 = vmatprep.subr.mxu0 0.0
    %4020 = vmatpush2.msra.mxu0 0.0
    %4021 = vmatprep.subr.mxu0 0.0
    %4022 = vmatpush2.msra.mxu0 0.0
    %4023 = vmatprep.subr.mxu0 0.0
    %4024 = vmatpush2.msra.mxu0 0.0
    %4025 = vmatprep.subr.mxu0 0.0
    %4026 = vmatpush2.msra.mxu0 0.0
    %4027 = vmatprep.subr.mxu0 0.0
    %4028 = vmatpush2.msra.mxu0 0.0
    %4029 = vmatprep.subr.mxu0 0.0
    %4030 = vmatpush2.msra.mxu0 0.0
    %4031 = vmatprep.subr.mxu0 0.0
    %4032 = vmatpush2.msra.mxu0 0.0
    %4033 = vmatprep.subr.mxu0 0.0
    %4034 = vmatpush2.msra.mxu0 0.0
    %4035 = vmatprep.subr.mxu0 0.0
    %4036 = vmatpush2.msra.mxu0 0.0
    %4037 = vmatprep.subr.mxu0 0.0
    %4038 = vmatpush2.msra.mxu0 0.0
    %4039 = vmatprep.subr.mxu0 0.0
    %4040 = vmatpush2.msra.mxu0 0.0
    %4041 = vmatprep.subr.mxu0 0.0
    %4042 = vmatpush2.msra.mxu0 0.0
    %4043 = vmatprep.subr.mxu0 0.0
    %4044 = vmatpush2.msra.mxu0 0.0
    %4045 = vmatprep.subr.mxu0 0.0
    %4046 = vmatpush2.msra.mxu0 0.0
    %4047 = vmatprep.subr.mxu0 0.0
    %4048 = vmatpush2.msra.mxu0 0.0
    %4049 = vmatprep.subr.mxu0 0.0
    %4050 = vmatpush2.msra.mxu0 0.0
    %4051 = vmatprep.mubr.f32.mxu0 0.0
    %4052 = vmatmul.mubr.f32.gmra.mxu0 %v357
    %v4053 = vpop.f32.mrf.mxu0
    %v4054 = vadd.f32 %v3985, %v4053
    %v4055 = vpop.f32.mrf.mxu0
    %4056 = vmatprep.mubr.f32.mxu0 0.0
    %4057 = vmatmul.mubr.f32.gmra.mxu0 %v360
    %v4058 = vpop.f32.mrf.mxu0
    %v4059 = vadd.f32 %v3986, %v4058
    %v4060 = vpop.f32.mrf.mxu0
    %4061 = vdwg.mxu0
    %v4063 = vlaneseq
    %v4064 = vshrl.u32 %v4063, 7
    %v4065 = vsub.s32 0, %v4064
    %v4066 = vrot.slane %v3867, %v4065
    %v4069 = vsel %vm439, %v4054, 0
    %v4072 = vsel %vm439, %v4059, 0
    %4074 = vmatprep.subr.mxu0 0.0
    %4075 = vmatpush1.msra.mxu0 0.0
    %4076 = vmatprep.subr.mxu0 0.0
    %4077 = vmatpush1.msra.mxu0 0.0
    %4078 = vmatprep.subr.mxu0 0.0
    %4079 = vmatpush1.msra.mxu0 0.0
    %4080 = vmatprep.subr.mxu0 0.0
    %4081 = vmatpush1.msra.mxu0 0.0
    %4082 = vmatprep.subr.mxu0 0.0
    %4083 = vmatpush1.msra.mxu0 0.0
    %4084 = vmatprep.subr.mxu0 0.0
    %4085 = vmatpush1.msra.mxu0 0.0
    %4086 = vmatprep.subr.mxu0 0.0
    %4087 = vmatpush1.msra.mxu0 0.0
    %4088 = vmatprep.subr.mxu0 0.0
    %4089 = vmatpush1.msra.mxu0 0.0
    %4090 = vmatprep.subr.mxu0 0.0
    %4091 = vmatpush1.msra.mxu0 0.0
    %4092 = vmatprep.subr.mxu0 0.0
    %4093 = vmatpush1.msra.mxu0 0.0
    %4094 = vmatprep.subr.mxu0 0.0
    %4095 = vmatpush1.msra.mxu0 0.0
    %4096 = vmatprep.subr.mxu0 0.0
    %4097 = vmatpush1.msra.mxu0 0.0
    %4098 = vmatprep.subr.mxu0 0.0
    %4099 = vmatpush1.msra.mxu0 0.0
    %4100 = vmatprep.subr.mxu0 0.0
    %4101 = vmatpush1.msra.mxu0 0.0
    %4102 = vmatprep.subr.mxu0 0.0
    %4103 = vmatpush1.msra.mxu0 %v3946
    %4104 = vmatprep.subr.mxu0 0.0
    %4105 = vmatpush1.msra.mxu0 %v3941
    %4106 = vmatprep.subr.mxu0 0.0
    %4107 = vmatpush2.msra.mxu0 0.0
    %4108 = vmatprep.subr.mxu0 0.0
    %4109 = vmatpush2.msra.mxu0 0.0
    %4110 = vmatprep.subr.mxu0 0.0
    %4111 = vmatpush2.msra.mxu0 0.0
    %4112 = vmatprep.subr.mxu0 0.0
    %4113 = vmatpush2.msra.mxu0 0.0
    %4114 = vmatprep.subr.mxu0 0.0
    %4115 = vmatpush2.msra.mxu0 0.0
    %4116 = vmatprep.subr.mxu0 0.0
    %4117 = vmatpush2.msra.mxu0 0.0
    %4118 = vmatprep.subr.mxu0 0.0
    %4119 = vmatpush2.msra.mxu0 0.0
    %4120 = vmatprep.subr.mxu0 0.0
    %4121 = vmatpush2.msra.mxu0 0.0
    %4122 = vmatprep.subr.mxu0 0.0
    %4123 = vmatpush2.msra.mxu0 0.0
    %4124 = vmatprep.subr.mxu0 0.0
    %4125 = vmatpush2.msra.mxu0 0.0
    %4126 = vmatprep.subr.mxu0 0.0
    %4127 = vmatpush2.msra.mxu0 0.0
    %4128 = vmatprep.subr.mxu0 0.0
    %4129 = vmatpush2.msra.mxu0 0.0
    %4130 = vmatprep.subr.mxu0 0.0
    %4131 = vmatpush2.msra.mxu0 0.0
    %4132 = vmatprep.subr.mxu0 0.0
    %4133 = vmatpush2.msra.mxu0 0.0
    %4134 = vmatprep.subr.mxu0 0.0
    %4135 = vmatpush2.msra.mxu0 0.0
    %4136 = vmatprep.subr.mxu0 0.0
    %4137 = vmatpush2.msra.mxu0 0.0
    %4138 = vmatprep.mubr.f32.mxu0 0.0
    %4139 = vmatmul.mubr.f32.gmra.mxu0 %v4069
    %v4140 = vpop.f32.mrf.mxu0
    %v4141 = vadd.f32 %v4066, %v4140
    %v4142 = vpop.f32.mrf.mxu0
    %4143 = vmatprep.mubr.f32.mxu0 0.0
    %4144 = vmatmul.mubr.f32.gmra.mxu0 %v4072
    %v4145 = vpop.f32.mrf.mxu0
    %v4146 = vadd.f32 %v4066, %v4145
    %v4147 = vpop.f32.mrf.mxu0
    %4148 = vdwg.mxu0
    %v4149 = vadd.f32 %v4141, %v3511
    %v4150 = vadd.f32 %v4146, %v3512
    %v4151 = vmax.f32 %v4149, 0.0
    %v4152 = vmax.f32 %v4150, 0.0
    %v4153 = vld [vmem:[%s6] sm:$0xff]
    %v4154 = vld [vmem:[%s6 + $0x8] sm:$0xff]
    %v4155 = vld [vmem:[%s6 + $0x10] sm:$0xff]
    %v4156 = vld [vmem:[%s6 + $0x18] sm:$0xff]
    %vm4157 = vcmp.gt.f32.partialorder %v4153, 0.5
    %vm4158 = vcmp.gt.f32.partialorder %v4154, 0.5
    %vm4159 = vcmp.gt.f32.partialorder %v4155, 0.5
    %vm4160 = vcmp.gt.f32.partialorder %v4156, 0.5
    %v4161 = vsel %vm4157, %v4151, -3.4028235e+38
    %v4162 = vsel %vm4158, %v4152, -3.4028235e+38
    %v4163 = vsel %vm4159, %v4151, -3.4028235e+38
    %v4164 = vsel %vm4160, %v4152, -3.4028235e+38
    %v4165 = vsel %vm953, %v4161, -inf
    %v4166 = vsel %vm953, %v4162, -inf
    %v4167 = vmax.f32 %v4165, %v4166
    %v4168 = vrot.slane %v4167, 4
    %v4169 = vmax.f32 %v4167, %v4168
    %v4170 = vrot.slane %v4169, 2
    %v4171 = vmax.f32 %v4169, %v4170
    %v4172 = vrot.slane %v4171, 1
    %v4173 = vmax.f32 %v4171, %v4172
    %v4174 = vsel %vm953, %v4163, -inf
    %v4175 = vsel %vm953, %v4164, -inf
    %v4176 = vmax.f32 %v4174, %v4175
    %v4177 = vrot.slane %v4176, 4
    %v4178 = vmax.f32 %v4176, %v4177
    %v4179 = vrot.slane %v4178, 2
    %v4180 = vmax.f32 %v4178, %v4179
    %v4181 = vrot.slane %v4180, 1
    %v4182 = vmax.f32 %v4180, %v4181
    %v4183 = vld [vmem:[%s15] sm:$0xff]
    %v4184 = vld [vmem:[%s15 + $0x8] sm:$0xff]
    %v4185 = vld [vmem:[%s15 + $0x10] sm:$0xff]
    %v4186 = vld [vmem:[%s15 + $0x18] sm:$0xff]
    %v4187 = vld [vmem:[%s16] sm:$0x1]
    %v4189 = vlaneseq
    %v4190 = vshrl.u32 %v4189, 7
    %v4191 = vsub.s32 0, %v4190
    %v4192 = vrot.slane %v4187, %v4191
    %vm4196 = vcmask 1041409
    %v4197 = vsel %vm4196, %v4182, %v4173
    %v4198 = vsel %vm953, %v4197, 0
    %4200 = vmatprep.subr.mxu0 0.0
    %4201 = vmatpush1.msra.mxu0 0.0
    %4202 = vmatprep.subr.mxu0 0.0
    %4203 = vmatpush1.msra.mxu0 0.0
    %4204 = vmatprep.subr.mxu0 0.0
    %4205 = vmatpush1.msra.mxu0 0.0
    %4206 = vmatprep.subr.mxu0 0.0
    %4207 = vmatpush1.msra.mxu0 0.0
    %4208 = vmatprep.subr.mxu0 0.0
    %4209 = vmatpush1.msra.mxu0 0.0
    %4210 = vmatprep.subr.mxu0 0.0
    %4211 = vmatpush1.msra.mxu0 0.0
    %4212 = vmatprep.subr.mxu0 0.0
    %4213 = vmatpush1.msra.mxu0 0.0
    %4214 = vmatprep.subr.mxu0 0.0
    %4215 = vmatpush1.msra.mxu0 0.0
    %4216 = vmatprep.subr.mxu0 0.0
    %4217 = vmatpush1.msra.mxu0 0.0
    %4218 = vmatprep.subr.mxu0 0.0
    %4219 = vmatpush1.msra.mxu0 0.0
    %4220 = vmatprep.subr.mxu0 0.0
    %4221 = vmatpush1.msra.mxu0 0.0
    %4222 = vmatprep.subr.mxu0 0.0
    %4223 = vmatpush1.msra.mxu0 0.0
    %4224 = vmatprep.subr.mxu0 0.0
    %4225 = vmatpush1.msra.mxu0 %v4186
    %4226 = vmatprep.subr.mxu0 0.0
    %4227 = vmatpush1.msra.mxu0 %v4185
    %4228 = vmatprep.subr.mxu0 0.0
    %4229 = vmatpush1.msra.mxu0 %v4184
    %4230 = vmatprep.subr.mxu0 0.0
    %4231 = vmatpush1.msra.mxu0 %v4183
    %4232 = vmatprep.subr.mxu0 0.0
    %4233 = vmatpush2.msra.mxu0 0.0
    %4234 = vmatprep.subr.mxu0 0.0
    %4235 = vmatpush2.msra.mxu0 0.0
    %4236 = vmatprep.subr.mxu0 0.0
    %4237 = vmatpush2.msra.mxu0 0.0
    %4238 = vmatprep.subr.mxu0 0.0
    %4239 = vmatpush2.msra.mxu0 0.0
    %4240 = vmatprep.subr.mxu0 0.0
    %4241 = vmatpush2.msra.mxu0 0.0
    %4242 = vmatprep.subr.mxu0 0.0
    %4243 = vmatpush2.msra.mxu0 0.0
    %4244 = vmatprep.subr.mxu0 0.0
    %4245 = vmatpush2.msra.mxu0 0.0
    %4246 = vmatprep.subr.mxu0 0.0
    %4247 = vmatpush2.msra.mxu0 0.0
    %4248 = vmatprep.subr.mxu0 0.0
    %4249 = vmatpush2.msra.mxu0 0.0
    %4250 = vmatprep.subr.mxu0 0.0
    %4251 = vmatpush2.msra.mxu0 0.0
    %4252 = vmatprep.subr.mxu0 0.0
    %4253 = vmatpush2.msra.mxu0 0.0
    %4254 = vmatprep.subr.mxu0 0.0
    %4255 = vmatpush2.msra.mxu0 0.0
    %4256 = vmatprep.subr.mxu0 0.0
    %4257 = vmatpush2.msra.mxu0 0.0
    %4258 = vmatprep.subr.mxu0 0.0
    %4259 = vmatpush2.msra.mxu0 0.0
    %4260 = vmatprep.subr.mxu0 0.0
    %4261 = vmatpush2.msra.mxu0 0.0
    %4262 = vmatprep.subr.mxu0 0.0
    %4263 = vmatpush2.msra.mxu0 0.0
    %4264 = vmatprep.mubr.f32.mxu0 0.0
    %4265 = vmatmul.mubr.f32.gmra.mxu0 %v4198
    %v4266 = vpop.f32.mrf.mxu0
    %v4267 = vadd.f32 %v4192, %v4266
    %v4268 = vpop.f32.mrf.mxu0
    %4269 = vdwg.mxu0
    %vm4270 = vcmask 17408
    %4271 = vst.msk [vmem:[#allocation2] sm:$0x3] %vm4270, %v4267
    // Predicated region
    $region70: #{model_forward.1} parent=1 // pred_check
      _
    $region71: #{model_forward.1} parent=1 // pred_check_branch
      %4273 = sbr.rel (0) target = $region73
    $region72: #{model_forward.1} parent=1 // pred_region
      %s4275 = ssub.s32 32, 32
      %4276 = vsyncadd [#allocation3], %s4275
      %s4278 = sshll.u32 [#allocation2], 4
      %s4279 = int_to_ptr.vmem [resolvable:$true] %s4278
      %4281 = dma.vmem_to_hbm [thread:$0]  %s4279, 32, %s17, [#allocation3]
    $region73: #{model_forward.1} parent=1 // pred_fallthru
      _
    // Predicated region
    $region74: #{model_forward.1} parent=1 // pred_check
      _
    $region75: #{model_forward.1} parent=1 // pred_check_branch
      %4283 = sbr.rel (0) target = $region77
    $region76: #{model_forward.1} parent=1 // pred_region
      %4284 = dma.done [#allocation3], 32
    $region77: #{model_forward.1} parent=1 // pred_fallthru
      _
    %4285 = vsyncpa [#allocation3], 1

</llo_original>
